<compile_context>
chip_gen: v6e
topology: v6e:2x2x1
jax: 0.10.0
libtpu: 0.0.40
codegen_flags: <defaults>
</compile_context>

<pallas_src>
import functools

import jax
import jax.numpy as jnp
from jax.experimental import pallas as pl
from jax.experimental.pallas import tpu as pltpu


# ----------------------------- Pallas kernel ---------------------------------
def _vae_cluster_kernel(
    x_ref, eps_ref,
    w1, b1, w2, b2, w3, b3,
    wml, bml,            # fused [mu | log_var] head:      [h1, 2L]
    wzc, bzc,            # fused [decoder fc4 | clf fc1]:  [L, h1 + inter]
    w5, b5, w6, b6, w7, b7,
    wc2, bc2,
    gmean_ref,           # gaussian_mean flattened to [1, n_classes*latent_dim]
    xhat_ref, packed_ref, zpm_ref,
    *, latent_dim, dec_h, n_classes,
):
    def lin(h, w_ref, b_ref):
        # MXU matmul with f32 accumulation + bias broadcast.
        return jnp.dot(h, w_ref[...], preferred_element_type=jnp.float32) + b_ref[...]

    x = x_ref[...]

    # ----- encoder -----
    h = jnp.maximum(lin(x, w1, b1), 0.0)
    h = jnp.maximum(lin(h, w2, b2), 0.0)
    h = jnp.maximum(lin(h, w3, b3), 0.0)

    ml = lin(h, wml, bml)                    # [TB, 2L]   (mu | log_var in one matmul)
    mu = ml[:, :latent_dim]
    log_var = ml[:, latent_dim:]

    # ----- reparameterize: z = mu + eps * exp(log_var / 2) -----
    z = mu + eps_ref[...] * jnp.exp(log_var * 0.5)

    # ----- fused first layer of decoder + classifier (both consume z, both ReLU) -----
    dc = jnp.maximum(lin(z, wzc, bzc), 0.0)  # [TB, dec_h + inter]
    d = dc[:, :dec_h]
    c = dc[:, dec_h:]

    # ----- decoder tail -----
    d = jnp.maximum(lin(d, w5, b5), 0.0)
    d = jnp.maximum(lin(d, w6, b6), 0.0)
    x_hat = lin(d, w7, b7)

    # ----- classifier tail: softmax(fc2) -----
    logits = lin(c, wc2, bc2)
    logits = logits - jnp.max(logits, axis=-1, keepdims=True)
    e = jnp.exp(logits)
    y = e * pl.reciprocal(jnp.sum(e, axis=-1, keepdims=True), approx=True)

    # ----- z_prior_mean, lane-dense: [TB, C*L] where col c*L+l = z[:,l]-gmean[c,l] -----
    zpm = jnp.tile(z, (1, n_classes)) - gmean_ref[...]

    # ----- packed writeback (3 DMA streams instead of 6) -----
    xhat_ref[...] = x_hat
    packed_ref[...] = jnp.concatenate([mu, log_var, z, y], axis=-1)
    zpm_ref[...] = zpm


# ------------------------------- wrapper --------------------------------------
def vae_cluster_forward(x, eps, params, *, batch_tile=128):
    """Fused VAE_cluster forward on TPU via Pallas.

    x:   [B, input_dim] float32
    eps: [B, latent_dim] float32 (reparameterization noise)
    params: dict of weights/biases (see init_params).
    Returns (x_hat, mu, log_var, z, y, z_prior_mean).
    """
    B, input_dim = x.shape
    L = params["wmu"].shape[1]
    C = params["gaussian_mean"].shape[0]
    dec_h = params["w4"].shape[1]       # hidden_dims[1]
    packed_w = 3 * L + C

    TB = batch_tile if (B % batch_tile == 0) else B
    grid = (B // TB,)

    # Fuse the two latent heads and the two consumers of z (done outside the kernel,
    # trivial XLA concat on tiny weights).
    wml = jnp.concatenate([params["wmu"], params["wlv"]], axis=1)
    bml = jnp.concatenate([params["bmu"], params["blv"]], axis=1)
    wzc = jnp.concatenate([params["w4"], params["wc1"]], axis=1)
    bzc = jnp.concatenate([params["b4"], params["bc1"]], axis=1)
    gmean_flat = params["gaussian_mean"].reshape(1, C * L)

    operands = (
        x, eps,
        params["w1"], params["b1"], params["w2"], params["b2"],
        params["w3"], params["b3"],
        wml, bml, wzc, bzc,
        params["w5"], params["b5"], params["w6"], params["b6"],
        params["w7"], params["b7"],
        params["wc2"], params["bc2"],
        gmean_flat,
    )

    def batch_spec(width):
        return pl.BlockSpec((TB, width), lambda i: (i, 0))

    def resident_spec(arr):
        # Constant index_map => fetched once, stays VMEM-resident across grid steps.
        return pl.BlockSpec(arr.shape, lambda i: (0, 0))

    in_specs = [batch_spec(input_dim), batch_spec(L)] + [
        resident_spec(a) for a in operands[2:]
    ]

    out_shape = (
        jax.ShapeDtypeStruct((B, input_dim), jnp.float32),   # x_hat
        jax.ShapeDtypeStruct((B, packed_w), jnp.float32),    # mu | log_var | z | y
        jax.ShapeDtypeStruct((B, C * L), jnp.float32),       # z_prior_mean (flat)
    )
    out_specs = (batch_spec(input_dim), batch_spec(packed_w), batch_spec(C * L))

    kernel = functools.partial(
        _vae_cluster_kernel, latent_dim=L, dec_h=dec_h, n_classes=C
    )

    x_hat, packed, zpm_flat = pl.pallas_call(
        kernel,
        out_shape=out_shape,
        grid=grid,
        in_specs=in_specs,
        out_specs=out_specs,
        compiler_params=pltpu.CompilerParams(dimension_semantics=("parallel",)),
    )(*operands)

    mu = packed[:, :L]
    log_var = packed[:, L:2 * L]
    z = packed[:, 2 * L:3 * L]
    y = packed[:, 3 * L:]
    z_prior_mean = zpm_flat.reshape(B, C, L)
    return x_hat, mu, log_var, z, y, z_prior_mean


# --------------------------- parameter init ------------------------------------
def init_params(key, input_dim, hidden_dims, latent_dim, n_classes):
    """Deterministic synthetic parameter init. Weights are [in, out]."""
    inter_dim = latent_dim // 2
    shapes = {
        "w1": (input_dim, hidden_dims[0]),
        "w2": (hidden_dims[0], hidden_dims[0]),
        "w3": (hidden_dims[0], hidden_dims[1]),
        "wmu": (hidden_dims[1], latent_dim),
        "wlv": (hidden_dims[1], latent_dim),
        "w4": (latent_dim, hidden_dims[1]),
        "w5": (hidden_dims[1], hidden_dims[0]),
        "w6": (hidden_dims[0], hidden_dims[0]),
        "w7": (hidden_dims[0], input_dim),
        "wc1": (latent_dim, inter_dim),
        "wc2": (inter_dim, n_classes),
    }
    params = {}
    keys = jax.random.split(key, len(shapes))
    for (name, shp), k in zip(shapes.items(), keys):
        fan_in = shp[0]
        params[name] = jax.random.normal(k, shp, jnp.float32) * (1.0 / jnp.sqrt(fan_in))
        bname = "b" + name[1:]
        params[bname] = jnp.zeros((1, shp[1]), jnp.float32) + 0.01
    # nn.Parameter(torch.zeros(n_classes, latent_dim))
    params["gaussian_mean"] = jnp.zeros((n_classes, latent_dim), jnp.float32)
    return params


# ------------------------------ reference --------------------------------------
def reference_forward(x, eps, p):
    def lin(h, w, b):
        return h @ w + b
    h = jax.nn.relu(lin(x, p["w1"], p["b1"]))
    h = jax.nn.relu(lin(h, p["w2"], p["b2"]))
    h = jax.nn.relu(lin(h, p["w3"], p["b3"]))
    mu = lin(h, p["wmu"], p["bmu"])
    lv = lin(h, p["wlv"], p["blv"])
    z = mu + eps * jnp.exp(lv / 2.0)
    d = jax.nn.relu(lin(z, p["w4"], p["b4"]))
    d = jax.nn.relu(lin(d, p["w5"], p["b5"]))
    d = jax.nn.relu(lin(d, p["w6"], p["b6"]))
    x_hat = lin(d, p["w7"], p["b7"])
    c = jax.nn.relu(lin(z, p["wc1"], p["bc1"]))
    y = jax.nn.softmax(lin(c, p["wc2"], p["bc2"]), axis=-1)
    zpm = z[:, None, :] - p["gaussian_mean"][None, :, :]
    return x_hat, mu, lv, z, y, zpm


# -------------------------------- main ------------------------------------------
if __name__ == "__main__":
    # Small-feature shapes consistent with the module (scaled-down MNIST-style VAE),
    # but with a batch large enough to fill two 128-row tiles (one per v7x TensorCore).
    B = 256
    input_dim = 64
    hidden_dims = [64, 32]
    latent_dim = 16
    n_classes = 8

    key = jax.random.PRNGKey(0)
    k_x, k_eps, k_param = jax.random.split(key, 3)

    x = jax.random.normal(k_x, (B, input_dim), jnp.float32)
    # torch.randn_like inside reparameterize -> explicit deterministic noise input.
    eps = jax.random.normal(k_eps, (B, latent_dim), jnp.float32)
    params = init_params(k_param, input_dim, hidden_dims, latent_dim, n_classes)

    outs = vae_cluster_forward(x, eps, params)
    outs = jax.block_until_ready(outs)

    refs = reference_forward(x, eps, params)
    names = ["x_hat", "mu", "log_var", "z", "y", "z_prior_mean"]
    # y uses the EUP approximate reciprocal -> slightly looser tolerance.
    tol = {"y": 5e-3}
    for name, o, r in zip(names, outs, refs):
        assert o.shape == r.shape, (name, o.shape, r.shape)
        err = float(jnp.max(jnp.abs(o - r)))
        assert err < tol.get(name, 1e-4), (name, err)

    print("KERNEL_OK")
</pallas_src>

<mosaic_0001>
module attributes {stable_mosaic.version = 11 : i64} {
  func.func @_vae_cluster_kernel(%arg0: i32, %arg1: memref<128x64xf32, #tpu.memory_space<vmem>>, %arg2: memref<128x16xf32, #tpu.memory_space<vmem>>, %arg3: memref<64x64xf32, #tpu.memory_space<vmem>>, %arg4: memref<1x64xf32, #tpu.memory_space<vmem>>, %arg5: memref<64x64xf32, #tpu.memory_space<vmem>>, %arg6: memref<1x64xf32, #tpu.memory_space<vmem>>, %arg7: memref<64x32xf32, #tpu.memory_space<vmem>>, %arg8: memref<1x32xf32, #tpu.memory_space<vmem>>, %arg9: memref<32x32xf32, #tpu.memory_space<vmem>>, %arg10: memref<1x32xf32, #tpu.memory_space<vmem>>, %arg11: memref<16x40xf32, #tpu.memory_space<vmem>>, %arg12: memref<1x40xf32, #tpu.memory_space<vmem>>, %arg13: memref<32x64xf32, #tpu.memory_space<vmem>>, %arg14: memref<1x64xf32, #tpu.memory_space<vmem>>, %arg15: memref<64x64xf32, #tpu.memory_space<vmem>>, %arg16: memref<1x64xf32, #tpu.memory_space<vmem>>, %arg17: memref<64x64xf32, #tpu.memory_space<vmem>>, %arg18: memref<1x64xf32, #tpu.memory_space<vmem>>, %arg19: memref<8x8xf32, #tpu.memory_space<vmem>>, %arg20: memref<1x8xf32, #tpu.memory_space<vmem>>, %arg21: memref<1x128xf32, #tpu.memory_space<vmem>>, %arg22: memref<128x64xf32, #tpu.memory_space<vmem>>, %arg23: memref<128x56xf32, #tpu.memory_space<vmem>>, %arg24: memref<128x128xf32, #tpu.memory_space<vmem>>) attributes {dimension_semantics = [#tpu.dimension_semantics<parallel>], iteration_bounds = array<i64: 2>, scalar_prefetch = 0 : i64, scratch_operands = 0 : i64, tpu.core_type = #tpu.core_type<tc>, window_params = [{transform_indices = @transform_0, window_bounds = array<i64: 128, 64>}, {transform_indices = @transform_1, window_bounds = array<i64: 128, 16>}, {pipeline_mode = #tpu.pipeline_mode<synchronous>, transform_indices = @transform_2, window_bounds = array<i64: 64, 64>}, {pipeline_mode = #tpu.pipeline_mode<synchronous>, transform_indices = @transform_3, window_bounds = array<i64: 1, 64>}, {pipeline_mode = #tpu.pipeline_mode<synchronous>, transform_indices = @transform_4, window_bounds = array<i64: 64, 64>}, {pipeline_mode = #tpu.pipeline_mode<synchronous>, transform_indices = @transform_5, window_bounds = array<i64: 1, 64>}, {pipeline_mode = #tpu.pipeline_mode<synchronous>, transform_indices = @transform_6, window_bounds = array<i64: 64, 32>}, {pipeline_mode = #tpu.pipeline_mode<synchronous>, transform_indices = @transform_7, window_bounds = array<i64: 1, 32>}, {pipeline_mode = #tpu.pipeline_mode<synchronous>, transform_indices = @transform_8, window_bounds = array<i64: 32, 32>}, {pipeline_mode = #tpu.pipeline_mode<synchronous>, transform_indices = @transform_9, window_bounds = array<i64: 1, 32>}, {pipeline_mode = #tpu.pipeline_mode<synchronous>, transform_indices = @transform_10, window_bounds = array<i64: 16, 40>}, {pipeline_mode = #tpu.pipeline_mode<synchronous>, transform_indices = @transform_11, window_bounds = array<i64: 1, 40>}, {pipeline_mode = #tpu.pipeline_mode<synchronous>, transform_indices = @transform_12, window_bounds = array<i64: 32, 64>}, {pipeline_mode = #tpu.pipeline_mode<synchronous>, transform_indices = @transform_13, window_bounds = array<i64: 1, 64>}, {pipeline_mode = #tpu.pipeline_mode<synchronous>, transform_indices = @transform_14, window_bounds = array<i64: 64, 64>}, {pipeline_mode = #tpu.pipeline_mode<synchronous>, transform_indices = @transform_15, window_bounds = array<i64: 1, 64>}, {pipeline_mode = #tpu.pipeline_mode<synchronous>, transform_indices = @transform_16, window_bounds = array<i64: 64, 64>}, {pipeline_mode = #tpu.pipeline_mode<synchronous>, transform_indices = @transform_17, window_bounds = array<i64: 1, 64>}, {pipeline_mode = #tpu.pipeline_mode<synchronous>, transform_indices = @transform_18, window_bounds = array<i64: 8, 8>}, {pipeline_mode = #tpu.pipeline_mode<synchronous>, transform_indices = @transform_19, window_bounds = array<i64: 1, 8>}, {pipeline_mode = #tpu.pipeline_mode<synchronous>, transform_indices = @transform_20, window_bounds = array<i64: 1, 128>}, {transform_indices = @transform_21, window_bounds = array<i64: 128, 64>}, {transform_indices = @transform_22, window_bounds = array<i64: 128, 56>}, {transform_indices = @transform_23, window_bounds = array<i64: 128, 128>}]} {
    %c0 = arith.constant 0 : index
    %c0_0 = arith.constant 0 : index
    %0 = vector.load %arg1[%c0, %c0_0] : memref<128x64xf32, #tpu.memory_space<vmem>>, vector<128x64xf32>
    %c0_1 = arith.constant 0 : index
    %c0_2 = arith.constant 0 : index
    %1 = vector.load %arg3[%c0_1, %c0_2] : memref<64x64xf32, #tpu.memory_space<vmem>>, vector<64x64xf32>
    %cst = arith.constant dense<0.000000e+00> : vector<128x64xf32>
    %2 = tpu.matmul %0, %1, %cst {dimension_numbers = #tpu.dot_dimension_numbers<[1], [0], [0], [1], [0, 0, 1, 1], [], []>} : vector<128x64xf32>, vector<64x64xf32>, vector<128x64xf32> -> vector<128x64xf32>
    %c0_3 = arith.constant 0 : index
    %c0_4 = arith.constant 0 : index
    %3 = vector.load %arg4[%c0_3, %c0_4] : memref<1x64xf32, #tpu.memory_space<vmem>>, vector<1x64xf32>
    %4 = vector.broadcast %3 : vector<1x64xf32> to vector<128x64xf32>
    %5 = arith.addf %2, %4 : vector<128x64xf32>
    %cst_5 = arith.constant 0.000000e+00 : f32
    %6 = vector.broadcast %cst_5 : f32 to vector<128x64xf32>
    %7 = arith.maximumf %5, %6 : vector<128x64xf32>
    %c0_6 = arith.constant 0 : index
    %c0_7 = arith.constant 0 : index
    %8 = vector.load %arg5[%c0_6, %c0_7] : memref<64x64xf32, #tpu.memory_space<vmem>>, vector<64x64xf32>
    %cst_8 = arith.constant dense<0.000000e+00> : vector<128x64xf32>
    %9 = tpu.matmul %7, %8, %cst_8 {dimension_numbers = #tpu.dot_dimension_numbers<[1], [0], [0], [1], [0, 0, 1, 1], [], []>} : vector<128x64xf32>, vector<64x64xf32>, vector<128x64xf32> -> vector<128x64xf32>
    %c0_9 = arith.constant 0 : index
    %c0_10 = arith.constant 0 : index
    %10 = vector.load %arg6[%c0_9, %c0_10] : memref<1x64xf32, #tpu.memory_space<vmem>>, vector<1x64xf32>
    %11 = vector.broadcast %10 : vector<1x64xf32> to vector<128x64xf32>
    %12 = arith.addf %9, %11 : vector<128x64xf32>
    %cst_11 = arith.constant 0.000000e+00 : f32
    %13 = vector.broadcast %cst_11 : f32 to vector<128x64xf32>
    %14 = arith.maximumf %12, %13 : vector<128x64xf32>
    %c0_12 = arith.constant 0 : index
    %c0_13 = arith.constant 0 : index
    %15 = vector.load %arg7[%c0_12, %c0_13] : memref<64x32xf32, #tpu.memory_space<vmem>>, vector<64x32xf32>
    %cst_14 = arith.constant dense<0.000000e+00> : vector<128x32xf32>
    %16 = tpu.matmul %14, %15, %cst_14 {dimension_numbers = #tpu.dot_dimension_numbers<[1], [0], [0], [1], [0, 0, 1, 1], [], []>} : vector<128x64xf32>, vector<64x32xf32>, vector<128x32xf32> -> vector<128x32xf32>
    %c0_15 = arith.constant 0 : index
    %c0_16 = arith.constant 0 : index
    %17 = vector.load %arg8[%c0_15, %c0_16] : memref<1x32xf32, #tpu.memory_space<vmem>>, vector<1x32xf32>
    %18 = vector.broadcast %17 : vector<1x32xf32> to vector<128x32xf32>
    %19 = arith.addf %16, %18 : vector<128x32xf32>
    %cst_17 = arith.constant 0.000000e+00 : f32
    %20 = vector.broadcast %cst_17 : f32 to vector<128x32xf32>
    %21 = arith.maximumf %19, %20 : vector<128x32xf32>
    %c0_18 = arith.constant 0 : index
    %c0_19 = arith.constant 0 : index
    %22 = vector.load %arg9[%c0_18, %c0_19] : memref<32x32xf32, #tpu.memory_space<vmem>>, vector<32x32xf32>
    %cst_20 = arith.constant dense<0.000000e+00> : vector<128x32xf32>
    %23 = tpu.matmul %21, %22, %cst_20 {dimension_numbers = #tpu.dot_dimension_numbers<[1], [0], [0], [1], [0, 0, 1, 1], [], []>} : vector<128x32xf32>, vector<32x32xf32>, vector<128x32xf32> -> vector<128x32xf32>
    %c0_21 = arith.constant 0 : index
    %c0_22 = arith.constant 0 : index
    %24 = vector.load %arg10[%c0_21, %c0_22] : memref<1x32xf32, #tpu.memory_space<vmem>>, vector<1x32xf32>
    %25 = vector.broadcast %24 : vector<1x32xf32> to vector<128x32xf32>
    %26 = arith.addf %23, %25 : vector<128x32xf32>
    %27 = vector.extract_strided_slice %26 {offsets = [0, 0], sizes = [128, 16], strides = [1, 1]} : vector<128x32xf32> to vector<128x16xf32>
    %28 = vector.extract_strided_slice %26 {offsets = [0, 16], sizes = [128, 16], strides = [1, 1]} : vector<128x32xf32> to vector<128x16xf32>
    %c0_23 = arith.constant 0 : index
    %c0_24 = arith.constant 0 : index
    %29 = vector.load %arg2[%c0_23, %c0_24] : memref<128x16xf32, #tpu.memory_space<vmem>>, vector<128x16xf32>
    %cst_25 = arith.constant 5.000000e-01 : f32
    %30 = vector.broadcast %cst_25 : f32 to vector<128x16xf32>
    %31 = arith.mulf %28, %30 : vector<128x16xf32>
    %32 = math.exp %31 : vector<128x16xf32>
    %33 = arith.mulf %29, %32 : vector<128x16xf32>
    %34 = arith.addf %27, %33 : vector<128x16xf32>
    %c0_26 = arith.constant 0 : index
    %c0_27 = arith.constant 0 : index
    %35 = vector.load %arg11[%c0_26, %c0_27] : memref<16x40xf32, #tpu.memory_space<vmem>>, vector<16x40xf32>
    %cst_28 = arith.constant dense<0.000000e+00> : vector<128x40xf32>
    %36 = tpu.matmul %34, %35, %cst_28 {dimension_numbers = #tpu.dot_dimension_numbers<[1], [0], [0], [1], [0, 0, 1, 1], [], []>} : vector<128x16xf32>, vector<16x40xf32>, vector<128x40xf32> -> vector<128x40xf32>
    %c0_29 = arith.constant 0 : index
    %c0_30 = arith.constant 0 : index
    %37 = vector.load %arg12[%c0_29, %c0_30] : memref<1x40xf32, #tpu.memory_space<vmem>>, vector<1x40xf32>
    %38 = vector.broadcast %37 : vector<1x40xf32> to vector<128x40xf32>
    %39 = arith.addf %36, %38 : vector<128x40xf32>
    %cst_31 = arith.constant 0.000000e+00 : f32
    %40 = vector.broadcast %cst_31 : f32 to vector<128x40xf32>
    %41 = arith.maximumf %39, %40 : vector<128x40xf32>
    %42 = vector.extract_strided_slice %41 {offsets = [0, 0], sizes = [128, 32], strides = [1, 1]} : vector<128x40xf32> to vector<128x32xf32>
    %43 = vector.extract_strided_slice %41 {offsets = [0, 32], sizes = [128, 8], strides = [1, 1]} : vector<128x40xf32> to vector<128x8xf32>
    %c0_32 = arith.constant 0 : index
    %c0_33 = arith.constant 0 : index
    %44 = vector.load %arg13[%c0_32, %c0_33] : memref<32x64xf32, #tpu.memory_space<vmem>>, vector<32x64xf32>
    %cst_34 = arith.constant dense<0.000000e+00> : vector<128x64xf32>
    %45 = tpu.matmul %42, %44, %cst_34 {dimension_numbers = #tpu.dot_dimension_numbers<[1], [0], [0], [1], [0, 0, 1, 1], [], []>} : vector<128x32xf32>, vector<32x64xf32>, vector<128x64xf32> -> vector<128x64xf32>
    %c0_35 = arith.constant 0 : index
    %c0_36 = arith.constant 0 : index
    %46 = vector.load %arg14[%c0_35, %c0_36] : memref<1x64xf32, #tpu.memory_space<vmem>>, vector<1x64xf32>
    %47 = vector.broadcast %46 : vector<1x64xf32> to vector<128x64xf32>
    %48 = arith.addf %45, %47 : vector<128x64xf32>
    %cst_37 = arith.constant 0.000000e+00 : f32
    %49 = vector.broadcast %cst_37 : f32 to vector<128x64xf32>
    %50 = arith.maximumf %48, %49 : vector<128x64xf32>
    %c0_38 = arith.constant 0 : index
    %c0_39 = arith.constant 0 : index
    %51 = vector.load %arg15[%c0_38, %c0_39] : memref<64x64xf32, #tpu.memory_space<vmem>>, vector<64x64xf32>
    %cst_40 = arith.constant dense<0.000000e+00> : vector<128x64xf32>
    %52 = tpu.matmul %50, %51, %cst_40 {dimension_numbers = #tpu.dot_dimension_numbers<[1], [0], [0], [1], [0, 0, 1, 1], [], []>} : vector<128x64xf32>, vector<64x64xf32>, vector<128x64xf32> -> vector<128x64xf32>
    %c0_41 = arith.constant 0 : index
    %c0_42 = arith.constant 0 : index
    %53 = vector.load %arg16[%c0_41, %c0_42] : memref<1x64xf32, #tpu.memory_space<vmem>>, vector<1x64xf32>
    %54 = vector.broadcast %53 : vector<1x64xf32> to vector<128x64xf32>
    %55 = arith.addf %52, %54 : vector<128x64xf32>
    %cst_43 = arith.constant 0.000000e+00 : f32
    %56 = vector.broadcast %cst_43 : f32 to vector<128x64xf32>
    %57 = arith.maximumf %55, %56 : vector<128x64xf32>
    %c0_44 = arith.constant 0 : index
    %c0_45 = arith.constant 0 : index
    %58 = vector.load %arg17[%c0_44, %c0_45] : memref<64x64xf32, #tpu.memory_space<vmem>>, vector<64x64xf32>
    %cst_46 = arith.constant dense<0.000000e+00> : vector<128x64xf32>
    %59 = tpu.matmul %57, %58, %cst_46 {dimension_numbers = #tpu.dot_dimension_numbers<[1], [0], [0], [1], [0, 0, 1, 1], [], []>} : vector<128x64xf32>, vector<64x64xf32>, vector<128x64xf32> -> vector<128x64xf32>
    %c0_47 = arith.constant 0 : index
    %c0_48 = arith.constant 0 : index
    %60 = vector.load %arg18[%c0_47, %c0_48] : memref<1x64xf32, #tpu.memory_space<vmem>>, vector<1x64xf32>
    %61 = vector.broadcast %60 : vector<1x64xf32> to vector<128x64xf32>
    %62 = arith.addf %59, %61 : vector<128x64xf32>
    %c0_49 = arith.constant 0 : index
    %c0_50 = arith.constant 0 : index
    %63 = vector.load %arg19[%c0_49, %c0_50] : memref<8x8xf32, #tpu.memory_space<vmem>>, vector<8x8xf32>
    %cst_51 = arith.constant dense<0.000000e+00> : vector<128x8xf32>
    %64 = tpu.matmul %43, %63, %cst_51 {dimension_numbers = #tpu.dot_dimension_numbers<[1], [0], [0], [1], [0, 0, 1, 1], [], []>} : vector<128x8xf32>, vector<8x8xf32>, vector<128x8xf32> -> vector<128x8xf32>
    %c0_52 = arith.constant 0 : index
    %c0_53 = arith.constant 0 : index
    %65 = vector.load %arg20[%c0_52, %c0_53] : memref<1x8xf32, #tpu.memory_space<vmem>>, vector<1x8xf32>
    %66 = vector.broadcast %65 : vector<1x8xf32> to vector<128x8xf32>
    %67 = arith.addf %64, %66 : vector<128x8xf32>
    %cst_54 = arith.constant dense<0xFF800000> : vector<128xf32>
    %68 = vector.multi_reduction <maximumf>, %67, %cst_54 [1] : vector<128x8xf32> to vector<128xf32>
    %69 = vector.shape_cast %68 : vector<128xf32> to vector<128x1xf32>
    %70 = vector.broadcast %69 : vector<128x1xf32> to vector<128x8xf32>
    %71 = arith.subf %67, %70 : vector<128x8xf32>
    %72 = math.exp %71 : vector<128x8xf32>
    %cst_55 = arith.constant dense<0.000000e+00> : vector<128xf32>
    %73 = vector.multi_reduction <add>, %72, %cst_55 [1] : vector<128x8xf32> to vector<128xf32>
    %74 = vector.shape_cast %73 : vector<128xf32> to vector<128x1xf32>
    %75 = tpu.reciprocal %74 {approx = true} : vector<128x1xf32> -> vector<128x1xf32>
    %76 = vector.broadcast %75 : vector<128x1xf32> to vector<128x8xf32>
    %77 = arith.mulf %72, %76 : vector<128x8xf32>
    %78 = tpu.concatenate %34, %34, %34, %34, %34, %34, %34, %34 in 1 : vector<128x16xf32>, vector<128x16xf32>, vector<128x16xf32>, vector<128x16xf32>, vector<128x16xf32>, vector<128x16xf32>, vector<128x16xf32>, vector<128x16xf32> -> vector<128x128xf32>
    %c0_56 = arith.constant 0 : index
    %c0_57 = arith.constant 0 : index
    %79 = vector.load %arg21[%c0_56, %c0_57] : memref<1x128xf32, #tpu.memory_space<vmem>>, vector<1x128xf32>
    %80 = vector.broadcast %79 : vector<1x128xf32> to vector<128x128xf32>
    %81 = arith.subf %78, %80 : vector<128x128xf32>
    %c0_58 = arith.constant 0 : index
    %c0_59 = arith.constant 0 : index
    %82 = vector.load %arg22[%c0_58, %c0_59] : memref<128x64xf32, #tpu.memory_space<vmem>>, vector<128x64xf32>
    tpu.vector_store %arg22[%c0_58, %c0_59], %62 {strides = array<i32>} : memref<128x64xf32, #tpu.memory_space<vmem>>, vector<128x64xf32>,
    %83 = tpu.concatenate %27, %28, %34, %77 in 1 : vector<128x16xf32>, vector<128x16xf32>, vector<128x16xf32>, vector<128x8xf32> -> vector<128x56xf32>
    %c0_60 = arith.constant 0 : index
    %c0_61 = arith.constant 0 : index
    %84 = vector.load %arg23[%c0_60, %c0_61] : memref<128x56xf32, #tpu.memory_space<vmem>>, vector<128x56xf32>
    tpu.vector_store %arg23[%c0_60, %c0_61], %83 {strides = array<i32>} : memref<128x56xf32, #tpu.memory_space<vmem>>, vector<128x56xf32>,
    %c0_62 = arith.constant 0 : index
    %c0_63 = arith.constant 0 : index
    %85 = vector.load %arg24[%c0_62, %c0_63] : memref<128x128xf32, #tpu.memory_space<vmem>>, vector<128x128xf32>
    tpu.vector_store %arg24[%c0_62, %c0_63], %81 {strides = array<i32>} : memref<128x128xf32, #tpu.memory_space<vmem>>, vector<128x128xf32>,
    return
  }
  func.func @transform_0(%arg0: i32) -> (i32, i32) {
    %c0_i32 = arith.constant 0 : i32
    %c0_i32_0 = arith.constant 0 : i32
    return %arg0, %c0_i32 : i32, i32
  }
  func.func @transform_1(%arg0: i32) -> (i32, i32) {
    %c0_i32 = arith.constant 0 : i32
    %c0_i32_0 = arith.constant 0 : i32
    return %arg0, %c0_i32 : i32, i32
  }
  func.func @transform_2(%arg0: i32) -> (i32, i32) {
    %c0_i32 = arith.constant 0 : i32
    %c0_i32_0 = arith.constant 0 : i32
    %c0_i32_1 = arith.constant 0 : i32
    return %c0_i32, %c0_i32_0 : i32, i32
  }
  func.func @transform_3(%arg0: i32) -> (i32, i32) {
    %c0_i32 = arith.constant 0 : i32
    %c0_i32_0 = arith.constant 0 : i32
    %c0_i32_1 = arith.constant 0 : i32
    return %c0_i32, %c0_i32_0 : i32, i32
  }
  func.func @transform_4(%arg0: i32) -> (i32, i32) {
    %c0_i32 = arith.constant 0 : i32
    %c0_i32_0 = arith.constant 0 : i32
    %c0_i32_1 = arith.constant 0 : i32
    return %c0_i32, %c0_i32_0 : i32, i32
  }
  func.func @transform_5(%arg0: i32) -> (i32, i32) {
    %c0_i32 = arith.constant 0 : i32
    %c0_i32_0 = arith.constant 0 : i32
    %c0_i32_1 = arith.constant 0 : i32
    return %c0_i32, %c0_i32_0 : i32, i32
  }
  func.func @transform_6(%arg0: i32) -> (i32, i32) {
    %c0_i32 = arith.constant 0 : i32
    %c0_i32_0 = arith.constant 0 : i32
    %c0_i32_1 = arith.constant 0 : i32
    return %c0_i32, %c0_i32_0 : i32, i32
  }
  func.func @transform_7(%arg0: i32) -> (i32, i32) {
    %c0_i32 = arith.constant 0 : i32
    %c0_i32_0 = arith.constant 0 : i32
    %c0_i32_1 = arith.constant 0 : i32
    return %c0_i32, %c0_i32_0 : i32, i32
  }
  func.func @transform_8(%arg0: i32) -> (i32, i32) {
    %c0_i32 = arith.constant 0 : i32
    %c0_i32_0 = arith.constant 0 : i32
    %c0_i32_1 = arith.constant 0 : i32
    return %c0_i32, %c0_i32_0 : i32, i32
  }
  func.func @transform_9(%arg0: i32) -> (i32, i32) {
    %c0_i32 = arith.constant 0 : i32
    %c0_i32_0 = arith.constant 0 : i32
    %c0_i32_1 = arith.constant 0 : i32
    return %c0_i32, %c0_i32_0 : i32, i32
  }
  func.func @transform_10(%arg0: i32) -> (i32, i32) {
    %c0_i32 = arith.constant 0 : i32
    %c0_i32_0 = arith.constant 0 : i32
    %c0_i32_1 = arith.constant 0 : i32
    return %c0_i32, %c0_i32_0 : i32, i32
  }
  func.func @transform_11(%arg0: i32) -> (i32, i32) {
    %c0_i32 = arith.constant 0 : i32
    %c0_i32_0 = arith.constant 0 : i32
    %c0_i32_1 = arith.constant 0 : i32
    return %c0_i32, %c0_i32_0 : i32, i32
  }
  func.func @transform_12(%arg0: i32) -> (i32, i32) {
    %c0_i32 = arith.constant 0 : i32
    %c0_i32_0 = arith.constant 0 : i32
    %c0_i32_1 = arith.constant 0 : i32
    return %c0_i32, %c0_i32_0 : i32, i32
  }
  func.func @transform_13(%arg0: i32) -> (i32, i32) {
    %c0_i32 = arith.constant 0 : i32
    %c0_i32_0 = arith.constant 0 : i32
    %c0_i32_1 = arith.constant 0 : i32
    return %c0_i32, %c0_i32_0 : i32, i32
  }
  func.func @transform_14(%arg0: i32) -> (i32, i32) {
    %c0_i32 = arith.constant 0 : i32
    %c0_i32_0 = arith.constant 0 : i32
    %c0_i32_1 = arith.constant 0 : i32
    return %c0_i32, %c0_i32_0 : i32, i32
  }
  func.func @transform_15(%arg0: i32) -> (i32, i32) {
    %c0_i32 = arith.constant 0 : i32
    %c0_i32_0 = arith.constant 0 : i32
    %c0_i32_1 = arith.constant 0 : i32
    return %c0_i32, %c0_i32_0 : i32, i32
  }
  func.func @transform_16(%arg0: i32) -> (i32, i32) {
    %c0_i32 = arith.constant 0 : i32
    %c0_i32_0 = arith.constant 0 : i32
    %c0_i32_1 = arith.constant 0 : i32
    return %c0_i32, %c0_i32_0 : i32, i32
  }
  func.func @transform_17(%arg0: i32) -> (i32, i32) {
    %c0_i32 = arith.constant 0 : i32
    %c0_i32_0 = arith.constant 0 : i32
    %c0_i32_1 = arith.constant 0 : i32
    return %c0_i32, %c0_i32_0 : i32, i32
  }
  func.func @transform_18(%arg0: i32) -> (i32, i32) {
    %c0_i32 = arith.constant 0 : i32
    %c0_i32_0 = arith.constant 0 : i32
    %c0_i32_1 = arith.constant 0 : i32
    return %c0_i32, %c0_i32_0 : i32, i32
  }
  func.func @transform_19(%arg0: i32) -> (i32, i32) {
    %c0_i32 = arith.constant 0 : i32
    %c0_i32_0 = arith.constant 0 : i32
    %c0_i32_1 = arith.constant 0 : i32
    return %c0_i32, %c0_i32_0 : i32, i32
  }
  func.func @transform_20(%arg0: i32) -> (i32, i32) {
    %c0_i32 = arith.constant 0 : i32
    %c0_i32_0 = arith.constant 0 : i32
    %c0_i32_1 = arith.constant 0 : i32
    return %c0_i32, %c0_i32_0 : i32, i32
  }
  func.func @transform_21(%arg0: i32) -> (i32, i32) {
    %c0_i32 = arith.constant 0 : i32
    %c0_i32_0 = arith.constant 0 : i32
    return %arg0, %c0_i32 : i32, i32
  }
  func.func @transform_22(%arg0: i32) -> (i32, i32) {
    %c0_i32 = arith.constant 0 : i32
    %c0_i32_0 = arith.constant 0 : i32
    return %arg0, %c0_i32 : i32, i32
  }
  func.func @transform_23(%arg0: i32) -> (i32, i32) {
    %c0_i32 = arith.constant 0 : i32
    %c0_i32_0 = arith.constant 0 : i32
    return %arg0, %c0_i32 : i32, i32
  }
}

</mosaic_0001>

<llo_original>
// kernel: tpu_custom_call.1
$region0: #{tpu_custom_call.1}
  #allocation0 [shape = 'u32[]', space=smem, size = 0x4, offset = 0x4, fixed_abs, tag = 'smem constant byte address 0x4 - core index']
  #allocation1 [shape = 'u32[144,128]{1,0:T(1,128)}', space=vmem, size = 0x12000, scoped, tag = 'internal scratch']
  %s0 = inlined_call_operand.vmem [shape: f32[256,64], index: 0, kind: input, shape index: {}]
  %s1 = inlined_call_operand.vmem [shape: f32[256,16], index: 1, kind: input, shape index: {}]
  %s2 = inlined_call_operand.vmem [shape: f32[64,64], index: 2, kind: input, shape index: {}]
  %s3 = inlined_call_operand.vmem [shape: f32[1,64], index: 3, kind: input, shape index: {}]
  %s4 = inlined_call_operand.vmem [shape: f32[64,64], index: 4, kind: input, shape index: {}]
  %s5 = inlined_call_operand.vmem [shape: f32[1,64], index: 5, kind: input, shape index: {}]
  %s6 = inlined_call_operand.vmem [shape: f32[64,32], index: 6, kind: input, shape index: {}]
  %s7 = inlined_call_operand.vmem [shape: f32[1,32], index: 7, kind: input, shape index: {}]
  %s8 = inlined_call_operand.vmem [shape: f32[32,32], index: 8, kind: input, shape index: {}]
  %s9 = inlined_call_operand.vmem [shape: f32[1,32], index: 9, kind: input, shape index: {}]
  %s10 = inlined_call_operand.vmem [shape: f32[16,40], index: 10, kind: input, shape index: {}]
  %s11 = inlined_call_operand.vmem [shape: f32[1,40], index: 11, kind: input, shape index: {}]
  %s12 = inlined_call_operand.vmem [shape: f32[32,64], index: 12, kind: input, shape index: {}]
  %s13 = inlined_call_operand.vmem [shape: f32[1,64], index: 13, kind: input, shape index: {}]
  %s14 = inlined_call_operand.vmem [shape: f32[64,64], index: 14, kind: input, shape index: {}]
  %s15 = inlined_call_operand.vmem [shape: f32[1,64], index: 15, kind: input, shape index: {}]
  %s16 = inlined_call_operand.vmem [shape: f32[64,64], index: 16, kind: input, shape index: {}]
  %s17 = inlined_call_operand.vmem [shape: f32[1,64], index: 17, kind: input, shape index: {}]
  %s18 = inlined_call_operand.vmem [shape: f32[8,8], index: 18, kind: input, shape index: {}]
  %s19 = inlined_call_operand.vmem [shape: f32[1,8], index: 19, kind: input, shape index: {}]
  %s20 = inlined_call_operand.vmem [shape: f32[1,128], index: 20, kind: input, shape index: {}]
  %s21 = inlined_call_operand.vmem [shape: f32[256,64], index: 21, kind: output, shape index: {0}]
  %s22 = inlined_call_operand.vmem [shape: f32[256,56], index: 22, kind: output, shape index: {1}]
  %s23 = inlined_call_operand.hbm [shape: f32[256,128], index: 23, kind: output, shape index: {2}]
  %24 = xla_tuple %s21, %s22, %s23
  %s25 = sld [smem:[#allocation0]]
  $region133: #{tpu_custom_call.1} parent=0
    _
  %s27 = ssub.s32 1, %s25
  %s28 = scalar_select 0, %s27, %s25
  $region1: #{tpu_custom_call.1} parent=0
    #allocation2 [shape = 'u8[131072]{0}', space=vmem, size = 0x20000, scoped, tag = 'output window, operand 2']
    #allocation3 [shape = 's32[2]{0}', space=sflag, size = 0x8, scoped, tag = 'scoped memory for tpu_custom_call.1']
    %29 = vsyncpa [#allocation3], 0
    %s30 = scalar_lea.sflag [#allocation3], 1
    %31 = vsyncpa %s30, 0
    loop: start=0, step=1, limit=4
    $region2: #{tpu_custom_call.1} parent=1 // loop_pre_header
      _
    $region3: #{tpu_custom_call.1} parent=1 // loop_header
      %s33 = sphi 0, %s37
      %p34 = scmp.ge.s32.totalorder %s33, 4
      %s43 = sphi 0, %s45
      %s46 = sphi 0, %s43
      %s47 = sphi 0, %s46
      %s63 = sphi 0, %s47
      %s69 = sphi 0, %s71
      %s72 = sphi 0, %s69
      %s73 = sphi 0, %s72
      %s89 = sphi 0, %s73
      %s93 = sphi 0, %s93
      %s95 = sphi 0, %s93
      %s96 = sphi 0, %s95
      %s110 = sphi 0, %s96
      %s114 = sphi 0, %s114
      %s116 = sphi 0, %s114
      %s117 = sphi 0, %s116
      %s131 = sphi 0, %s117
      %s135 = sphi 0, %s135
      %s137 = sphi 0, %s135
      %s138 = sphi 0, %s137
      %s152 = sphi 0, %s138
      %s156 = sphi 0, %s156
      %s158 = sphi 0, %s156
      %s159 = sphi 0, %s158
      %s173 = sphi 0, %s159
      %s177 = sphi 0, %s177
      %s179 = sphi 0, %s177
      %s180 = sphi 0, %s179
      %s194 = sphi 0, %s180
      %s198 = sphi 0, %s198
      %s200 = sphi 0, %s198
      %s201 = sphi 0, %s200
      %s215 = sphi 0, %s201
      %s219 = sphi 0, %s219
      %s221 = sphi 0, %s219
      %s222 = sphi 0, %s221
      %s236 = sphi 0, %s222
      %s240 = sphi 0, %s240
      %s242 = sphi 0, %s240
      %s243 = sphi 0, %s242
      %s257 = sphi 0, %s243
      %s261 = sphi 0, %s261
      %s263 = sphi 0, %s261
      %s264 = sphi 0, %s263
      %s278 = sphi 0, %s264
      %s282 = sphi 0, %s282
      %s284 = sphi 0, %s282
      %s285 = sphi 0, %s284
      %s299 = sphi 0, %s285
      %s303 = sphi 0, %s303
      %s305 = sphi 0, %s303
      %s306 = sphi 0, %s305
      %s320 = sphi 0, %s306
      %s324 = sphi 0, %s324
      %s326 = sphi 0, %s324
      %s327 = sphi 0, %s326
      %s341 = sphi 0, %s327
      %s345 = sphi 0, %s345
      %s347 = sphi 0, %s345
      %s348 = sphi 0, %s347
      %s362 = sphi 0, %s348
      %s366 = sphi 0, %s366
      %s368 = sphi 0, %s366
      %s369 = sphi 0, %s368
      %s383 = sphi 0, %s369
      %s387 = sphi 0, %s387
      %s389 = sphi 0, %s387
      %s390 = sphi 0, %s389
      %s404 = sphi 0, %s390
      %s408 = sphi 0, %s408
      %s410 = sphi 0, %s408
      %s411 = sphi 0, %s410
      %s425 = sphi 0, %s411
      %s429 = sphi 0, %s429
      %s431 = sphi 0, %s429
      %s432 = sphi 0, %s431
      %s446 = sphi 0, %s432
      %s450 = sphi 0, %s450
      %s452 = sphi 0, %s450
      %s453 = sphi 0, %s452
      %s467 = sphi 0, %s453
      %s471 = sphi 0, %s471
      %s473 = sphi 0, %s471
      %s474 = sphi 0, %s473
      %s488 = sphi 0, %s474
      %s494 = sphi 0, %s496
      %s497 = sphi 0, %s494
      %s498 = sphi 0, %s497
      %s514 = sphi 0, %s498
      %s520 = sphi 0, %s522
      %s523 = sphi 0, %s520
      %s524 = sphi 0, %s523
      %s540 = sphi 0, %s524
      %s546 = sphi 0, %s548
      %s549 = sphi 0, %s546
      %s550 = sphi 0, %s549
      %s566 = sphi 0, %s550
    $region4: #{tpu_custom_call.1} parent=1 // loop_header_branch
      %36 = sbr.rel (%p34) target = $region8
    $region5: #{tpu_custom_call.1} parent=1 // loop_body
      %s38 = ssub.s32 %s33, 1
      %s39 = ssub.s32 %s33, 2
      %s40 = sadd.s32 %s33, 1
      %s41 = ssub.s32 %s33, %s40
      %p42 = scmp.eq.s32.totalorder %s41, 0
      %s44 = sadd.s32 %s43, 1
      %s45 = scalar_select %p42, %s43, %s44
      %p48 = pneg %p42
      %p49 = scmp.eq.s32.totalorder %s33, 1
      %p50 = por %p48, %p49
      %p51 = scmp.ne.s32.totalorder %s43, %s46
      %p52 = scmp.eq.s32.totalorder %s33, 0
      %p53 = por %p51, %p52
      %p54 = scmp.ne.s32.totalorder %s43, %s46
      %p55 = scmp.eq.s32.totalorder %s38, 1
      %p56 = por %p54, %p55
      %p57 = scmp.ne.s32.totalorder %s46, %s47
      %p58 = scmp.eq.s32.totalorder %s38, 0
      %p59 = por %p57, %p58
      %p60 = scmp.ne.s32.totalorder %s46, %s47
      %p61 = scmp.eq.s32.totalorder %s39, 1
      %p62 = por %p60, %p61
      %p64 = scmp.ne.s32.totalorder %s47, %s63
      %p65 = scmp.eq.s32.totalorder %s39, 0
      %p66 = por %p64, %p65
      %s67 = ssub.s32 %s33, %s40
      %p68 = scmp.eq.s32.totalorder %s67, 0
      %s70 = sadd.s32 %s69, 1
      %s71 = scalar_select %p68, %s69, %s70
      %p74 = pneg %p68
      %p75 = scmp.eq.s32.totalorder %s33, 1
      %p76 = por %p74, %p75
      %p77 = scmp.ne.s32.totalorder %s69, %s72
      %p78 = scmp.eq.s32.totalorder %s33, 0
      %p79 = por %p77, %p78
      %p80 = scmp.ne.s32.totalorder %s69, %s72
      %p81 = scmp.eq.s32.totalorder %s38, 1
      %p82 = por %p80, %p81
      %p83 = scmp.ne.s32.totalorder %s72, %s73
      %p84 = scmp.eq.s32.totalorder %s38, 0
      %p85 = por %p83, %p84
      %p86 = scmp.ne.s32.totalorder %s72, %s73
      %p87 = scmp.eq.s32.totalorder %s39, 1
      %p88 = por %p86, %p87
      %p90 = scmp.ne.s32.totalorder %s73, %s89
      %p91 = scmp.eq.s32.totalorder %s39, 0
      %p92 = por %p90, %p91
      %s94 = sadd.s32 %s93, 1
      %p97 = scmp.eq.s32.totalorder %s33, 1
      %p98 = scmp.ne.s32.totalorder %s93, %s95
      %p99 = scmp.eq.s32.totalorder %s33, 0
      %p100 = por %p98, %p99
      %p101 = scmp.ne.s32.totalorder %s93, %s95
      %p102 = scmp.eq.s32.totalorder %s38, 1
      %p103 = por %p101, %p102
      %p104 = scmp.ne.s32.totalorder %s95, %s96
      %p105 = scmp.eq.s32.totalorder %s38, 0
      %p106 = por %p104, %p105
      %p107 = scmp.ne.s32.totalorder %s95, %s96
      %p108 = scmp.eq.s32.totalorder %s39, 1
      %p109 = por %p107, %p108
      %p111 = scmp.ne.s32.totalorder %s96, %s110
      %p112 = scmp.eq.s32.totalorder %s39, 0
      %p113 = por %p111, %p112
      %s115 = sadd.s32 %s114, 1
      %p118 = scmp.eq.s32.totalorder %s33, 1
      %p119 = scmp.ne.s32.totalorder %s114, %s116
      %p120 = scmp.eq.s32.totalorder %s33, 0
      %p121 = por %p119, %p120
      %p122 = scmp.ne.s32.totalorder %s114, %s116
      %p123 = scmp.eq.s32.totalorder %s38, 1
      %p124 = por %p122, %p123
      %p125 = scmp.ne.s32.totalorder %s116, %s117
      %p126 = scmp.eq.s32.totalorder %s38, 0
      %p127 = por %p125, %p126
      %p128 = scmp.ne.s32.totalorder %s116, %s117
      %p129 = scmp.eq.s32.totalorder %s39, 1
      %p130 = por %p128, %p129
      %p132 = scmp.ne.s32.totalorder %s117, %s131
      %p133 = scmp.eq.s32.totalorder %s39, 0
      %p134 = por %p132, %p133
      %s136 = sadd.s32 %s135, 1
      %p139 = scmp.eq.s32.totalorder %s33, 1
      %p140 = scmp.ne.s32.totalorder %s135, %s137
      %p141 = scmp.eq.s32.totalorder %s33, 0
      %p142 = por %p140, %p141
      %p143 = scmp.ne.s32.totalorder %s135, %s137
      %p144 = scmp.eq.s32.totalorder %s38, 1
      %p145 = por %p143, %p144
      %p146 = scmp.ne.s32.totalorder %s137, %s138
      %p147 = scmp.eq.s32.totalorder %s38, 0
      %p148 = por %p146, %p147
      %p149 = scmp.ne.s32.totalorder %s137, %s138
      %p150 = scmp.eq.s32.totalorder %s39, 1
      %p151 = por %p149, %p150
      %p153 = scmp.ne.s32.totalorder %s138, %s152
      %p154 = scmp.eq.s32.totalorder %s39, 0
      %p155 = por %p153, %p154
      %s157 = sadd.s32 %s156, 1
      %p160 = scmp.eq.s32.totalorder %s33, 1
      %p161 = scmp.ne.s32.totalorder %s156, %s158
      %p162 = scmp.eq.s32.totalorder %s33, 0
      %p163 = por %p161, %p162
      %p164 = scmp.ne.s32.totalorder %s156, %s158
      %p165 = scmp.eq.s32.totalorder %s38, 1
      %p166 = por %p164, %p165
      %p167 = scmp.ne.s32.totalorder %s158, %s159
      %p168 = scmp.eq.s32.totalorder %s38, 0
      %p169 = por %p167, %p168
      %p170 = scmp.ne.s32.totalorder %s158, %s159
      %p171 = scmp.eq.s32.totalorder %s39, 1
      %p172 = por %p170, %p171
      %p174 = scmp.ne.s32.totalorder %s159, %s173
      %p175 = scmp.eq.s32.totalorder %s39, 0
      %p176 = por %p174, %p175
      %s178 = sadd.s32 %s177, 1
      %p181 = scmp.eq.s32.totalorder %s33, 1
      %p182 = scmp.ne.s32.totalorder %s177, %s179
      %p183 = scmp.eq.s32.totalorder %s33, 0
      %p184 = por %p182, %p183
      %p185 = scmp.ne.s32.totalorder %s177, %s179
      %p186 = scmp.eq.s32.totalorder %s38, 1
      %p187 = por %p185, %p186
      %p188 = scmp.ne.s32.totalorder %s179, %s180
      %p189 = scmp.eq.s32.totalorder %s38, 0
      %p190 = por %p188, %p189
      %p191 = scmp.ne.s32.totalorder %s179, %s180
      %p192 = scmp.eq.s32.totalorder %s39, 1
      %p193 = por %p191, %p192
      %p195 = scmp.ne.s32.totalorder %s180, %s194
      %p196 = scmp.eq.s32.totalorder %s39, 0
      %p197 = por %p195, %p196
      %s199 = sadd.s32 %s198, 1
      %p202 = scmp.eq.s32.totalorder %s33, 1
      %p203 = scmp.ne.s32.totalorder %s198, %s200
      %p204 = scmp.eq.s32.totalorder %s33, 0
      %p205 = por %p203, %p204
      %p206 = scmp.ne.s32.totalorder %s198, %s200
      %p207 = scmp.eq.s32.totalorder %s38, 1
      %p208 = por %p206, %p207
      %p209 = scmp.ne.s32.totalorder %s200, %s201
      %p210 = scmp.eq.s32.totalorder %s38, 0
      %p211 = por %p209, %p210
      %p212 = scmp.ne.s32.totalorder %s200, %s201
      %p213 = scmp.eq.s32.totalorder %s39, 1
      %p214 = por %p212, %p213
      %p216 = scmp.ne.s32.totalorder %s201, %s215
      %p217 = scmp.eq.s32.totalorder %s39, 0
      %p218 = por %p216, %p217
      %s220 = sadd.s32 %s219, 1
      %p223 = scmp.eq.s32.totalorder %s33, 1
      %p224 = scmp.ne.s32.totalorder %s219, %s221
      %p225 = scmp.eq.s32.totalorder %s33, 0
      %p226 = por %p224, %p225
      %p227 = scmp.ne.s32.totalorder %s219, %s221
      %p228 = scmp.eq.s32.totalorder %s38, 1
      %p229 = por %p227, %p228
      %p230 = scmp.ne.s32.totalorder %s221, %s222
      %p231 = scmp.eq.s32.totalorder %s38, 0
      %p232 = por %p230, %p231
      %p233 = scmp.ne.s32.totalorder %s221, %s222
      %p234 = scmp.eq.s32.totalorder %s39, 1
      %p235 = por %p233, %p234
      %p237 = scmp.ne.s32.totalorder %s222, %s236
      %p238 = scmp.eq.s32.totalorder %s39, 0
      %p239 = por %p237, %p238
      %s241 = sadd.s32 %s240, 1
      %p244 = scmp.eq.s32.totalorder %s33, 1
      %p245 = scmp.ne.s32.totalorder %s240, %s242
      %p246 = scmp.eq.s32.totalorder %s33, 0
      %p247 = por %p245, %p246
      %p248 = scmp.ne.s32.totalorder %s240, %s242
      %p249 = scmp.eq.s32.totalorder %s38, 1
      %p250 = por %p248, %p249
      %p251 = scmp.ne.s32.totalorder %s242, %s243
      %p252 = scmp.eq.s32.totalorder %s38, 0
      %p253 = por %p251, %p252
      %p254 = scmp.ne.s32.totalorder %s242, %s243
      %p255 = scmp.eq.s32.totalorder %s39, 1
      %p256 = por %p254, %p255
      %p258 = scmp.ne.s32.totalorder %s243, %s257
      %p259 = scmp.eq.s32.totalorder %s39, 0
      %p260 = por %p258, %p259
      %s262 = sadd.s32 %s261, 1
      %p265 = scmp.eq.s32.totalorder %s33, 1
      %p266 = scmp.ne.s32.totalorder %s261, %s263
      %p267 = scmp.eq.s32.totalorder %s33, 0
      %p268 = por %p266, %p267
      %p269 = scmp.ne.s32.totalorder %s261, %s263
      %p270 = scmp.eq.s32.totalorder %s38, 1
      %p271 = por %p269, %p270
      %p272 = scmp.ne.s32.totalorder %s263, %s264
      %p273 = scmp.eq.s32.totalorder %s38, 0
      %p274 = por %p272, %p273
      %p275 = scmp.ne.s32.totalorder %s263, %s264
      %p276 = scmp.eq.s32.totalorder %s39, 1
      %p277 = por %p275, %p276
      %p279 = scmp.ne.s32.totalorder %s264, %s278
      %p280 = scmp.eq.s32.totalorder %s39, 0
      %p281 = por %p279, %p280
      %s283 = sadd.s32 %s282, 1
      %p286 = scmp.eq.s32.totalorder %s33, 1
      %p287 = scmp.ne.s32.totalorder %s282, %s284
      %p288 = scmp.eq.s32.totalorder %s33, 0
      %p289 = por %p287, %p288
      %p290 = scmp.ne.s32.totalorder %s282, %s284
      %p291 = scmp.eq.s32.totalorder %s38, 1
      %p292 = por %p290, %p291
      %p293 = scmp.ne.s32.totalorder %s284, %s285
      %p294 = scmp.eq.s32.totalorder %s38, 0
      %p295 = por %p293, %p294
      %p296 = scmp.ne.s32.totalorder %s284, %s285
      %p297 = scmp.eq.s32.totalorder %s39, 1
      %p298 = por %p296, %p297
      %p300 = scmp.ne.s32.totalorder %s285, %s299
      %p301 = scmp.eq.s32.totalorder %s39, 0
      %p302 = por %p300, %p301
      %s304 = sadd.s32 %s303, 1
      %p307 = scmp.eq.s32.totalorder %s33, 1
      %p308 = scmp.ne.s32.totalorder %s303, %s305
      %p309 = scmp.eq.s32.totalorder %s33, 0
      %p310 = por %p308, %p309
      %p311 = scmp.ne.s32.totalorder %s303, %s305
      %p312 = scmp.eq.s32.totalorder %s38, 1
      %p313 = por %p311, %p312
      %p314 = scmp.ne.s32.totalorder %s305, %s306
      %p315 = scmp.eq.s32.totalorder %s38, 0
      %p316 = por %p314, %p315
      %p317 = scmp.ne.s32.totalorder %s305, %s306
      %p318 = scmp.eq.s32.totalorder %s39, 1
      %p319 = por %p317, %p318
      %p321 = scmp.ne.s32.totalorder %s306, %s320
      %p322 = scmp.eq.s32.totalorder %s39, 0
      %p323 = por %p321, %p322
      %s325 = sadd.s32 %s324, 1
      %p328 = scmp.eq.s32.totalorder %s33, 1
      %p329 = scmp.ne.s32.totalorder %s324, %s326
      %p330 = scmp.eq.s32.totalorder %s33, 0
      %p331 = por %p329, %p330
      %p332 = scmp.ne.s32.totalorder %s324, %s326
      %p333 = scmp.eq.s32.totalorder %s38, 1
      %p334 = por %p332, %p333
      %p335 = scmp.ne.s32.totalorder %s326, %s327
      %p336 = scmp.eq.s32.totalorder %s38, 0
      %p337 = por %p335, %p336
      %p338 = scmp.ne.s32.totalorder %s326, %s327
      %p339 = scmp.eq.s32.totalorder %s39, 1
      %p340 = por %p338, %p339
      %p342 = scmp.ne.s32.totalorder %s327, %s341
      %p343 = scmp.eq.s32.totalorder %s39, 0
      %p344 = por %p342, %p343
      %s346 = sadd.s32 %s345, 1
      %p349 = scmp.eq.s32.totalorder %s33, 1
      %p350 = scmp.ne.s32.totalorder %s345, %s347
      %p351 = scmp.eq.s32.totalorder %s33, 0
      %p352 = por %p350, %p351
      %p353 = scmp.ne.s32.totalorder %s345, %s347
      %p354 = scmp.eq.s32.totalorder %s38, 1
      %p355 = por %p353, %p354
      %p356 = scmp.ne.s32.totalorder %s347, %s348
      %p357 = scmp.eq.s32.totalorder %s38, 0
      %p358 = por %p356, %p357
      %p359 = scmp.ne.s32.totalorder %s347, %s348
      %p360 = scmp.eq.s32.totalorder %s39, 1
      %p361 = por %p359, %p360
      %p363 = scmp.ne.s32.totalorder %s348, %s362
      %p364 = scmp.eq.s32.totalorder %s39, 0
      %p365 = por %p363, %p364
      %s367 = sadd.s32 %s366, 1
      %p370 = scmp.eq.s32.totalorder %s33, 1
      %p371 = scmp.ne.s32.totalorder %s366, %s368
      %p372 = scmp.eq.s32.totalorder %s33, 0
      %p373 = por %p371, %p372
      %p374 = scmp.ne.s32.totalorder %s366, %s368
      %p375 = scmp.eq.s32.totalorder %s38, 1
      %p376 = por %p374, %p375
      %p377 = scmp.ne.s32.totalorder %s368, %s369
      %p378 = scmp.eq.s32.totalorder %s38, 0
      %p379 = por %p377, %p378
      %p380 = scmp.ne.s32.totalorder %s368, %s369
      %p381 = scmp.eq.s32.totalorder %s39, 1
      %p382 = por %p380, %p381
      %p384 = scmp.ne.s32.totalorder %s369, %s383
      %p385 = scmp.eq.s32.totalorder %s39, 0
      %p386 = por %p384, %p385
      %s388 = sadd.s32 %s387, 1
      %p391 = scmp.eq.s32.totalorder %s33, 1
      %p392 = scmp.ne.s32.totalorder %s387, %s389
      %p393 = scmp.eq.s32.totalorder %s33, 0
      %p394 = por %p392, %p393
      %p395 = scmp.ne.s32.totalorder %s387, %s389
      %p396 = scmp.eq.s32.totalorder %s38, 1
      %p397 = por %p395, %p396
      %p398 = scmp.ne.s32.totalorder %s389, %s390
      %p399 = scmp.eq.s32.totalorder %s38, 0
      %p400 = por %p398, %p399
      %p401 = scmp.ne.s32.totalorder %s389, %s390
      %p402 = scmp.eq.s32.totalorder %s39, 1
      %p403 = por %p401, %p402
      %p405 = scmp.ne.s32.totalorder %s390, %s404
      %p406 = scmp.eq.s32.totalorder %s39, 0
      %p407 = por %p405, %p406
      %s409 = sadd.s32 %s408, 1
      %p412 = scmp.eq.s32.totalorder %s33, 1
      %p413 = scmp.ne.s32.totalorder %s408, %s410
      %p414 = scmp.eq.s32.totalorder %s33, 0
      %p415 = por %p413, %p414
      %p416 = scmp.ne.s32.totalorder %s408, %s410
      %p417 = scmp.eq.s32.totalorder %s38, 1
      %p418 = por %p416, %p417
      %p419 = scmp.ne.s32.totalorder %s410, %s411
      %p420 = scmp.eq.s32.totalorder %s38, 0
      %p421 = por %p419, %p420
      %p422 = scmp.ne.s32.totalorder %s410, %s411
      %p423 = scmp.eq.s32.totalorder %s39, 1
      %p424 = por %p422, %p423
      %p426 = scmp.ne.s32.totalorder %s411, %s425
      %p427 = scmp.eq.s32.totalorder %s39, 0
      %p428 = por %p426, %p427
      %s430 = sadd.s32 %s429, 1
      %p433 = scmp.eq.s32.totalorder %s33, 1
      %p434 = scmp.ne.s32.totalorder %s429, %s431
      %p435 = scmp.eq.s32.totalorder %s33, 0
      %p436 = por %p434, %p435
      %p437 = scmp.ne.s32.totalorder %s429, %s431
      %p438 = scmp.eq.s32.totalorder %s38, 1
      %p439 = por %p437, %p438
      %p440 = scmp.ne.s32.totalorder %s431, %s432
      %p441 = scmp.eq.s32.totalorder %s38, 0
      %p442 = por %p440, %p441
      %p443 = scmp.ne.s32.totalorder %s431, %s432
      %p444 = scmp.eq.s32.totalorder %s39, 1
      %p445 = por %p443, %p444
      %p447 = scmp.ne.s32.totalorder %s432, %s446
      %p448 = scmp.eq.s32.totalorder %s39, 0
      %p449 = por %p447, %p448
      %s451 = sadd.s32 %s450, 1
      %p454 = scmp.eq.s32.totalorder %s33, 1
      %p455 = scmp.ne.s32.totalorder %s450, %s452
      %p456 = scmp.eq.s32.totalorder %s33, 0
      %p457 = por %p455, %p456
      %p458 = scmp.ne.s32.totalorder %s450, %s452
      %p459 = scmp.eq.s32.totalorder %s38, 1
      %p460 = por %p458, %p459
      %p461 = scmp.ne.s32.totalorder %s452, %s453
      %p462 = scmp.eq.s32.totalorder %s38, 0
      %p463 = por %p461, %p462
      %p464 = scmp.ne.s32.totalorder %s452, %s453
      %p465 = scmp.eq.s32.totalorder %s39, 1
      %p466 = por %p464, %p465
      %p468 = scmp.ne.s32.totalorder %s453, %s467
      %p469 = scmp.eq.s32.totalorder %s39, 0
      %p470 = por %p468, %p469
      %s472 = sadd.s32 %s471, 1
      %p475 = scmp.eq.s32.totalorder %s33, 1
      %p476 = scmp.ne.s32.totalorder %s471, %s473
      %p477 = scmp.eq.s32.totalorder %s33, 0
      %p478 = por %p476, %p477
      %p479 = scmp.ne.s32.totalorder %s471, %s473
      %p480 = scmp.eq.s32.totalorder %s38, 1
      %p481 = por %p479, %p480
      %p482 = scmp.ne.s32.totalorder %s473, %s474
      %p483 = scmp.eq.s32.totalorder %s38, 0
      %p484 = por %p482, %p483
      %p485 = scmp.ne.s32.totalorder %s473, %s474
      %p486 = scmp.eq.s32.totalorder %s39, 1
      %p487 = por %p485, %p486
      %p489 = scmp.ne.s32.totalorder %s474, %s488
      %p490 = scmp.eq.s32.totalorder %s39, 0
      %p491 = por %p489, %p490
      %s492 = ssub.s32 %s33, %s40
      %p493 = scmp.eq.s32.totalorder %s492, 0
      %s495 = sadd.s32 %s494, 1
      %s496 = scalar_select %p493, %s494, %s495
      %p499 = pneg %p493
      %p500 = scmp.eq.s32.totalorder %s33, 1
      %p501 = por %p499, %p500
      %p502 = scmp.ne.s32.totalorder %s494, %s497
      %p503 = scmp.eq.s32.totalorder %s33, 0
      %p504 = por %p502, %p503
      %p505 = scmp.ne.s32.totalorder %s494, %s497
      %p506 = scmp.eq.s32.totalorder %s38, 1
      %p507 = por %p505, %p506
      %p508 = scmp.ne.s32.totalorder %s497, %s498
      %p509 = scmp.eq.s32.totalorder %s38, 0
      %p510 = por %p508, %p509
      %p511 = scmp.ne.s32.totalorder %s497, %s498
      %p512 = scmp.eq.s32.totalorder %s39, 1
      %p513 = por %p511, %p512
      %p515 = scmp.ne.s32.totalorder %s498, %s514
      %p516 = scmp.eq.s32.totalorder %s39, 0
      %p517 = por %p515, %p516
      %s518 = ssub.s32 %s33, %s40
      %p519 = scmp.eq.s32.totalorder %s518, 0
      %s521 = sadd.s32 %s520, 1
      %s522 = scalar_select %p519, %s520, %s521
      %p525 = pneg %p519
      %p526 = scmp.eq.s32.totalorder %s33, 1
      %p527 = por %p525, %p526
      %p528 = scmp.ne.s32.totalorder %s520, %s523
      %p529 = scmp.eq.s32.totalorder %s33, 0
      %p530 = por %p528, %p529
      %p531 = scmp.ne.s32.totalorder %s520, %s523
      %p532 = scmp.eq.s32.totalorder %s38, 1
      %p533 = por %p531, %p532
      %p534 = scmp.ne.s32.totalorder %s523, %s524
      %p535 = scmp.eq.s32.totalorder %s38, 0
      %p536 = por %p534, %p535
      %p537 = scmp.ne.s32.totalorder %s523, %s524
      %p538 = scmp.eq.s32.totalorder %s39, 1
      %p539 = por %p537, %p538
      %p541 = scmp.ne.s32.totalorder %s524, %s540
      %p542 = scmp.eq.s32.totalorder %s39, 0
      %p543 = por %p541, %p542
      %s544 = ssub.s32 %s33, %s40
      %p545 = scmp.eq.s32.totalorder %s544, 0
      %s547 = sadd.s32 %s546, 1
      %s548 = scalar_select %p545, %s546, %s547
      %p551 = pneg %p545
      %p552 = scmp.eq.s32.totalorder %s33, 1
      %p553 = por %p551, %p552
      %p554 = scmp.ne.s32.totalorder %s546, %s549
      %p555 = scmp.eq.s32.totalorder %s33, 0
      %p556 = por %p554, %p555
      %p557 = scmp.ne.s32.totalorder %s546, %s549
      %p558 = scmp.eq.s32.totalorder %s38, 1
      %p559 = por %p557, %p558
      %p560 = scmp.ne.s32.totalorder %s549, %s550
      %p561 = scmp.eq.s32.totalorder %s38, 0
      %p562 = por %p560, %p561
      %p563 = scmp.ne.s32.totalorder %s549, %s550
      %p564 = scmp.eq.s32.totalorder %s39, 1
      %p565 = por %p563, %p564
      %p567 = scmp.ne.s32.totalorder %s550, %s566
      %p568 = scmp.eq.s32.totalorder %s39, 0
      %p569 = por %p567, %p568
      %p570 = scmp.le.s32.totalorder 1, %s33
      %p571 = scmp.lt.s32.totalorder %s33, 3
      %p572 = pnand %p570, %p571
      %p573 = pneg %p572
      // Predicated region
      $region9: #{tpu_custom_call.1} parent=5 // pred_check
        _
      $region10: #{tpu_custom_call.1} parent=5 // pred_check_branch
        %575 = sbr.rel (%p572) target = $region12
      $region11: #{tpu_custom_call.1} parent=5 // pred_region
        %s576 = ssub.s32 %s33, 1
        // Predicated region
        $region13: #{tpu_custom_call.1} parent=11 // pred_check
          %p577 = pneg %p106
        $region14: #{tpu_custom_call.1} parent=11 // pred_check_branch
          %579 = sbr.rel (%p577) target = $region16
        $region15: #{tpu_custom_call.1} parent=11 // pred_region
          _
        $region16: #{tpu_custom_call.1} parent=11 // pred_fallthru
          _
        // Predicated region
        $region17: #{tpu_custom_call.1} parent=11 // pred_check
          %p580 = pneg %p127
        $region18: #{tpu_custom_call.1} parent=11 // pred_check_branch
          %582 = sbr.rel (%p580) target = $region20
        $region19: #{tpu_custom_call.1} parent=11 // pred_region
          _
        $region20: #{tpu_custom_call.1} parent=11 // pred_fallthru
          _
        // Predicated region
        $region21: #{tpu_custom_call.1} parent=11 // pred_check
          %p583 = pneg %p148
        $region22: #{tpu_custom_call.1} parent=11 // pred_check_branch
          %585 = sbr.rel (%p583) target = $region24
        $region23: #{tpu_custom_call.1} parent=11 // pred_region
          _
        $region24: #{tpu_custom_call.1} parent=11 // pred_fallthru
          _
        // Predicated region
        $region25: #{tpu_custom_call.1} parent=11 // pred_check
          %p586 = pneg %p169
        $region26: #{tpu_custom_call.1} parent=11 // pred_check_branch
          %588 = sbr.rel (%p586) target = $region28
        $region27: #{tpu_custom_call.1} parent=11 // pred_region
          _
        $region28: #{tpu_custom_call.1} parent=11 // pred_fallthru
          _
        // Predicated region
        $region29: #{tpu_custom_call.1} parent=11 // pred_check
          %p589 = pneg %p190
        $region30: #{tpu_custom_call.1} parent=11 // pred_check_branch
          %591 = sbr.rel (%p589) target = $region32
        $region31: #{tpu_custom_call.1} parent=11 // pred_region
          _
        $region32: #{tpu_custom_call.1} parent=11 // pred_fallthru
          _
        // Predicated region
        $region33: #{tpu_custom_call.1} parent=11 // pred_check
          %p592 = pneg %p211
        $region34: #{tpu_custom_call.1} parent=11 // pred_check_branch
          %594 = sbr.rel (%p592) target = $region36
        $region35: #{tpu_custom_call.1} parent=11 // pred_region
          _
        $region36: #{tpu_custom_call.1} parent=11 // pred_fallthru
          _
        // Predicated region
        $region37: #{tpu_custom_call.1} parent=11 // pred_check
          %p595 = pneg %p232
        $region38: #{tpu_custom_call.1} parent=11 // pred_check_branch
          %597 = sbr.rel (%p595) target = $region40
        $region39: #{tpu_custom_call.1} parent=11 // pred_region
          _
        $region40: #{tpu_custom_call.1} parent=11 // pred_fallthru
          _
        // Predicated region
        $region41: #{tpu_custom_call.1} parent=11 // pred_check
          %p598 = pneg %p253
        $region42: #{tpu_custom_call.1} parent=11 // pred_check_branch
          %600 = sbr.rel (%p598) target = $region44
        $region43: #{tpu_custom_call.1} parent=11 // pred_region
          _
        $region44: #{tpu_custom_call.1} parent=11 // pred_fallthru
          _
        // Predicated region
        $region45: #{tpu_custom_call.1} parent=11 // pred_check
          %p601 = pneg %p274
        $region46: #{tpu_custom_call.1} parent=11 // pred_check_branch
          %603 = sbr.rel (%p601) target = $region48
        $region47: #{tpu_custom_call.1} parent=11 // pred_region
          _
        $region48: #{tpu_custom_call.1} parent=11 // pred_fallthru
          _
        // Predicated region
        $region49: #{tpu_custom_call.1} parent=11 // pred_check
          %p604 = pneg %p295
        $region50: #{tpu_custom_call.1} parent=11 // pred_check_branch
          %606 = sbr.rel (%p604) target = $region52
        $region51: #{tpu_custom_call.1} parent=11 // pred_region
          _
        $region52: #{tpu_custom_call.1} parent=11 // pred_fallthru
          _
        // Predicated region
        $region53: #{tpu_custom_call.1} parent=11 // pred_check
          %p607 = pneg %p316
        $region54: #{tpu_custom_call.1} parent=11 // pred_check_branch
          %609 = sbr.rel (%p607) target = $region56
        $region55: #{tpu_custom_call.1} parent=11 // pred_region
          _
        $region56: #{tpu_custom_call.1} parent=11 // pred_fallthru
          _
        // Predicated region
        $region57: #{tpu_custom_call.1} parent=11 // pred_check
          %p610 = pneg %p337
        $region58: #{tpu_custom_call.1} parent=11 // pred_check_branch
          %612 = sbr.rel (%p610) target = $region60
        $region59: #{tpu_custom_call.1} parent=11 // pred_region
          _
        $region60: #{tpu_custom_call.1} parent=11 // pred_fallthru
          _
        // Predicated region
        $region61: #{tpu_custom_call.1} parent=11 // pred_check
          %p613 = pneg %p358
        $region62: #{tpu_custom_call.1} parent=11 // pred_check_branch
          %615 = sbr.rel (%p613) target = $region64
        $region63: #{tpu_custom_call.1} parent=11 // pred_region
          _
        $region64: #{tpu_custom_call.1} parent=11 // pred_fallthru
          _
        // Predicated region
        $region65: #{tpu_custom_call.1} parent=11 // pred_check
          %p616 = pneg %p379
        $region66: #{tpu_custom_call.1} parent=11 // pred_check_branch
          %618 = sbr.rel (%p616) target = $region68
        $region67: #{tpu_custom_call.1} parent=11 // pred_region
          _
        $region68: #{tpu_custom_call.1} parent=11 // pred_fallthru
          _
        // Predicated region
        $region69: #{tpu_custom_call.1} parent=11 // pred_check
          %p619 = pneg %p400
        $region70: #{tpu_custom_call.1} parent=11 // pred_check_branch
          %621 = sbr.rel (%p619) target = $region72
        $region71: #{tpu_custom_call.1} parent=11 // pred_region
          _
        $region72: #{tpu_custom_call.1} parent=11 // pred_fallthru
          _
        // Predicated region
        $region73: #{tpu_custom_call.1} parent=11 // pred_check
          %p622 = pneg %p421
        $region74: #{tpu_custom_call.1} parent=11 // pred_check_branch
          %624 = sbr.rel (%p622) target = $region76
        $region75: #{tpu_custom_call.1} parent=11 // pred_region
          _
        $region76: #{tpu_custom_call.1} parent=11 // pred_fallthru
          _
        // Predicated region
        $region77: #{tpu_custom_call.1} parent=11 // pred_check
          %p625 = pneg %p442
        $region78: #{tpu_custom_call.1} parent=11 // pred_check_branch
          %627 = sbr.rel (%p625) target = $region80
        $region79: #{tpu_custom_call.1} parent=11 // pred_region
          _
        $region80: #{tpu_custom_call.1} parent=11 // pred_fallthru
          _
        // Predicated region
        $region81: #{tpu_custom_call.1} parent=11 // pred_check
          %p628 = pneg %p463
        $region82: #{tpu_custom_call.1} parent=11 // pred_check_branch
          %630 = sbr.rel (%p628) target = $region84
        $region83: #{tpu_custom_call.1} parent=11 // pred_region
          _
        $region84: #{tpu_custom_call.1} parent=11 // pred_fallthru
          _
        // Predicated region
        $region85: #{tpu_custom_call.1} parent=11 // pred_check
          %p631 = pneg %p484
        $region86: #{tpu_custom_call.1} parent=11 // pred_check_branch
          %633 = sbr.rel (%p631) target = $region88
        $region87: #{tpu_custom_call.1} parent=11 // pred_region
          _
        $region88: #{tpu_custom_call.1} parent=11 // pred_fallthru
          _
      $region12: #{tpu_custom_call.1} parent=5 // pred_fallthru
        _
      %p634 = scmp.lt.s32.totalorder %s33, 2
      // Predicated region
      $region89: #{tpu_custom_call.1} parent=5 // pred_check
        %p635 = pneg %p634
      $region90: #{tpu_custom_call.1} parent=5 // pred_check_branch
        %637 = sbr.rel (%p635) target = $region92
      $region91: #{tpu_custom_call.1} parent=5 // pred_region
        // Predicated region
        $region93: #{tpu_custom_call.1} parent=91 // pred_check
          %p638 = pneg %p53
        $region94: #{tpu_custom_call.1} parent=91 // pred_check_branch
          %640 = sbr.rel (%p638) target = $region96
        $region95: #{tpu_custom_call.1} parent=91 // pred_region
          %s641 = smul.u32 16, %s33
          %p642 = scmp.lt.s32.totalorder %s641, 31
          %s643 = scalar_select %p642, %s641, 31
          %s644 = smul.addr %s643, 8
          %s645 = scalar_lea.vmem %s0, %s644
          %s646 = smul.u32 16, %s33
        $region96: #{tpu_custom_call.1} parent=91 // pred_fallthru
          _
        // Predicated region
        $region97: #{tpu_custom_call.1} parent=91 // pred_check
          %p647 = pneg %p79
        $region98: #{tpu_custom_call.1} parent=91 // pred_check_branch
          %649 = sbr.rel (%p647) target = $region100
        $region99: #{tpu_custom_call.1} parent=91 // pred_region
          %s650 = smul.u32 16, %s33
          %p651 = scmp.lt.s32.totalorder %s650, 31
          %s652 = scalar_select %p651, %s650, 31
          %s653 = smul.addr %s652, 8
          %s654 = scalar_lea.vmem %s1, %s653
          %s655 = smul.u32 16, %s33
        $region100: #{tpu_custom_call.1} parent=91 // pred_fallthru
          _
      $region92: #{tpu_custom_call.1} parent=5 // pred_fallthru
        _
      %p656 = scmp.le.s32.totalorder 1, %s33
      %p657 = scmp.lt.s32.totalorder %s33, 3
      %p658 = pnand %p656, %p657
      %p659 = pneg %p658
      // Predicated region
      $region101: #{tpu_custom_call.1} parent=5 // pred_check
        _
      $region102: #{tpu_custom_call.1} parent=5 // pred_check_branch
        %661 = sbr.rel (%p658) target = $region104
      $region103: #{tpu_custom_call.1} parent=5 // pred_region
        %s662 = ssub.s32 %s33, 1
        %s663 = smul.u32 16, %s38
        %p664 = scmp.lt.s32.totalorder %s663, 31
        %s665 = scalar_select %p664, %s663, 31
        %s666 = smul.addr %s665, 8
        %s667 = scalar_lea.vmem %s0, %s666
        %p668 = pneg %p59
        %p669 = pneg %p56
        %s670 = smul.u32 16, %s38
        %p671 = scmp.lt.s32.totalorder %s670, 31
        %s672 = scalar_select %p671, %s670, 31
        %s673 = smul.addr %s672, 8
        %s674 = scalar_lea.vmem %s1, %s673
        %p675 = pneg %p85
        %p676 = pneg %p82
        %p677 = pneg %p106
        %p678 = pneg %p103
        %p679 = pneg %p127
        %p680 = pneg %p124
        %p681 = pneg %p148
        %p682 = pneg %p145
        %p683 = pneg %p169
        %p684 = pneg %p166
        %p685 = pneg %p190
        %p686 = pneg %p187
        %p687 = pneg %p211
        %p688 = pneg %p208
        %p689 = pneg %p232
        %p690 = pneg %p229
        %p691 = pneg %p253
        %p692 = pneg %p250
        %p693 = pneg %p274
        %p694 = pneg %p271
        %p695 = pneg %p295
        %p696 = pneg %p292
        %p697 = pneg %p316
        %p698 = pneg %p313
        %p699 = pneg %p337
        %p700 = pneg %p334
        %p701 = pneg %p358
        %p702 = pneg %p355
        %p703 = pneg %p379
        %p704 = pneg %p376
        %p705 = pneg %p400
        %p706 = pneg %p397
        %p707 = pneg %p421
        %p708 = pneg %p418
        %p709 = pneg %p442
        %p710 = pneg %p439
        %p711 = pneg %p463
        %p712 = pneg %p460
        %p713 = pneg %p484
        %p714 = pneg %p481
        %p715 = pneg %p510
        %p716 = pneg %p507
        %s717 = smul.u32 16, %s38
        %p718 = scmp.lt.s32.totalorder %s717, 31
        %s719 = scalar_select %p718, %s717, 31
        %s720 = smul.addr %s719, 8
        %s721 = scalar_lea.vmem %s21, %s720
        %p722 = pneg %p536
        %p723 = pneg %p533
        %s724 = smul.u32 16, %s38
        %p725 = scmp.lt.s32.totalorder %s724, 31
        %s726 = scalar_select %p725, %s724, 31
        %s727 = smul.addr %s726, 8
        %s728 = scalar_lea.vmem %s22, %s727
        %p729 = pneg %p562
        %p730 = pneg %p559
        %s731 = sand.u32 %s549, 1
        %s732 = scalar_lea.sflag [#allocation3], %s731
        %s733 = sand.u32 %s549, 1
        %s734 = smul.addr %s733, 128
        %s735 = scalar_lea.vmem [#allocation2], %s734
        %s736 = smul.u32 16, %s38
        %p737 = scmp.lt.s32.totalorder %s736, 31
        %s738 = scalar_select %p737, %s736, 31
        %s739 = smul.addr %s738, 8
        %s740 = scalar_lea.vmem %s0, %s739
        %s741 = smul.u32 16, %s38
        %s742 = smul.u32 16, %s38
        %p743 = scmp.lt.s32.totalorder %s742, 31
        %s744 = scalar_select %p743, %s742, 31
        %s745 = smul.addr %s744, 8
        %s746 = scalar_lea.vmem %s1, %s745
        %s747 = smul.u32 16, %s38
        %s748 = smul.u32 16, %s38
        %p749 = scmp.lt.s32.totalorder %s748, 31
        %s750 = scalar_select %p749, %s748, 31
        %s751 = smul.addr %s750, 8
        %s752 = scalar_lea.vmem %s21, %s751
        %s753 = smul.u32 16, %s38
        %s754 = smul.u32 16, %s38
        %p755 = scmp.lt.s32.totalorder %s754, 31
        %s756 = scalar_select %p755, %s754, 31
        %s757 = smul.addr %s756, 8
        %s758 = scalar_lea.vmem %s22, %s757
        %s759 = smul.u32 16, %s38
        %s760 = smul.u32 16, %s38
        %v761 = vld [vmem:[%s740] sm:$0xff]
        %v762 = vld [vmem:[%s740 + $0x8] sm:$0xff]
        %v763 = vld [vmem:[%s740 + $0x10] sm:$0xff]
        %v764 = vld [vmem:[%s740 + $0x18] sm:$0xff]
        %v765 = vld [vmem:[%s740 + $0x20] sm:$0xff]
        %v766 = vld [vmem:[%s740 + $0x28] sm:$0xff]
        %v767 = vld [vmem:[%s740 + $0x30] sm:$0xff]
        %v768 = vld [vmem:[%s740 + $0x38] sm:$0xff]
        %v769 = vld [vmem:[%s740 + $0x40] sm:$0xff]
        %v770 = vld [vmem:[%s740 + $0x48] sm:$0xff]
        %v771 = vld [vmem:[%s740 + $0x50] sm:$0xff]
        %v772 = vld [vmem:[%s740 + $0x58] sm:$0xff]
        %v773 = vld [vmem:[%s740 + $0x60] sm:$0xff]
        %v774 = vld [vmem:[%s740 + $0x68] sm:$0xff]
        %v775 = vld [vmem:[%s740 + $0x70] sm:$0xff]
        %v776 = vld [vmem:[%s740 + $0x78] sm:$0xff]
        %v777 = vld [vmem:[%s2] sm:$0xff]
        %v778 = vld [vmem:[%s2 + $0x8] sm:$0xff]
        %v779 = vld [vmem:[%s2 + $0x10] sm:$0xff]
        %v780 = vld [vmem:[%s2 + $0x18] sm:$0xff]
        %v781 = vld [vmem:[%s2 + $0x20] sm:$0xff]
        %v782 = vld [vmem:[%s2 + $0x28] sm:$0xff]
        %v783 = vld [vmem:[%s2 + $0x30] sm:$0xff]
        %v784 = vld [vmem:[%s2 + $0x38] sm:$0xff]
        %v785 = vld [vmem:[%s3] sm:$0x1]
        %v787 = vlaneseq
        %v788 = vshrl.u32 %v787, 7
        %v789 = vsub.s32 0, %v788
        %v790 = vrot.slane %v785, %v789
        %vm792 = vcmask 523264
        %v794 = vsel %vm792, %v761, 0
        %v797 = vsel %vm792, %v762, 0
        %v800 = vsel %vm792, %v763, 0
        %v803 = vsel %vm792, %v764, 0
        %v806 = vsel %vm792, %v765, 0
        %v809 = vsel %vm792, %v766, 0
        %v812 = vsel %vm792, %v767, 0
        %v815 = vsel %vm792, %v768, 0
        %v818 = vsel %vm792, %v769, 0
        %v821 = vsel %vm792, %v770, 0
        %v824 = vsel %vm792, %v771, 0
        %v827 = vsel %vm792, %v772, 0
        %v830 = vsel %vm792, %v773, 0
        %v833 = vsel %vm792, %v774, 0
        %v836 = vsel %vm792, %v775, 0
        %v839 = vsel %vm792, %v776, 0
        %841 = vmatprep.subr.mxu0 0.0
        %842 = vmatpush1.msra.mxu0 0.0
        %843 = vmatprep.subr.mxu0 0.0
        %844 = vmatpush1.msra.mxu0 0.0
        %845 = vmatprep.subr.mxu0 0.0
        %846 = vmatpush1.msra.mxu0 0.0
        %847 = vmatprep.subr.mxu0 0.0
        %848 = vmatpush1.msra.mxu0 0.0
        %849 = vmatprep.subr.mxu0 0.0
        %850 = vmatpush1.msra.mxu0 0.0
        %851 = vmatprep.subr.mxu0 0.0
        %852 = vmatpush1.msra.mxu0 0.0
        %853 = vmatprep.subr.mxu0 0.0
        %854 = vmatpush1.msra.mxu0 0.0
        %855 = vmatprep.subr.mxu0 0.0
        %856 = vmatpush1.msra.mxu0 0.0
        %857 = vmatprep.subr.mxu0 0.0
        %858 = vmatpush1.msra.mxu0 %v784
        %859 = vmatprep.subr.mxu0 0.0
        %860 = vmatpush1.msra.mxu0 %v783
        %861 = vmatprep.subr.mxu0 0.0
        %862 = vmatpush1.msra.mxu0 %v782
        %863 = vmatprep.subr.mxu0 0.0
        %864 = vmatpush1.msra.mxu0 %v781
        %865 = vmatprep.subr.mxu0 0.0
        %866 = vmatpush1.msra.mxu0 %v780
        %867 = vmatprep.subr.mxu0 0.0
        %868 = vmatpush1.msra.mxu0 %v779
        %869 = vmatprep.subr.mxu0 0.0
        %870 = vmatpush1.msra.mxu0 %v778
        %871 = vmatprep.subr.mxu0 0.0
        %872 = vmatpush1.msra.mxu0 %v777
        %873 = vmatprep.subr.mxu0 0.0
        %874 = vmatpush2.msra.mxu0 0.0
        %875 = vmatprep.subr.mxu0 0.0
        %876 = vmatpush2.msra.mxu0 0.0
        %877 = vmatprep.subr.mxu0 0.0
        %878 = vmatpush2.msra.mxu0 0.0
        %879 = vmatprep.subr.mxu0 0.0
        %880 = vmatpush2.msra.mxu0 0.0
        %881 = vmatprep.subr.mxu0 0.0
        %882 = vmatpush2.msra.mxu0 0.0
        %883 = vmatprep.subr.mxu0 0.0
        %884 = vmatpush2.msra.mxu0 0.0
        %885 = vmatprep.subr.mxu0 0.0
        %886 = vmatpush2.msra.mxu0 0.0
        %887 = vmatprep.subr.mxu0 0.0
        %888 = vmatpush2.msra.mxu0 0.0
        %889 = vmatprep.subr.mxu0 0.0
        %890 = vmatpush2.msra.mxu0 0.0
        %891 = vmatprep.subr.mxu0 0.0
        %892 = vmatpush2.msra.mxu0 0.0
        %893 = vmatprep.subr.mxu0 0.0
        %894 = vmatpush2.msra.mxu0 0.0
        %895 = vmatprep.subr.mxu0 0.0
        %896 = vmatpush2.msra.mxu0 0.0
        %897 = vmatprep.subr.mxu0 0.0
        %898 = vmatpush2.msra.mxu0 0.0
        %899 = vmatprep.subr.mxu0 0.0
        %900 = vmatpush2.msra.mxu0 0.0
        %901 = vmatprep.subr.mxu0 0.0
        %902 = vmatpush2.msra.mxu0 0.0
        %903 = vmatprep.subr.mxu0 0.0
        %904 = vmatpush2.msra.mxu0 0.0
        %905 = vmatprep.mubr.f32.mxu0 0.0
        %906 = vmatmul.mubr.f32.gmra.mxu0 %v794
        %v907 = vpop.f32.mrf.mxu0
        %v908 = vadd.f32 %v790, %v907
        %v909 = vpop.f32.mrf.mxu0
        %910 = vmatprep.mubr.f32.mxu0 0.0
        %911 = vmatmul.mubr.f32.gmra.mxu0 %v797
        %v912 = vpop.f32.mrf.mxu0
        %v913 = vadd.f32 %v790, %v912
        %v914 = vpop.f32.mrf.mxu0
        %915 = vmatprep.mubr.f32.mxu0 0.0
        %916 = vmatmul.mubr.f32.gmra.mxu0 %v800
        %v917 = vpop.f32.mrf.mxu0
        %v918 = vadd.f32 %v790, %v917
        %v919 = vpop.f32.mrf.mxu0
        %920 = vmatprep.mubr.f32.mxu0 0.0
        %921 = vmatmul.mubr.f32.gmra.mxu0 %v803
        %v922 = vpop.f32.mrf.mxu0
        %v923 = vadd.f32 %v790, %v922
        %v924 = vpop.f32.mrf.mxu0
        %925 = vmatprep.mubr.f32.mxu0 0.0
        %926 = vmatmul.mubr.f32.gmra.mxu0 %v806
        %v927 = vpop.f32.mrf.mxu0
        %v928 = vadd.f32 %v790, %v927
        %v929 = vpop.f32.mrf.mxu0
        %930 = vmatprep.mubr.f32.mxu0 0.0
        %931 = vmatmul.mubr.f32.gmra.mxu0 %v809
        %v932 = vpop.f32.mrf.mxu0
        %v933 = vadd.f32 %v790, %v932
        %v934 = vpop.f32.mrf.mxu0
        %935 = vmatprep.mubr.f32.mxu0 0.0
        %936 = vmatmul.mubr.f32.gmra.mxu0 %v812
        %v937 = vpop.f32.mrf.mxu0
        %v938 = vadd.f32 %v790, %v937
        %v939 = vpop.f32.mrf.mxu0
        %940 = vmatprep.mubr.f32.mxu0 0.0
        %941 = vmatmul.mubr.f32.gmra.mxu0 %v815
        %v942 = vpop.f32.mrf.mxu0
        %v943 = vadd.f32 %v790, %v942
        %v944 = vpop.f32.mrf.mxu0
        %945 = vmatprep.mubr.f32.mxu0 0.0
        %946 = vmatmul.mubr.f32.gmra.mxu0 %v818
        %v947 = vpop.f32.mrf.mxu0
        %v948 = vadd.f32 %v790, %v947
        %v949 = vpop.f32.mrf.mxu0
        %950 = vmatprep.mubr.f32.mxu0 0.0
        %951 = vmatmul.mubr.f32.gmra.mxu0 %v821
        %v952 = vpop.f32.mrf.mxu0
        %v953 = vadd.f32 %v790, %v952
        %v954 = vpop.f32.mrf.mxu0
        %955 = vmatprep.mubr.f32.mxu0 0.0
        %956 = vmatmul.mubr.f32.gmra.mxu0 %v824
        %v957 = vpop.f32.mrf.mxu0
        %v958 = vadd.f32 %v790, %v957
        %v959 = vpop.f32.mrf.mxu0
        %960 = vmatprep.mubr.f32.mxu0 0.0
        %961 = vmatmul.mubr.f32.gmra.mxu0 %v827
        %v962 = vpop.f32.mrf.mxu0
        %v963 = vadd.f32 %v790, %v962
        %v964 = vpop.f32.mrf.mxu0
        %965 = vmatprep.mubr.f32.mxu0 0.0
        %966 = vmatmul.mubr.f32.gmra.mxu0 %v830
        %v967 = vpop.f32.mrf.mxu0
        %v968 = vadd.f32 %v790, %v967
        %v969 = vpop.f32.mrf.mxu0
        %970 = vmatprep.mubr.f32.mxu0 0.0
        %971 = vmatmul.mubr.f32.gmra.mxu0 %v833
        %v972 = vpop.f32.mrf.mxu0
        %v973 = vadd.f32 %v790, %v972
        %v974 = vpop.f32.mrf.mxu0
        %975 = vmatprep.mubr.f32.mxu0 0.0
        %976 = vmatmul.mubr.f32.gmra.mxu0 %v836
        %v977 = vpop.f32.mrf.mxu0
        %v978 = vadd.f32 %v790, %v977
        %v979 = vpop.f32.mrf.mxu0
        %980 = vmatprep.mubr.f32.mxu0 0.0
        %981 = vmatmul.mubr.f32.gmra.mxu0 %v839
        %v982 = vpop.f32.mrf.mxu0
        %v983 = vadd.f32 %v790, %v982
        %v984 = vpop.f32.mrf.mxu0
        %985 = vdwg.mxu0
        %v986 = vmax.f32 %v908, 0.0
        %v987 = vmax.f32 %v913, 0.0
        %v988 = vmax.f32 %v918, 0.0
        %v989 = vmax.f32 %v923, 0.0
        %v990 = vmax.f32 %v928, 0.0
        %v991 = vmax.f32 %v933, 0.0
        %v992 = vmax.f32 %v938, 0.0
        %v993 = vmax.f32 %v943, 0.0
        %v994 = vmax.f32 %v948, 0.0
        %v995 = vmax.f32 %v953, 0.0
        %v996 = vmax.f32 %v958, 0.0
        %v997 = vmax.f32 %v963, 0.0
        %v998 = vmax.f32 %v968, 0.0
        %v999 = vmax.f32 %v973, 0.0
        %v1000 = vmax.f32 %v978, 0.0
        %v1001 = vmax.f32 %v983, 0.0
        %v1002 = vld [vmem:[%s4] sm:$0xff]
        %v1003 = vld [vmem:[%s4 + $0x8] sm:$0xff]
        %v1004 = vld [vmem:[%s4 + $0x10] sm:$0xff]
        %v1005 = vld [vmem:[%s4 + $0x18] sm:$0xff]
        %v1006 = vld [vmem:[%s4 + $0x20] sm:$0xff]
        %v1007 = vld [vmem:[%s4 + $0x28] sm:$0xff]
        %v1008 = vld [vmem:[%s4 + $0x30] sm:$0xff]
        %v1009 = vld [vmem:[%s4 + $0x38] sm:$0xff]
        %v1010 = vld [vmem:[%s5] sm:$0x1]
        %v1012 = vlaneseq
        %v1013 = vshrl.u32 %v1012, 7
        %v1014 = vsub.s32 0, %v1013
        %v1015 = vrot.slane %v1010, %v1014
        %v1018 = vsel %vm792, %v986, 0
        %v1021 = vsel %vm792, %v987, 0
        %v1024 = vsel %vm792, %v988, 0
        %v1027 = vsel %vm792, %v989, 0
        %v1030 = vsel %vm792, %v990, 0
        %v1033 = vsel %vm792, %v991, 0
        %v1036 = vsel %vm792, %v992, 0
        %v1039 = vsel %vm792, %v993, 0
        %v1042 = vsel %vm792, %v994, 0
        %v1045 = vsel %vm792, %v995, 0
        %v1048 = vsel %vm792, %v996, 0
        %v1051 = vsel %vm792, %v997, 0
        %v1054 = vsel %vm792, %v998, 0
        %v1057 = vsel %vm792, %v999, 0
        %v1060 = vsel %vm792, %v1000, 0
        %v1063 = vsel %vm792, %v1001, 0
        %1065 = vmatprep.subr.mxu0 0.0
        %1066 = vmatpush1.msra.mxu0 0.0
        %1067 = vmatprep.subr.mxu0 0.0
        %1068 = vmatpush1.msra.mxu0 0.0
        %1069 = vmatprep.subr.mxu0 0.0
        %1070 = vmatpush1.msra.mxu0 0.0
        %1071 = vmatprep.subr.mxu0 0.0
        %1072 = vmatpush1.msra.mxu0 0.0
        %1073 = vmatprep.subr.mxu0 0.0
        %1074 = vmatpush1.msra.mxu0 0.0
        %1075 = vmatprep.subr.mxu0 0.0
        %1076 = vmatpush1.msra.mxu0 0.0
        %1077 = vmatprep.subr.mxu0 0.0
        %1078 = vmatpush1.msra.mxu0 0.0
        %1079 = vmatprep.subr.mxu0 0.0
        %1080 = vmatpush1.msra.mxu0 0.0
        %1081 = vmatprep.subr.mxu0 0.0
        %1082 = vmatpush1.msra.mxu0 %v1009
        %1083 = vmatprep.subr.mxu0 0.0
        %1084 = vmatpush1.msra.mxu0 %v1008
        %1085 = vmatprep.subr.mxu0 0.0
        %1086 = vmatpush1.msra.mxu0 %v1007
        %1087 = vmatprep.subr.mxu0 0.0
        %1088 = vmatpush1.msra.mxu0 %v1006
        %1089 = vmatprep.subr.mxu0 0.0
        %1090 = vmatpush1.msra.mxu0 %v1005
        %1091 = vmatprep.subr.mxu0 0.0
        %1092 = vmatpush1.msra.mxu0 %v1004
        %1093 = vmatprep.subr.mxu0 0.0
        %1094 = vmatpush1.msra.mxu0 %v1003
        %1095 = vmatprep.subr.mxu0 0.0
        %1096 = vmatpush1.msra.mxu0 %v1002
        %1097 = vmatprep.subr.mxu0 0.0
        %1098 = vmatpush2.msra.mxu0 0.0
        %1099 = vmatprep.subr.mxu0 0.0
        %1100 = vmatpush2.msra.mxu0 0.0
        %1101 = vmatprep.subr.mxu0 0.0
        %1102 = vmatpush2.msra.mxu0 0.0
        %1103 = vmatprep.subr.mxu0 0.0
        %1104 = vmatpush2.msra.mxu0 0.0
        %1105 = vmatprep.subr.mxu0 0.0
        %1106 = vmatpush2.msra.mxu0 0.0
        %1107 = vmatprep.subr.mxu0 0.0
        %1108 = vmatpush2.msra.mxu0 0.0
        %1109 = vmatprep.subr.mxu0 0.0
        %1110 = vmatpush2.msra.mxu0 0.0
        %1111 = vmatprep.subr.mxu0 0.0
        %1112 = vmatpush2.msra.mxu0 0.0
        %1113 = vmatprep.subr.mxu0 0.0
        %1114 = vmatpush2.msra.mxu0 0.0
        %1115 = vmatprep.subr.mxu0 0.0
        %1116 = vmatpush2.msra.mxu0 0.0
        %1117 = vmatprep.subr.mxu0 0.0
        %1118 = vmatpush2.msra.mxu0 0.0
        %1119 = vmatprep.subr.mxu0 0.0
        %1120 = vmatpush2.msra.mxu0 0.0
        %1121 = vmatprep.subr.mxu0 0.0
        %1122 = vmatpush2.msra.mxu0 0.0
        %1123 = vmatprep.subr.mxu0 0.0
        %1124 = vmatpush2.msra.mxu0 0.0
        %1125 = vmatprep.subr.mxu0 0.0
        %1126 = vmatpush2.msra.mxu0 0.0
        %1127 = vmatprep.subr.mxu0 0.0
        %1128 = vmatpush2.msra.mxu0 0.0
        %1129 = vmatprep.mubr.f32.mxu0 0.0
        %1130 = vmatmul.mubr.f32.gmra.mxu0 %v1018
        %v1131 = vpop.f32.mrf.mxu0
        %v1132 = vadd.f32 %v1015, %v1131
        %v1133 = vpop.f32.mrf.mxu0
        %1134 = vmatprep.mubr.f32.mxu0 0.0
        %1135 = vmatmul.mubr.f32.gmra.mxu0 %v1021
        %v1136 = vpop.f32.mrf.mxu0
        %v1137 = vadd.f32 %v1015, %v1136
        %v1138 = vpop.f32.mrf.mxu0
        %1139 = vmatprep.mubr.f32.mxu0 0.0
        %1140 = vmatmul.mubr.f32.gmra.mxu0 %v1024
        %v1141 = vpop.f32.mrf.mxu0
        %v1142 = vadd.f32 %v1015, %v1141
        %v1143 = vpop.f32.mrf.mxu0
        %1144 = vmatprep.mubr.f32.mxu0 0.0
        %1145 = vmatmul.mubr.f32.gmra.mxu0 %v1027
        %v1146 = vpop.f32.mrf.mxu0
        %v1147 = vadd.f32 %v1015, %v1146
        %v1148 = vpop.f32.mrf.mxu0
        %1149 = vmatprep.mubr.f32.mxu0 0.0
        %1150 = vmatmul.mubr.f32.gmra.mxu0 %v1030
        %v1151 = vpop.f32.mrf.mxu0
        %v1152 = vadd.f32 %v1015, %v1151
        %v1153 = vpop.f32.mrf.mxu0
        %1154 = vmatprep.mubr.f32.mxu0 0.0
        %1155 = vmatmul.mubr.f32.gmra.mxu0 %v1033
        %v1156 = vpop.f32.mrf.mxu0
        %v1157 = vadd.f32 %v1015, %v1156
        %v1158 = vpop.f32.mrf.mxu0
        %1159 = vmatprep.mubr.f32.mxu0 0.0
        %1160 = vmatmul.mubr.f32.gmra.mxu0 %v1036
        %v1161 = vpop.f32.mrf.mxu0
        %v1162 = vadd.f32 %v1015, %v1161
        %v1163 = vpop.f32.mrf.mxu0
        %1164 = vmatprep.mubr.f32.mxu0 0.0
        %1165 = vmatmul.mubr.f32.gmra.mxu0 %v1039
        %v1166 = vpop.f32.mrf.mxu0
        %v1167 = vadd.f32 %v1015, %v1166
        %v1168 = vpop.f32.mrf.mxu0
        %1169 = vmatprep.mubr.f32.mxu0 0.0
        %1170 = vmatmul.mubr.f32.gmra.mxu0 %v1042
        %v1171 = vpop.f32.mrf.mxu0
        %v1172 = vadd.f32 %v1015, %v1171
        %v1173 = vpop.f32.mrf.mxu0
        %1174 = vmatprep.mubr.f32.mxu0 0.0
        %1175 = vmatmul.mubr.f32.gmra.mxu0 %v1045
        %v1176 = vpop.f32.mrf.mxu0
        %v1177 = vadd.f32 %v1015, %v1176
        %v1178 = vpop.f32.mrf.mxu0
        %1179 = vmatprep.mubr.f32.mxu0 0.0
        %1180 = vmatmul.mubr.f32.gmra.mxu0 %v1048
        %v1181 = vpop.f32.mrf.mxu0
        %v1182 = vadd.f32 %v1015, %v1181
        %v1183 = vpop.f32.mrf.mxu0
        %1184 = vmatprep.mubr.f32.mxu0 0.0
        %1185 = vmatmul.mubr.f32.gmra.mxu0 %v1051
        %v1186 = vpop.f32.mrf.mxu0
        %v1187 = vadd.f32 %v1015, %v1186
        %v1188 = vpop.f32.mrf.mxu0
        %1189 = vmatprep.mubr.f32.mxu0 0.0
        %1190 = vmatmul.mubr.f32.gmra.mxu0 %v1054
        %v1191 = vpop.f32.mrf.mxu0
        %v1192 = vadd.f32 %v1015, %v1191
        %v1193 = vpop.f32.mrf.mxu0
        %1194 = vmatprep.mubr.f32.mxu0 0.0
        %1195 = vmatmul.mubr.f32.gmra.mxu0 %v1057
        %v1196 = vpop.f32.mrf.mxu0
        %v1197 = vadd.f32 %v1015, %v1196
        %v1198 = vpop.f32.mrf.mxu0
        %1199 = vmatprep.mubr.f32.mxu0 0.0
        %1200 = vmatmul.mubr.f32.gmra.mxu0 %v1060
        %v1201 = vpop.f32.mrf.mxu0
        %v1202 = vadd.f32 %v1015, %v1201
        %v1203 = vpop.f32.mrf.mxu0
        %1204 = vmatprep.mubr.f32.mxu0 0.0
        %1205 = vmatmul.mubr.f32.gmra.mxu0 %v1063
        %v1206 = vpop.f32.mrf.mxu0
        %v1207 = vadd.f32 %v1015, %v1206
        %v1208 = vpop.f32.mrf.mxu0
        %1209 = vdwg.mxu0
        %v1210 = vmax.f32 %v1132, 0.0
        %v1211 = vmax.f32 %v1137, 0.0
        %v1212 = vmax.f32 %v1142, 0.0
        %v1213 = vmax.f32 %v1147, 0.0
        %v1214 = vmax.f32 %v1152, 0.0
        %v1215 = vmax.f32 %v1157, 0.0
        %v1216 = vmax.f32 %v1162, 0.0
        %v1217 = vmax.f32 %v1167, 0.0
        %v1218 = vmax.f32 %v1172, 0.0
        %v1219 = vmax.f32 %v1177, 0.0
        %v1220 = vmax.f32 %v1182, 0.0
        %v1221 = vmax.f32 %v1187, 0.0
        %v1222 = vmax.f32 %v1192, 0.0
        %v1223 = vmax.f32 %v1197, 0.0
        %v1224 = vmax.f32 %v1202, 0.0
        %v1225 = vmax.f32 %v1207, 0.0
        %v1226 = vld [vmem:[%s6] sm:$0xff]
        %v1227 = vld [vmem:[%s6 + $0x8] sm:$0xff]
        %v1228 = vld [vmem:[%s6 + $0x10] sm:$0xff]
        %v1229 = vld [vmem:[%s6 + $0x18] sm:$0xff]
        %v1230 = vld [vmem:[%s6 + $0x20] sm:$0xff]
        %v1231 = vld [vmem:[%s6 + $0x28] sm:$0xff]
        %v1232 = vld [vmem:[%s6 + $0x30] sm:$0xff]
        %v1233 = vld [vmem:[%s6 + $0x38] sm:$0xff]
        %v1234 = vld [vmem:[%s7] sm:$0x1]
        %v1236 = vlaneseq
        %v1237 = vshrl.u32 %v1236, 7
        %v1238 = vsub.s32 0, %v1237
        %v1239 = vrot.slane %v1234, %v1238
        %v1242 = vsel %vm792, %v1210, 0
        %v1245 = vsel %vm792, %v1211, 0
        %v1248 = vsel %vm792, %v1212, 0
        %v1251 = vsel %vm792, %v1213, 0
        %v1254 = vsel %vm792, %v1214, 0
        %v1257 = vsel %vm792, %v1215, 0
        %v1260 = vsel %vm792, %v1216, 0
        %v1263 = vsel %vm792, %v1217, 0
        %v1266 = vsel %vm792, %v1218, 0
        %v1269 = vsel %vm792, %v1219, 0
        %v1272 = vsel %vm792, %v1220, 0
        %v1275 = vsel %vm792, %v1221, 0
        %v1278 = vsel %vm792, %v1222, 0
        %v1281 = vsel %vm792, %v1223, 0
        %v1284 = vsel %vm792, %v1224, 0
        %v1287 = vsel %vm792, %v1225, 0
        %1289 = vmatprep.subr.mxu0 0.0
        %1290 = vmatpush1.msra.mxu0 0.0
        %1291 = vmatprep.subr.mxu0 0.0
        %1292 = vmatpush1.msra.mxu0 0.0
        %1293 = vmatprep.subr.mxu0 0.0
        %1294 = vmatpush1.msra.mxu0 0.0
        %1295 = vmatprep.subr.mxu0 0.0
        %1296 = vmatpush1.msra.mxu0 0.0
        %1297 = vmatprep.subr.mxu0 0.0
        %1298 = vmatpush1.msra.mxu0 0.0
        %1299 = vmatprep.subr.mxu0 0.0
        %1300 = vmatpush1.msra.mxu0 0.0
        %1301 = vmatprep.subr.mxu0 0.0
        %1302 = vmatpush1.msra.mxu0 0.0
        %1303 = vmatprep.subr.mxu0 0.0
        %1304 = vmatpush1.msra.mxu0 0.0
        %1305 = vmatprep.subr.mxu0 0.0
        %1306 = vmatpush1.msra.mxu0 %v1233
        %1307 = vmatprep.subr.mxu0 0.0
        %1308 = vmatpush1.msra.mxu0 %v1232
        %1309 = vmatprep.subr.mxu0 0.0
        %1310 = vmatpush1.msra.mxu0 %v1231
        %1311 = vmatprep.subr.mxu0 0.0
        %1312 = vmatpush1.msra.mxu0 %v1230
        %1313 = vmatprep.subr.mxu0 0.0
        %1314 = vmatpush1.msra.mxu0 %v1229
        %1315 = vmatprep.subr.mxu0 0.0
        %1316 = vmatpush1.msra.mxu0 %v1228
        %1317 = vmatprep.subr.mxu0 0.0
        %1318 = vmatpush1.msra.mxu0 %v1227
        %1319 = vmatprep.subr.mxu0 0.0
        %1320 = vmatpush1.msra.mxu0 %v1226
        %1321 = vmatprep.subr.mxu0 0.0
        %1322 = vmatpush2.msra.mxu0 0.0
        %1323 = vmatprep.subr.mxu0 0.0
        %1324 = vmatpush2.msra.mxu0 0.0
        %1325 = vmatprep.subr.mxu0 0.0
        %1326 = vmatpush2.msra.mxu0 0.0
        %1327 = vmatprep.subr.mxu0 0.0
        %1328 = vmatpush2.msra.mxu0 0.0
        %1329 = vmatprep.subr.mxu0 0.0
        %1330 = vmatpush2.msra.mxu0 0.0
        %1331 = vmatprep.subr.mxu0 0.0
        %1332 = vmatpush2.msra.mxu0 0.0
        %1333 = vmatprep.subr.mxu0 0.0
        %1334 = vmatpush2.msra.mxu0 0.0
        %1335 = vmatprep.subr.mxu0 0.0
        %1336 = vmatpush2.msra.mxu0 0.0
        %1337 = vmatprep.subr.mxu0 0.0
        %1338 = vmatpush2.msra.mxu0 0.0
        %1339 = vmatprep.subr.mxu0 0.0
        %1340 = vmatpush2.msra.mxu0 0.0
        %1341 = vmatprep.subr.mxu0 0.0
        %1342 = vmatpush2.msra.mxu0 0.0
        %1343 = vmatprep.subr.mxu0 0.0
        %1344 = vmatpush2.msra.mxu0 0.0
        %1345 = vmatprep.subr.mxu0 0.0
        %1346 = vmatpush2.msra.mxu0 0.0
        %1347 = vmatprep.subr.mxu0 0.0
        %1348 = vmatpush2.msra.mxu0 0.0
        %1349 = vmatprep.subr.mxu0 0.0
        %1350 = vmatpush2.msra.mxu0 0.0
        %1351 = vmatprep.subr.mxu0 0.0
        %1352 = vmatpush2.msra.mxu0 0.0
        %1353 = vmatprep.mubr.f32.mxu0 0.0
        %1354 = vmatmul.mubr.f32.gmra.mxu0 %v1242
        %v1355 = vpop.f32.mrf.mxu0
        %v1356 = vadd.f32 %v1239, %v1355
        %v1357 = vpop.f32.mrf.mxu0
        %1358 = vmatprep.mubr.f32.mxu0 0.0
        %1359 = vmatmul.mubr.f32.gmra.mxu0 %v1245
        %v1360 = vpop.f32.mrf.mxu0
        %v1361 = vadd.f32 %v1239, %v1360
        %v1362 = vpop.f32.mrf.mxu0
        %1363 = vmatprep.mubr.f32.mxu0 0.0
        %1364 = vmatmul.mubr.f32.gmra.mxu0 %v1248
        %v1365 = vpop.f32.mrf.mxu0
        %v1366 = vadd.f32 %v1239, %v1365
        %v1367 = vpop.f32.mrf.mxu0
        %1368 = vmatprep.mubr.f32.mxu0 0.0
        %1369 = vmatmul.mubr.f32.gmra.mxu0 %v1251
        %v1370 = vpop.f32.mrf.mxu0
        %v1371 = vadd.f32 %v1239, %v1370
        %v1372 = vpop.f32.mrf.mxu0
        %1373 = vmatprep.mubr.f32.mxu0 0.0
        %1374 = vmatmul.mubr.f32.gmra.mxu0 %v1254
        %v1375 = vpop.f32.mrf.mxu0
        %v1376 = vadd.f32 %v1239, %v1375
        %v1377 = vpop.f32.mrf.mxu0
        %1378 = vmatprep.mubr.f32.mxu0 0.0
        %1379 = vmatmul.mubr.f32.gmra.mxu0 %v1257
        %v1380 = vpop.f32.mrf.mxu0
        %v1381 = vadd.f32 %v1239, %v1380
        %v1382 = vpop.f32.mrf.mxu0
        %1383 = vmatprep.mubr.f32.mxu0 0.0
        %1384 = vmatmul.mubr.f32.gmra.mxu0 %v1260
        %v1385 = vpop.f32.mrf.mxu0
        %v1386 = vadd.f32 %v1239, %v1385
        %v1387 = vpop.f32.mrf.mxu0
        %1388 = vmatprep.mubr.f32.mxu0 0.0
        %1389 = vmatmul.mubr.f32.gmra.mxu0 %v1263
        %v1390 = vpop.f32.mrf.mxu0
        %v1391 = vadd.f32 %v1239, %v1390
        %v1392 = vpop.f32.mrf.mxu0
        %1393 = vmatprep.mubr.f32.mxu0 0.0
        %1394 = vmatmul.mubr.f32.gmra.mxu0 %v1266
        %v1395 = vpop.f32.mrf.mxu0
        %v1396 = vadd.f32 %v1239, %v1395
        %v1397 = vpop.f32.mrf.mxu0
        %1398 = vmatprep.mubr.f32.mxu0 0.0
        %1399 = vmatmul.mubr.f32.gmra.mxu0 %v1269
        %v1400 = vpop.f32.mrf.mxu0
        %v1401 = vadd.f32 %v1239, %v1400
        %v1402 = vpop.f32.mrf.mxu0
        %1403 = vmatprep.mubr.f32.mxu0 0.0
        %1404 = vmatmul.mubr.f32.gmra.mxu0 %v1272
        %v1405 = vpop.f32.mrf.mxu0
        %v1406 = vadd.f32 %v1239, %v1405
        %v1407 = vpop.f32.mrf.mxu0
        %1408 = vmatprep.mubr.f32.mxu0 0.0
        %1409 = vmatmul.mubr.f32.gmra.mxu0 %v1275
        %v1410 = vpop.f32.mrf.mxu0
        %v1411 = vadd.f32 %v1239, %v1410
        %v1412 = vpop.f32.mrf.mxu0
        %1413 = vmatprep.mubr.f32.mxu0 0.0
        %1414 = vmatmul.mubr.f32.gmra.mxu0 %v1278
        %v1415 = vpop.f32.mrf.mxu0
        %v1416 = vadd.f32 %v1239, %v1415
        %v1417 = vpop.f32.mrf.mxu0
        %1418 = vmatprep.mubr.f32.mxu0 0.0
        %1419 = vmatmul.mubr.f32.gmra.mxu0 %v1281
        %v1420 = vpop.f32.mrf.mxu0
        %v1421 = vadd.f32 %v1239, %v1420
        %v1422 = vpop.f32.mrf.mxu0
        %1423 = vmatprep.mubr.f32.mxu0 0.0
        %1424 = vmatmul.mubr.f32.gmra.mxu0 %v1284
        %v1425 = vpop.f32.mrf.mxu0
        %v1426 = vadd.f32 %v1239, %v1425
        %v1427 = vpop.f32.mrf.mxu0
        %1428 = vmatprep.mubr.f32.mxu0 0.0
        %1429 = vmatmul.mubr.f32.gmra.mxu0 %v1287
        %v1430 = vpop.f32.mrf.mxu0
        %v1431 = vadd.f32 %v1239, %v1430
        %v1432 = vpop.f32.mrf.mxu0
        %1433 = vdwg.mxu0
        %v1434 = vmax.f32 %v1356, 0.0
        %v1435 = vmax.f32 %v1361, 0.0
        %v1436 = vmax.f32 %v1366, 0.0
        %v1437 = vmax.f32 %v1371, 0.0
        %v1438 = vmax.f32 %v1376, 0.0
        %v1439 = vmax.f32 %v1381, 0.0
        %v1440 = vmax.f32 %v1386, 0.0
        %v1441 = vmax.f32 %v1391, 0.0
        %v1442 = vmax.f32 %v1396, 0.0
        %v1443 = vmax.f32 %v1401, 0.0
        %v1444 = vmax.f32 %v1406, 0.0
        %v1445 = vmax.f32 %v1411, 0.0
        %v1446 = vmax.f32 %v1416, 0.0
        %v1447 = vmax.f32 %v1421, 0.0
        %v1448 = vmax.f32 %v1426, 0.0
        %v1449 = vmax.f32 %v1431, 0.0
        %v1450 = vld [vmem:[%s8] sm:$0xff]
        %v1451 = vld [vmem:[%s8 + $0x8] sm:$0xff]
        %v1452 = vld [vmem:[%s8 + $0x10] sm:$0xff]
        %v1453 = vld [vmem:[%s8 + $0x18] sm:$0xff]
        %v1454 = vld [vmem:[%s9] sm:$0x1]
        %v1456 = vlaneseq
        %v1457 = vshrl.u32 %v1456, 7
        %v1458 = vsub.s32 0, %v1457
        %v1459 = vrot.slane %v1454, %v1458
        %vm1461 = vcmask 261120
        %v1463 = vsel %vm1461, %v1434, 0
        %v1466 = vsel %vm1461, %v1435, 0
        %v1469 = vsel %vm1461, %v1436, 0
        %v1472 = vsel %vm1461, %v1437, 0
        %v1475 = vsel %vm1461, %v1438, 0
        %v1478 = vsel %vm1461, %v1439, 0
        %v1481 = vsel %vm1461, %v1440, 0
        %v1484 = vsel %vm1461, %v1441, 0
        %v1487 = vsel %vm1461, %v1442, 0
        %v1490 = vsel %vm1461, %v1443, 0
        %v1493 = vsel %vm1461, %v1444, 0
        %v1496 = vsel %vm1461, %v1445, 0
        %v1499 = vsel %vm1461, %v1446, 0
        %v1502 = vsel %vm1461, %v1447, 0
        %v1505 = vsel %vm1461, %v1448, 0
        %v1508 = vsel %vm1461, %v1449, 0
        %1510 = vmatprep.subr.mxu0 0.0
        %1511 = vmatpush1.msra.mxu0 0.0
        %1512 = vmatprep.subr.mxu0 0.0
        %1513 = vmatpush1.msra.mxu0 0.0
        %1514 = vmatprep.subr.mxu0 0.0
        %1515 = vmatpush1.msra.mxu0 0.0
        %1516 = vmatprep.subr.mxu0 0.0
        %1517 = vmatpush1.msra.mxu0 0.0
        %1518 = vmatprep.subr.mxu0 0.0
        %1519 = vmatpush1.msra.mxu0 0.0
        %1520 = vmatprep.subr.mxu0 0.0
        %1521 = vmatpush1.msra.mxu0 0.0
        %1522 = vmatprep.subr.mxu0 0.0
        %1523 = vmatpush1.msra.mxu0 0.0
        %1524 = vmatprep.subr.mxu0 0.0
        %1525 = vmatpush1.msra.mxu0 0.0
        %1526 = vmatprep.subr.mxu0 0.0
        %1527 = vmatpush1.msra.mxu0 0.0
        %1528 = vmatprep.subr.mxu0 0.0
        %1529 = vmatpush1.msra.mxu0 0.0
        %1530 = vmatprep.subr.mxu0 0.0
        %1531 = vmatpush1.msra.mxu0 0.0
        %1532 = vmatprep.subr.mxu0 0.0
        %1533 = vmatpush1.msra.mxu0 0.0
        %1534 = vmatprep.subr.mxu0 0.0
        %1535 = vmatpush1.msra.mxu0 %v1453
        %1536 = vmatprep.subr.mxu0 0.0
        %1537 = vmatpush1.msra.mxu0 %v1452
        %1538 = vmatprep.subr.mxu0 0.0
        %1539 = vmatpush1.msra.mxu0 %v1451
        %1540 = vmatprep.subr.mxu0 0.0
        %1541 = vmatpush1.msra.mxu0 %v1450
        %1542 = vmatprep.subr.mxu0 0.0
        %1543 = vmatpush2.msra.mxu0 0.0
        %1544 = vmatprep.subr.mxu0 0.0
        %1545 = vmatpush2.msra.mxu0 0.0
        %1546 = vmatprep.subr.mxu0 0.0
        %1547 = vmatpush2.msra.mxu0 0.0
        %1548 = vmatprep.subr.mxu0 0.0
        %1549 = vmatpush2.msra.mxu0 0.0
        %1550 = vmatprep.subr.mxu0 0.0
        %1551 = vmatpush2.msra.mxu0 0.0
        %1552 = vmatprep.subr.mxu0 0.0
        %1553 = vmatpush2.msra.mxu0 0.0
        %1554 = vmatprep.subr.mxu0 0.0
        %1555 = vmatpush2.msra.mxu0 0.0
        %1556 = vmatprep.subr.mxu0 0.0
        %1557 = vmatpush2.msra.mxu0 0.0
        %1558 = vmatprep.subr.mxu0 0.0
        %1559 = vmatpush2.msra.mxu0 0.0
        %1560 = vmatprep.subr.mxu0 0.0
        %1561 = vmatpush2.msra.mxu0 0.0
        %1562 = vmatprep.subr.mxu0 0.0
        %1563 = vmatpush2.msra.mxu0 0.0
        %1564 = vmatprep.subr.mxu0 0.0
        %1565 = vmatpush2.msra.mxu0 0.0
        %1566 = vmatprep.subr.mxu0 0.0
        %1567 = vmatpush2.msra.mxu0 0.0
        %1568 = vmatprep.subr.mxu0 0.0
        %1569 = vmatpush2.msra.mxu0 0.0
        %1570 = vmatprep.subr.mxu0 0.0
        %1571 = vmatpush2.msra.mxu0 0.0
        %1572 = vmatprep.subr.mxu0 0.0
        %1573 = vmatpush2.msra.mxu0 0.0
        %1574 = vmatprep.mubr.f32.mxu0 0.0
        %1575 = vmatmul.mubr.f32.gmra.mxu0 %v1463
        %v1576 = vpop.f32.mrf.mxu0
        %v1577 = vadd.f32 %v1459, %v1576
        %v1578 = vpop.f32.mrf.mxu0
        %1579 = vmatprep.mubr.f32.mxu0 0.0
        %1580 = vmatmul.mubr.f32.gmra.mxu0 %v1466
        %v1581 = vpop.f32.mrf.mxu0
        %v1582 = vadd.f32 %v1459, %v1581
        %v1583 = vpop.f32.mrf.mxu0
        %1584 = vmatprep.mubr.f32.mxu0 0.0
        %1585 = vmatmul.mubr.f32.gmra.mxu0 %v1469
        %v1586 = vpop.f32.mrf.mxu0
        %v1587 = vadd.f32 %v1459, %v1586
        %v1588 = vpop.f32.mrf.mxu0
        %1589 = vmatprep.mubr.f32.mxu0 0.0
        %1590 = vmatmul.mubr.f32.gmra.mxu0 %v1472
        %v1591 = vpop.f32.mrf.mxu0
        %v1592 = vadd.f32 %v1459, %v1591
        %v1593 = vpop.f32.mrf.mxu0
        %1594 = vmatprep.mubr.f32.mxu0 0.0
        %1595 = vmatmul.mubr.f32.gmra.mxu0 %v1475
        %v1596 = vpop.f32.mrf.mxu0
        %v1597 = vadd.f32 %v1459, %v1596
        %v1598 = vpop.f32.mrf.mxu0
        %1599 = vmatprep.mubr.f32.mxu0 0.0
        %1600 = vmatmul.mubr.f32.gmra.mxu0 %v1478
        %v1601 = vpop.f32.mrf.mxu0
        %v1602 = vadd.f32 %v1459, %v1601
        %v1603 = vpop.f32.mrf.mxu0
        %1604 = vmatprep.mubr.f32.mxu0 0.0
        %1605 = vmatmul.mubr.f32.gmra.mxu0 %v1481
        %v1606 = vpop.f32.mrf.mxu0
        %v1607 = vadd.f32 %v1459, %v1606
        %v1608 = vpop.f32.mrf.mxu0
        %1609 = vmatprep.mubr.f32.mxu0 0.0
        %1610 = vmatmul.mubr.f32.gmra.mxu0 %v1484
        %v1611 = vpop.f32.mrf.mxu0
        %v1612 = vadd.f32 %v1459, %v1611
        %v1613 = vpop.f32.mrf.mxu0
        %1614 = vmatprep.mubr.f32.mxu0 0.0
        %1615 = vmatmul.mubr.f32.gmra.mxu0 %v1487
        %v1616 = vpop.f32.mrf.mxu0
        %v1617 = vadd.f32 %v1459, %v1616
        %v1618 = vpop.f32.mrf.mxu0
        %1619 = vmatprep.mubr.f32.mxu0 0.0
        %1620 = vmatmul.mubr.f32.gmra.mxu0 %v1490
        %v1621 = vpop.f32.mrf.mxu0
        %v1622 = vadd.f32 %v1459, %v1621
        %v1623 = vpop.f32.mrf.mxu0
        %1624 = vmatprep.mubr.f32.mxu0 0.0
        %1625 = vmatmul.mubr.f32.gmra.mxu0 %v1493
        %v1626 = vpop.f32.mrf.mxu0
        %v1627 = vadd.f32 %v1459, %v1626
        %v1628 = vpop.f32.mrf.mxu0
        %1629 = vmatprep.mubr.f32.mxu0 0.0
        %1630 = vmatmul.mubr.f32.gmra.mxu0 %v1496
        %v1631 = vpop.f32.mrf.mxu0
        %v1632 = vadd.f32 %v1459, %v1631
        %v1633 = vpop.f32.mrf.mxu0
        %1634 = vmatprep.mubr.f32.mxu0 0.0
        %1635 = vmatmul.mubr.f32.gmra.mxu0 %v1499
        %v1636 = vpop.f32.mrf.mxu0
        %v1637 = vadd.f32 %v1459, %v1636
        %v1638 = vpop.f32.mrf.mxu0
        %1639 = vmatprep.mubr.f32.mxu0 0.0
        %1640 = vmatmul.mubr.f32.gmra.mxu0 %v1502
        %v1641 = vpop.f32.mrf.mxu0
        %v1642 = vadd.f32 %v1459, %v1641
        %v1643 = vpop.f32.mrf.mxu0
        %1644 = vmatprep.mubr.f32.mxu0 0.0
        %1645 = vmatmul.mubr.f32.gmra.mxu0 %v1505
        %v1646 = vpop.f32.mrf.mxu0
        %v1647 = vadd.f32 %v1459, %v1646
        %v1648 = vpop.f32.mrf.mxu0
        %1649 = vmatprep.mubr.f32.mxu0 0.0
        %1650 = vmatmul.mubr.f32.gmra.mxu0 %v1508
        %v1651 = vpop.f32.mrf.mxu0
        %v1652 = vadd.f32 %v1459, %v1651
        %v1653 = vpop.f32.mrf.mxu0
        %1654 = vdwg.mxu0
        %v1655 = vld [vmem:[%s746] sm:$0xff]
        %v1656 = vld [vmem:[%s746 + $0x8] sm:$0xff]
        %v1657 = vld [vmem:[%s746 + $0x10] sm:$0xff]
        %v1658 = vld [vmem:[%s746 + $0x18] sm:$0xff]
        %v1659 = vld [vmem:[%s746 + $0x20] sm:$0xff]
        %v1660 = vld [vmem:[%s746 + $0x28] sm:$0xff]
        %v1661 = vld [vmem:[%s746 + $0x30] sm:$0xff]
        %v1662 = vld [vmem:[%s746 + $0x38] sm:$0xff]
        %v1663 = vld [vmem:[%s746 + $0x40] sm:$0xff]
        %v1664 = vld [vmem:[%s746 + $0x48] sm:$0xff]
        %v1665 = vld [vmem:[%s746 + $0x50] sm:$0xff]
        %v1666 = vld [vmem:[%s746 + $0x58] sm:$0xff]
        %v1667 = vld [vmem:[%s746 + $0x60] sm:$0xff]
        %v1668 = vld [vmem:[%s746 + $0x68] sm:$0xff]
        %v1669 = vld [vmem:[%s746 + $0x70] sm:$0xff]
        %v1670 = vld [vmem:[%s746 + $0x78] sm:$0xff]
        %v1671 = vmul.f32 %v1577, 0.5
        %v1672 = vmul.f32 %v1582, 0.5
        %v1673 = vmul.f32 %v1587, 0.5
        %v1674 = vmul.f32 %v1592, 0.5
        %v1675 = vmul.f32 %v1597, 0.5
        %v1676 = vmul.f32 %v1602, 0.5
        %v1677 = vmul.f32 %v1607, 0.5
        %v1678 = vmul.f32 %v1612, 0.5
        %v1679 = vmul.f32 %v1617, 0.5
        %v1680 = vmul.f32 %v1622, 0.5
        %v1681 = vmul.f32 %v1627, 0.5
        %v1682 = vmul.f32 %v1632, 0.5
        %v1683 = vmul.f32 %v1637, 0.5
        %v1684 = vmul.f32 %v1642, 0.5
        %v1685 = vmul.f32 %v1647, 0.5
        %v1686 = vmul.f32 %v1652, 0.5
        %v1687 = vmul.f32 %v1671, 1.442695
        %v1688 = vpow.pop %v1687
        %v1689 = vmul.f32 %v1672, 1.442695
        %v1690 = vpow.pop %v1689
        %v1691 = vmul.f32 %v1673, 1.442695
        %v1692 = vpow.pop %v1691
        %v1693 = vmul.f32 %v1674, 1.442695
        %v1694 = vpow.pop %v1693
        %v1695 = vmul.f32 %v1675, 1.442695
        %v1696 = vpow.pop %v1695
        %v1697 = vmul.f32 %v1676, 1.442695
        %v1698 = vpow.pop %v1697
        %v1699 = vmul.f32 %v1677, 1.442695
        %v1700 = vpow.pop %v1699
        %v1701 = vmul.f32 %v1678, 1.442695
        %v1702 = vpow.pop %v1701
        %v1703 = vmul.f32 %v1679, 1.442695
        %v1704 = vpow.pop %v1703
        %v1705 = vmul.f32 %v1680, 1.442695
        %v1706 = vpow.pop %v1705
        %v1707 = vmul.f32 %v1681, 1.442695
        %v1708 = vpow.pop %v1707
        %v1709 = vmul.f32 %v1682, 1.442695
        %v1710 = vpow.pop %v1709
        %v1711 = vmul.f32 %v1683, 1.442695
        %v1712 = vpow.pop %v1711
        %v1713 = vmul.f32 %v1684, 1.442695
        %v1714 = vpow.pop %v1713
        %v1715 = vmul.f32 %v1685, 1.442695
        %v1716 = vpow.pop %v1715
        %v1717 = vmul.f32 %v1686, 1.442695
        %v1718 = vpow.pop %v1717
        %1735 = vrot.lane.b32.xlu0 %v1688, 112
        %v1736 = vpop.permute.xlu0 %1735
        %1737 = vrot.lane.b32.xlu0 %v1690, 112
        %v1738 = vpop.permute.xlu0 %1737
        %1739 = vrot.lane.b32.xlu0 %v1692, 112
        %v1740 = vpop.permute.xlu0 %1739
        %1741 = vrot.lane.b32.xlu0 %v1694, 112
        %v1742 = vpop.permute.xlu0 %1741
        %1743 = vrot.lane.b32.xlu0 %v1696, 112
        %v1744 = vpop.permute.xlu0 %1743
        %1745 = vrot.lane.b32.xlu0 %v1698, 112
        %v1746 = vpop.permute.xlu0 %1745
        %1747 = vrot.lane.b32.xlu0 %v1700, 112
        %v1748 = vpop.permute.xlu0 %1747
        %1749 = vrot.lane.b32.xlu0 %v1702, 112
        %v1750 = vpop.permute.xlu0 %1749
        %1751 = vrot.lane.b32.xlu0 %v1704, 112
        %v1752 = vpop.permute.xlu0 %1751
        %1753 = vrot.lane.b32.xlu0 %v1706, 112
        %v1754 = vpop.permute.xlu0 %1753
        %1755 = vrot.lane.b32.xlu0 %v1708, 112
        %v1756 = vpop.permute.xlu0 %1755
        %1757 = vrot.lane.b32.xlu0 %v1710, 112
        %v1758 = vpop.permute.xlu0 %1757
        %1759 = vrot.lane.b32.xlu0 %v1712, 112
        %v1760 = vpop.permute.xlu0 %1759
        %1761 = vrot.lane.b32.xlu0 %v1714, 112
        %v1762 = vpop.permute.xlu0 %1761
        %1763 = vrot.lane.b32.xlu0 %v1716, 112
        %v1764 = vpop.permute.xlu0 %1763
        %1765 = vrot.lane.b32.xlu0 %v1718, 112
        %v1766 = vpop.permute.xlu0 %1765
        %v1783 = vmul.f32 %v1655, %v1736
        %v1784 = vmul.f32 %v1656, %v1738
        %v1785 = vmul.f32 %v1657, %v1740
        %v1786 = vmul.f32 %v1658, %v1742
        %v1787 = vmul.f32 %v1659, %v1744
        %v1788 = vmul.f32 %v1660, %v1746
        %v1789 = vmul.f32 %v1661, %v1748
        %v1790 = vmul.f32 %v1662, %v1750
        %v1791 = vmul.f32 %v1663, %v1752
        %v1792 = vmul.f32 %v1664, %v1754
        %v1793 = vmul.f32 %v1665, %v1756
        %v1794 = vmul.f32 %v1666, %v1758
        %v1795 = vmul.f32 %v1667, %v1760
        %v1796 = vmul.f32 %v1668, %v1762
        %v1797 = vmul.f32 %v1669, %v1764
        %v1798 = vmul.f32 %v1670, %v1766
        %v1799 = vadd.f32 %v1577, %v1783
        %v1800 = vadd.f32 %v1582, %v1784
        %v1801 = vadd.f32 %v1587, %v1785
        %v1802 = vadd.f32 %v1592, %v1786
        %v1803 = vadd.f32 %v1597, %v1787
        %v1804 = vadd.f32 %v1602, %v1788
        %v1805 = vadd.f32 %v1607, %v1789
        %v1806 = vadd.f32 %v1612, %v1790
        %v1807 = vadd.f32 %v1617, %v1791
        %v1808 = vadd.f32 %v1622, %v1792
        %v1809 = vadd.f32 %v1627, %v1793
        %v1810 = vadd.f32 %v1632, %v1794
        %v1811 = vadd.f32 %v1637, %v1795
        %v1812 = vadd.f32 %v1642, %v1796
        %v1813 = vadd.f32 %v1647, %v1797
        %v1814 = vadd.f32 %v1652, %v1798
        %v1815 = vld [vmem:[%s10] sm:$0xff]
        %v1816 = vld [vmem:[%s10 + $0x8] sm:$0xff]
        %v1817 = vld [vmem:[%s11] sm:$0x1]
        %v1819 = vlaneseq
        %v1820 = vshrl.u32 %v1819, 7
        %v1821 = vsub.s32 0, %v1820
        %v1822 = vrot.slane %v1817, %v1821
        %vm1824 = vcmask 130048
        %v1826 = vsel %vm1824, %v1799, 0
        %v1829 = vsel %vm1824, %v1800, 0
        %v1832 = vsel %vm1824, %v1801, 0
        %v1835 = vsel %vm1824, %v1802, 0
        %v1838 = vsel %vm1824, %v1803, 0
        %v1841 = vsel %vm1824, %v1804, 0
        %v1844 = vsel %vm1824, %v1805, 0
        %v1847 = vsel %vm1824, %v1806, 0
        %v1850 = vsel %vm1824, %v1807, 0
        %v1853 = vsel %vm1824, %v1808, 0
        %v1856 = vsel %vm1824, %v1809, 0
        %v1859 = vsel %vm1824, %v1810, 0
        %v1862 = vsel %vm1824, %v1811, 0
        %v1865 = vsel %vm1824, %v1812, 0
        %v1868 = vsel %vm1824, %v1813, 0
        %v1871 = vsel %vm1824, %v1814, 0
        %1873 = vmatprep.subr.mxu0 0.0
        %1874 = vmatpush1.msra.mxu0 0.0
        %1875 = vmatprep.subr.mxu0 0.0
        %1876 = vmatpush1.msra.mxu0 0.0
        %1877 = vmatprep.subr.mxu0 0.0
        %1878 = vmatpush1.msra.mxu0 0.0
        %1879 = vmatprep.subr.mxu0 0.0
        %1880 = vmatpush1.msra.mxu0 0.0
        %1881 = vmatprep.subr.mxu0 0.0
        %1882 = vmatpush1.msra.mxu0 0.0
        %1883 = vmatprep.subr.mxu0 0.0
        %1884 = vmatpush1.msra.mxu0 0.0
        %1885 = vmatprep.subr.mxu0 0.0
        %1886 = vmatpush1.msra.mxu0 0.0
        %1887 = vmatprep.subr.mxu0 0.0
        %1888 = vmatpush1.msra.mxu0 0.0
        %1889 = vmatprep.subr.mxu0 0.0
        %1890 = vmatpush1.msra.mxu0 0.0
        %1891 = vmatprep.subr.mxu0 0.0
        %1892 = vmatpush1.msra.mxu0 0.0
        %1893 = vmatprep.subr.mxu0 0.0
        %1894 = vmatpush1.msra.mxu0 0.0
        %1895 = vmatprep.subr.mxu0 0.0
        %1896 = vmatpush1.msra.mxu0 0.0
        %1897 = vmatprep.subr.mxu0 0.0
        %1898 = vmatpush1.msra.mxu0 0.0
        %1899 = vmatprep.subr.mxu0 0.0
        %1900 = vmatpush1.msra.mxu0 0.0
        %1901 = vmatprep.subr.mxu0 0.0
        %1902 = vmatpush1.msra.mxu0 %v1816
        %1903 = vmatprep.subr.mxu0 0.0
        %1904 = vmatpush1.msra.mxu0 %v1815
        %1905 = vmatprep.subr.mxu0 0.0
        %1906 = vmatpush2.msra.mxu0 0.0
        %1907 = vmatprep.subr.mxu0 0.0
        %1908 = vmatpush2.msra.mxu0 0.0
        %1909 = vmatprep.subr.mxu0 0.0
        %1910 = vmatpush2.msra.mxu0 0.0
        %1911 = vmatprep.subr.mxu0 0.0
        %1912 = vmatpush2.msra.mxu0 0.0
        %1913 = vmatprep.subr.mxu0 0.0
        %1914 = vmatpush2.msra.mxu0 0.0
        %1915 = vmatprep.subr.mxu0 0.0
        %1916 = vmatpush2.msra.mxu0 0.0
        %1917 = vmatprep.subr.mxu0 0.0
        %1918 = vmatpush2.msra.mxu0 0.0
        %1919 = vmatprep.subr.mxu0 0.0
        %1920 = vmatpush2.msra.mxu0 0.0
        %1921 = vmatprep.subr.mxu0 0.0
        %1922 = vmatpush2.msra.mxu0 0.0
        %1923 = vmatprep.subr.mxu0 0.0
        %1924 = vmatpush2.msra.mxu0 0.0
        %1925 = vmatprep.subr.mxu0 0.0
        %1926 = vmatpush2.msra.mxu0 0.0
        %1927 = vmatprep.subr.mxu0 0.0
        %1928 = vmatpush2.msra.mxu0 0.0
        %1929 = vmatprep.subr.mxu0 0.0
        %1930 = vmatpush2.msra.mxu0 0.0
        %1931 = vmatprep.subr.mxu0 0.0
        %1932 = vmatpush2.msra.mxu0 0.0
        %1933 = vmatprep.subr.mxu0 0.0
        %1934 = vmatpush2.msra.mxu0 0.0
        %1935 = vmatprep.subr.mxu0 0.0
        %1936 = vmatpush2.msra.mxu0 0.0
        %1937 = vmatprep.mubr.f32.mxu0 0.0
        %1938 = vmatmul.mubr.f32.gmra.mxu0 %v1826
        %v1939 = vpop.f32.mrf.mxu0
        %v1940 = vadd.f32 %v1822, %v1939
        %v1941 = vpop.f32.mrf.mxu0
        %1942 = vmatprep.mubr.f32.mxu0 0.0
        %1943 = vmatmul.mubr.f32.gmra.mxu0 %v1829
        %v1944 = vpop.f32.mrf.mxu0
        %v1945 = vadd.f32 %v1822, %v1944
        %v1946 = vpop.f32.mrf.mxu0
        %1947 = vmatprep.mubr.f32.mxu0 0.0
        %1948 = vmatmul.mubr.f32.gmra.mxu0 %v1832
        %v1949 = vpop.f32.mrf.mxu0
        %v1950 = vadd.f32 %v1822, %v1949
        %v1951 = vpop.f32.mrf.mxu0
        %1952 = vmatprep.mubr.f32.mxu0 0.0
        %1953 = vmatmul.mubr.f32.gmra.mxu0 %v1835
        %v1954 = vpop.f32.mrf.mxu0
        %v1955 = vadd.f32 %v1822, %v1954
        %v1956 = vpop.f32.mrf.mxu0
        %1957 = vmatprep.mubr.f32.mxu0 0.0
        %1958 = vmatmul.mubr.f32.gmra.mxu0 %v1838
        %v1959 = vpop.f32.mrf.mxu0
        %v1960 = vadd.f32 %v1822, %v1959
        %v1961 = vpop.f32.mrf.mxu0
        %1962 = vmatprep.mubr.f32.mxu0 0.0
        %1963 = vmatmul.mubr.f32.gmra.mxu0 %v1841
        %v1964 = vpop.f32.mrf.mxu0
        %v1965 = vadd.f32 %v1822, %v1964
        %v1966 = vpop.f32.mrf.mxu0
        %1967 = vmatprep.mubr.f32.mxu0 0.0
        %1968 = vmatmul.mubr.f32.gmra.mxu0 %v1844
        %v1969 = vpop.f32.mrf.mxu0
        %v1970 = vadd.f32 %v1822, %v1969
        %v1971 = vpop.f32.mrf.mxu0
        %1972 = vmatprep.mubr.f32.mxu0 0.0
        %1973 = vmatmul.mubr.f32.gmra.mxu0 %v1847
        %v1974 = vpop.f32.mrf.mxu0
        %v1975 = vadd.f32 %v1822, %v1974
        %v1976 = vpop.f32.mrf.mxu0
        %1977 = vmatprep.mubr.f32.mxu0 0.0
        %1978 = vmatmul.mubr.f32.gmra.mxu0 %v1850
        %v1979 = vpop.f32.mrf.mxu0
        %v1980 = vadd.f32 %v1822, %v1979
        %v1981 = vpop.f32.mrf.mxu0
        %1982 = vmatprep.mubr.f32.mxu0 0.0
        %1983 = vmatmul.mubr.f32.gmra.mxu0 %v1853
        %v1984 = vpop.f32.mrf.mxu0
        %v1985 = vadd.f32 %v1822, %v1984
        %v1986 = vpop.f32.mrf.mxu0
        %1987 = vmatprep.mubr.f32.mxu0 0.0
        %1988 = vmatmul.mubr.f32.gmra.mxu0 %v1856
        %v1989 = vpop.f32.mrf.mxu0
        %v1990 = vadd.f32 %v1822, %v1989
        %v1991 = vpop.f32.mrf.mxu0
        %1992 = vmatprep.mubr.f32.mxu0 0.0
        %1993 = vmatmul.mubr.f32.gmra.mxu0 %v1859
        %v1994 = vpop.f32.mrf.mxu0
        %v1995 = vadd.f32 %v1822, %v1994
        %v1996 = vpop.f32.mrf.mxu0
        %1997 = vmatprep.mubr.f32.mxu0 0.0
        %1998 = vmatmul.mubr.f32.gmra.mxu0 %v1862
        %v1999 = vpop.f32.mrf.mxu0
        %v2000 = vadd.f32 %v1822, %v1999
        %v2001 = vpop.f32.mrf.mxu0
        %2002 = vmatprep.mubr.f32.mxu0 0.0
        %2003 = vmatmul.mubr.f32.gmra.mxu0 %v1865
        %v2004 = vpop.f32.mrf.mxu0
        %v2005 = vadd.f32 %v1822, %v2004
        %v2006 = vpop.f32.mrf.mxu0
        %2007 = vmatprep.mubr.f32.mxu0 0.0
        %2008 = vmatmul.mubr.f32.gmra.mxu0 %v1868
        %v2009 = vpop.f32.mrf.mxu0
        %v2010 = vadd.f32 %v1822, %v2009
        %v2011 = vpop.f32.mrf.mxu0
        %2012 = vmatprep.mubr.f32.mxu0 0.0
        %2013 = vmatmul.mubr.f32.gmra.mxu0 %v1871
        %v2014 = vpop.f32.mrf.mxu0
        %v2015 = vadd.f32 %v1822, %v2014
        %v2016 = vpop.f32.mrf.mxu0
        %2017 = vdwg.mxu0
        %v2018 = vmax.f32 %v1940, 0.0
        %v2019 = vmax.f32 %v1945, 0.0
        %v2020 = vmax.f32 %v1950, 0.0
        %v2021 = vmax.f32 %v1955, 0.0
        %v2022 = vmax.f32 %v1960, 0.0
        %v2023 = vmax.f32 %v1965, 0.0
        %v2024 = vmax.f32 %v1970, 0.0
        %v2025 = vmax.f32 %v1975, 0.0
        %v2026 = vmax.f32 %v1980, 0.0
        %v2027 = vmax.f32 %v1985, 0.0
        %v2028 = vmax.f32 %v1990, 0.0
        %v2029 = vmax.f32 %v1995, 0.0
        %v2030 = vmax.f32 %v2000, 0.0
        %v2031 = vmax.f32 %v2005, 0.0
        %v2032 = vmax.f32 %v2010, 0.0
        %v2033 = vmax.f32 %v2015, 0.0
        %v2034 = vld [vmem:[%s12] sm:$0xff]
        %v2035 = vld [vmem:[%s12 + $0x8] sm:$0xff]
        %v2036 = vld [vmem:[%s12 + $0x10] sm:$0xff]
        %v2037 = vld [vmem:[%s12 + $0x18] sm:$0xff]
        %v2038 = vld [vmem:[%s13] sm:$0x1]
        %v2040 = vlaneseq
        %v2041 = vshrl.u32 %v2040, 7
        %v2042 = vsub.s32 0, %v2041
        %v2043 = vrot.slane %v2038, %v2042
        %v2046 = vsel %vm1461, %v2018, 0
        %v2049 = vsel %vm1461, %v2019, 0
        %v2052 = vsel %vm1461, %v2020, 0
        %v2055 = vsel %vm1461, %v2021, 0
        %v2058 = vsel %vm1461, %v2022, 0
        %v2061 = vsel %vm1461, %v2023, 0
        %v2064 = vsel %vm1461, %v2024, 0
        %v2067 = vsel %vm1461, %v2025, 0
        %v2070 = vsel %vm1461, %v2026, 0
        %v2073 = vsel %vm1461, %v2027, 0
        %v2076 = vsel %vm1461, %v2028, 0
        %v2079 = vsel %vm1461, %v2029, 0
        %v2082 = vsel %vm1461, %v2030, 0
        %v2085 = vsel %vm1461, %v2031, 0
        %v2088 = vsel %vm1461, %v2032, 0
        %v2091 = vsel %vm1461, %v2033, 0
        %2093 = vmatprep.subr.mxu0 0.0
        %2094 = vmatpush1.msra.mxu0 0.0
        %2095 = vmatprep.subr.mxu0 0.0
        %2096 = vmatpush1.msra.mxu0 0.0
        %2097 = vmatprep.subr.mxu0 0.0
        %2098 = vmatpush1.msra.mxu0 0.0
        %2099 = vmatprep.subr.mxu0 0.0
        %2100 = vmatpush1.msra.mxu0 0.0
        %2101 = vmatprep.subr.mxu0 0.0
        %2102 = vmatpush1.msra.mxu0 0.0
        %2103 = vmatprep.subr.mxu0 0.0
        %2104 = vmatpush1.msra.mxu0 0.0
        %2105 = vmatprep.subr.mxu0 0.0
        %2106 = vmatpush1.msra.mxu0 0.0
        %2107 = vmatprep.subr.mxu0 0.0
        %2108 = vmatpush1.msra.mxu0 0.0
        %2109 = vmatprep.subr.mxu0 0.0
        %2110 = vmatpush1.msra.mxu0 0.0
        %2111 = vmatprep.subr.mxu0 0.0
        %2112 = vmatpush1.msra.mxu0 0.0
        %2113 = vmatprep.subr.mxu0 0.0
        %2114 = vmatpush1.msra.mxu0 0.0
        %2115 = vmatprep.subr.mxu0 0.0
        %2116 = vmatpush1.msra.mxu0 0.0
        %2117 = vmatprep.subr.mxu0 0.0
        %2118 = vmatpush1.msra.mxu0 %v2037
        %2119 = vmatprep.subr.mxu0 0.0
        %2120 = vmatpush1.msra.mxu0 %v2036
        %2121 = vmatprep.subr.mxu0 0.0
        %2122 = vmatpush1.msra.mxu0 %v2035
        %2123 = vmatprep.subr.mxu0 0.0
        %2124 = vmatpush1.msra.mxu0 %v2034
        %2125 = vmatprep.subr.mxu0 0.0
        %2126 = vmatpush2.msra.mxu0 0.0
        %2127 = vmatprep.subr.mxu0 0.0
        %2128 = vmatpush2.msra.mxu0 0.0
        %2129 = vmatprep.subr.mxu0 0.0
        %2130 = vmatpush2.msra.mxu0 0.0
        %2131 = vmatprep.subr.mxu0 0.0
        %2132 = vmatpush2.msra.mxu0 0.0
        %2133 = vmatprep.subr.mxu0 0.0
        %2134 = vmatpush2.msra.mxu0 0.0
        %2135 = vmatprep.subr.mxu0 0.0
        %2136 = vmatpush2.msra.mxu0 0.0
        %2137 = vmatprep.subr.mxu0 0.0
        %2138 = vmatpush2.msra.mxu0 0.0
        %2139 = vmatprep.subr.mxu0 0.0
        %2140 = vmatpush2.msra.mxu0 0.0
        %2141 = vmatprep.subr.mxu0 0.0
        %2142 = vmatpush2.msra.mxu0 0.0
        %2143 = vmatprep.subr.mxu0 0.0
        %2144 = vmatpush2.msra.mxu0 0.0
        %2145 = vmatprep.subr.mxu0 0.0
        %2146 = vmatpush2.msra.mxu0 0.0
        %2147 = vmatprep.subr.mxu0 0.0
        %2148 = vmatpush2.msra.mxu0 0.0
        %2149 = vmatprep.subr.mxu0 0.0
        %2150 = vmatpush2.msra.mxu0 0.0
        %2151 = vmatprep.subr.mxu0 0.0
        %2152 = vmatpush2.msra.mxu0 0.0
        %2153 = vmatprep.subr.mxu0 0.0
        %2154 = vmatpush2.msra.mxu0 0.0
        %2155 = vmatprep.subr.mxu0 0.0
        %2156 = vmatpush2.msra.mxu0 0.0
        %2157 = vmatprep.mubr.f32.mxu0 0.0
        %2158 = vmatmul.mubr.f32.gmra.mxu0 %v2046
        %v2159 = vpop.f32.mrf.mxu0
        %v2160 = vadd.f32 %v2043, %v2159
        %v2161 = vpop.f32.mrf.mxu0
        %2162 = vmatprep.mubr.f32.mxu0 0.0
        %2163 = vmatmul.mubr.f32.gmra.mxu0 %v2049
        %v2164 = vpop.f32.mrf.mxu0
        %v2165 = vadd.f32 %v2043, %v2164
        %v2166 = vpop.f32.mrf.mxu0
        %2167 = vmatprep.mubr.f32.mxu0 0.0
        %2168 = vmatmul.mubr.f32.gmra.mxu0 %v2052
        %v2169 = vpop.f32.mrf.mxu0
        %v2170 = vadd.f32 %v2043, %v2169
        %v2171 = vpop.f32.mrf.mxu0
        %2172 = vmatprep.mubr.f32.mxu0 0.0
        %2173 = vmatmul.mubr.f32.gmra.mxu0 %v2055
        %v2174 = vpop.f32.mrf.mxu0
        %v2175 = vadd.f32 %v2043, %v2174
        %v2176 = vpop.f32.mrf.mxu0
        %2177 = vmatprep.mubr.f32.mxu0 0.0
        %2178 = vmatmul.mubr.f32.gmra.mxu0 %v2058
        %v2179 = vpop.f32.mrf.mxu0
        %v2180 = vadd.f32 %v2043, %v2179
        %v2181 = vpop.f32.mrf.mxu0
        %2182 = vmatprep.mubr.f32.mxu0 0.0
        %2183 = vmatmul.mubr.f32.gmra.mxu0 %v2061
        %v2184 = vpop.f32.mrf.mxu0
        %v2185 = vadd.f32 %v2043, %v2184
        %v2186 = vpop.f32.mrf.mxu0
        %2187 = vmatprep.mubr.f32.mxu0 0.0
        %2188 = vmatmul.mubr.f32.gmra.mxu0 %v2064
        %v2189 = vpop.f32.mrf.mxu0
        %v2190 = vadd.f32 %v2043, %v2189
        %v2191 = vpop.f32.mrf.mxu0
        %2192 = vmatprep.mubr.f32.mxu0 0.0
        %2193 = vmatmul.mubr.f32.gmra.mxu0 %v2067
        %v2194 = vpop.f32.mrf.mxu0
        %v2195 = vadd.f32 %v2043, %v2194
        %v2196 = vpop.f32.mrf.mxu0
        %2197 = vmatprep.mubr.f32.mxu0 0.0
        %2198 = vmatmul.mubr.f32.gmra.mxu0 %v2070
        %v2199 = vpop.f32.mrf.mxu0
        %v2200 = vadd.f32 %v2043, %v2199
        %v2201 = vpop.f32.mrf.mxu0
        %2202 = vmatprep.mubr.f32.mxu0 0.0
        %2203 = vmatmul.mubr.f32.gmra.mxu0 %v2073
        %v2204 = vpop.f32.mrf.mxu0
        %v2205 = vadd.f32 %v2043, %v2204
        %v2206 = vpop.f32.mrf.mxu0
        %2207 = vmatprep.mubr.f32.mxu0 0.0
        %2208 = vmatmul.mubr.f32.gmra.mxu0 %v2076
        %v2209 = vpop.f32.mrf.mxu0
        %v2210 = vadd.f32 %v2043, %v2209
        %v2211 = vpop.f32.mrf.mxu0
        %2212 = vmatprep.mubr.f32.mxu0 0.0
        %2213 = vmatmul.mubr.f32.gmra.mxu0 %v2079
        %v2214 = vpop.f32.mrf.mxu0
        %v2215 = vadd.f32 %v2043, %v2214
        %v2216 = vpop.f32.mrf.mxu0
        %2217 = vmatprep.mubr.f32.mxu0 0.0
        %2218 = vmatmul.mubr.f32.gmra.mxu0 %v2082
        %v2219 = vpop.f32.mrf.mxu0
        %v2220 = vadd.f32 %v2043, %v2219
        %v2221 = vpop.f32.mrf.mxu0
        %2222 = vmatprep.mubr.f32.mxu0 0.0
        %2223 = vmatmul.mubr.f32.gmra.mxu0 %v2085
        %v2224 = vpop.f32.mrf.mxu0
        %v2225 = vadd.f32 %v2043, %v2224
        %v2226 = vpop.f32.mrf.mxu0
        %2227 = vmatprep.mubr.f32.mxu0 0.0
        %2228 = vmatmul.mubr.f32.gmra.mxu0 %v2088
        %v2229 = vpop.f32.mrf.mxu0
        %v2230 = vadd.f32 %v2043, %v2229
        %v2231 = vpop.f32.mrf.mxu0
        %2232 = vmatprep.mubr.f32.mxu0 0.0
        %2233 = vmatmul.mubr.f32.gmra.mxu0 %v2091
        %v2234 = vpop.f32.mrf.mxu0
        %v2235 = vadd.f32 %v2043, %v2234
        %v2236 = vpop.f32.mrf.mxu0
        %2237 = vdwg.mxu0
        %v2238 = vmax.f32 %v2160, 0.0
        %v2239 = vmax.f32 %v2165, 0.0
        %v2240 = vmax.f32 %v2170, 0.0
        %v2241 = vmax.f32 %v2175, 0.0
        %v2242 = vmax.f32 %v2180, 0.0
        %v2243 = vmax.f32 %v2185, 0.0
        %v2244 = vmax.f32 %v2190, 0.0
        %v2245 = vmax.f32 %v2195, 0.0
        %v2246 = vmax.f32 %v2200, 0.0
        %v2247 = vmax.f32 %v2205, 0.0
        %v2248 = vmax.f32 %v2210, 0.0
        %v2249 = vmax.f32 %v2215, 0.0
        %v2250 = vmax.f32 %v2220, 0.0
        %v2251 = vmax.f32 %v2225, 0.0
        %v2252 = vmax.f32 %v2230, 0.0
        %v2253 = vmax.f32 %v2235, 0.0
        %v2254 = vld [vmem:[%s14] sm:$0xff]
        %v2255 = vld [vmem:[%s14 + $0x8] sm:$0xff]
        %v2256 = vld [vmem:[%s14 + $0x10] sm:$0xff]
        %v2257 = vld [vmem:[%s14 + $0x18] sm:$0xff]
        %v2258 = vld [vmem:[%s14 + $0x20] sm:$0xff]
        %v2259 = vld [vmem:[%s14 + $0x28] sm:$0xff]
        %v2260 = vld [vmem:[%s14 + $0x30] sm:$0xff]
        %v2261 = vld [vmem:[%s14 + $0x38] sm:$0xff]
        %v2262 = vld [vmem:[%s15] sm:$0x1]
        %v2264 = vlaneseq
        %v2265 = vshrl.u32 %v2264, 7
        %v2266 = vsub.s32 0, %v2265
        %v2267 = vrot.slane %v2262, %v2266
        %v2270 = vsel %vm792, %v2238, 0
        %v2273 = vsel %vm792, %v2239, 0
        %v2276 = vsel %vm792, %v2240, 0
        %v2279 = vsel %vm792, %v2241, 0
        %v2282 = vsel %vm792, %v2242, 0
        %v2285 = vsel %vm792, %v2243, 0
        %v2288 = vsel %vm792, %v2244, 0
        %v2291 = vsel %vm792, %v2245, 0
        %v2294 = vsel %vm792, %v2246, 0
        %v2297 = vsel %vm792, %v2247, 0
        %v2300 = vsel %vm792, %v2248, 0
        %v2303 = vsel %vm792, %v2249, 0
        %v2306 = vsel %vm792, %v2250, 0
        %v2309 = vsel %vm792, %v2251, 0
        %v2312 = vsel %vm792, %v2252, 0
        %v2315 = vsel %vm792, %v2253, 0
        %2317 = vmatprep.subr.mxu0 0.0
        %2318 = vmatpush1.msra.mxu0 0.0
        %2319 = vmatprep.subr.mxu0 0.0
        %2320 = vmatpush1.msra.mxu0 0.0
        %2321 = vmatprep.subr.mxu0 0.0
        %2322 = vmatpush1.msra.mxu0 0.0
        %2323 = vmatprep.subr.mxu0 0.0
        %2324 = vmatpush1.msra.mxu0 0.0
        %2325 = vmatprep.subr.mxu0 0.0
        %2326 = vmatpush1.msra.mxu0 0.0
        %2327 = vmatprep.subr.mxu0 0.0
        %2328 = vmatpush1.msra.mxu0 0.0
        %2329 = vmatprep.subr.mxu0 0.0
        %2330 = vmatpush1.msra.mxu0 0.0
        %2331 = vmatprep.subr.mxu0 0.0
        %2332 = vmatpush1.msra.mxu0 0.0
        %2333 = vmatprep.subr.mxu0 0.0
        %2334 = vmatpush1.msra.mxu0 %v2261
        %2335 = vmatprep.subr.mxu0 0.0
        %2336 = vmatpush1.msra.mxu0 %v2260
        %2337 = vmatprep.subr.mxu0 0.0
        %2338 = vmatpush1.msra.mxu0 %v2259
        %2339 = vmatprep.subr.mxu0 0.0
        %2340 = vmatpush1.msra.mxu0 %v2258
        %2341 = vmatprep.subr.mxu0 0.0
        %2342 = vmatpush1.msra.mxu0 %v2257
        %2343 = vmatprep.subr.mxu0 0.0
        %2344 = vmatpush1.msra.mxu0 %v2256
        %2345 = vmatprep.subr.mxu0 0.0
        %2346 = vmatpush1.msra.mxu0 %v2255
        %2347 = vmatprep.subr.mxu0 0.0
        %2348 = vmatpush1.msra.mxu0 %v2254
        %2349 = vmatprep.subr.mxu0 0.0
        %2350 = vmatpush2.msra.mxu0 0.0
        %2351 = vmatprep.subr.mxu0 0.0
        %2352 = vmatpush2.msra.mxu0 0.0
        %2353 = vmatprep.subr.mxu0 0.0
        %2354 = vmatpush2.msra.mxu0 0.0
        %2355 = vmatprep.subr.mxu0 0.0
        %2356 = vmatpush2.msra.mxu0 0.0
        %2357 = vmatprep.subr.mxu0 0.0
        %2358 = vmatpush2.msra.mxu0 0.0
        %2359 = vmatprep.subr.mxu0 0.0
        %2360 = vmatpush2.msra.mxu0 0.0
        %2361 = vmatprep.subr.mxu0 0.0
        %2362 = vmatpush2.msra.mxu0 0.0
        %2363 = vmatprep.subr.mxu0 0.0
        %2364 = vmatpush2.msra.mxu0 0.0
        %2365 = vmatprep.subr.mxu0 0.0
        %2366 = vmatpush2.msra.mxu0 0.0
        %2367 = vmatprep.subr.mxu0 0.0
        %2368 = vmatpush2.msra.mxu0 0.0
        %2369 = vmatprep.subr.mxu0 0.0
        %2370 = vmatpush2.msra.mxu0 0.0
        %2371 = vmatprep.subr.mxu0 0.0
        %2372 = vmatpush2.msra.mxu0 0.0
        %2373 = vmatprep.subr.mxu0 0.0
        %2374 = vmatpush2.msra.mxu0 0.0
        %2375 = vmatprep.subr.mxu0 0.0
        %2376 = vmatpush2.msra.mxu0 0.0
        %2377 = vmatprep.subr.mxu0 0.0
        %2378 = vmatpush2.msra.mxu0 0.0
        %2379 = vmatprep.subr.mxu0 0.0
        %2380 = vmatpush2.msra.mxu0 0.0
        %2381 = vmatprep.mubr.f32.mxu0 0.0
        %2382 = vmatmul.mubr.f32.gmra.mxu0 %v2270
        %v2383 = vpop.f32.mrf.mxu0
        %v2384 = vadd.f32 %v2267, %v2383
        %v2385 = vpop.f32.mrf.mxu0
        %2386 = vmatprep.mubr.f32.mxu0 0.0
        %2387 = vmatmul.mubr.f32.gmra.mxu0 %v2273
        %v2388 = vpop.f32.mrf.mxu0
        %v2389 = vadd.f32 %v2267, %v2388
        %v2390 = vpop.f32.mrf.mxu0
        %2391 = vmatprep.mubr.f32.mxu0 0.0
        %2392 = vmatmul.mubr.f32.gmra.mxu0 %v2276
        %v2393 = vpop.f32.mrf.mxu0
        %v2394 = vadd.f32 %v2267, %v2393
        %v2395 = vpop.f32.mrf.mxu0
        %2396 = vmatprep.mubr.f32.mxu0 0.0
        %2397 = vmatmul.mubr.f32.gmra.mxu0 %v2279
        %v2398 = vpop.f32.mrf.mxu0
        %v2399 = vadd.f32 %v2267, %v2398
        %v2400 = vpop.f32.mrf.mxu0
        %2401 = vmatprep.mubr.f32.mxu0 0.0
        %2402 = vmatmul.mubr.f32.gmra.mxu0 %v2282
        %v2403 = vpop.f32.mrf.mxu0
        %v2404 = vadd.f32 %v2267, %v2403
        %v2405 = vpop.f32.mrf.mxu0
        %2406 = vmatprep.mubr.f32.mxu0 0.0
        %2407 = vmatmul.mubr.f32.gmra.mxu0 %v2285
        %v2408 = vpop.f32.mrf.mxu0
        %v2409 = vadd.f32 %v2267, %v2408
        %v2410 = vpop.f32.mrf.mxu0
        %2411 = vmatprep.mubr.f32.mxu0 0.0
        %2412 = vmatmul.mubr.f32.gmra.mxu0 %v2288
        %v2413 = vpop.f32.mrf.mxu0
        %v2414 = vadd.f32 %v2267, %v2413
        %v2415 = vpop.f32.mrf.mxu0
        %2416 = vmatprep.mubr.f32.mxu0 0.0
        %2417 = vmatmul.mubr.f32.gmra.mxu0 %v2291
        %v2418 = vpop.f32.mrf.mxu0
        %v2419 = vadd.f32 %v2267, %v2418
        %v2420 = vpop.f32.mrf.mxu0
        %2421 = vmatprep.mubr.f32.mxu0 0.0
        %2422 = vmatmul.mubr.f32.gmra.mxu0 %v2294
        %v2423 = vpop.f32.mrf.mxu0
        %v2424 = vadd.f32 %v2267, %v2423
        %v2425 = vpop.f32.mrf.mxu0
        %2426 = vmatprep.mubr.f32.mxu0 0.0
        %2427 = vmatmul.mubr.f32.gmra.mxu0 %v2297
        %v2428 = vpop.f32.mrf.mxu0
        %v2429 = vadd.f32 %v2267, %v2428
        %v2430 = vpop.f32.mrf.mxu0
        %2431 = vmatprep.mubr.f32.mxu0 0.0
        %2432 = vmatmul.mubr.f32.gmra.mxu0 %v2300
        %v2433 = vpop.f32.mrf.mxu0
        %v2434 = vadd.f32 %v2267, %v2433
        %v2435 = vpop.f32.mrf.mxu0
        %2436 = vmatprep.mubr.f32.mxu0 0.0
        %2437 = vmatmul.mubr.f32.gmra.mxu0 %v2303
        %v2438 = vpop.f32.mrf.mxu0
        %v2439 = vadd.f32 %v2267, %v2438
        %v2440 = vpop.f32.mrf.mxu0
        %2441 = vmatprep.mubr.f32.mxu0 0.0
        %2442 = vmatmul.mubr.f32.gmra.mxu0 %v2306
        %v2443 = vpop.f32.mrf.mxu0
        %v2444 = vadd.f32 %v2267, %v2443
        %v2445 = vpop.f32.mrf.mxu0
        %2446 = vmatprep.mubr.f32.mxu0 0.0
        %2447 = vmatmul.mubr.f32.gmra.mxu0 %v2309
        %v2448 = vpop.f32.mrf.mxu0
        %v2449 = vadd.f32 %v2267, %v2448
        %v2450 = vpop.f32.mrf.mxu0
        %2451 = vmatprep.mubr.f32.mxu0 0.0
        %2452 = vmatmul.mubr.f32.gmra.mxu0 %v2312
        %v2453 = vpop.f32.mrf.mxu0
        %v2454 = vadd.f32 %v2267, %v2453
        %v2455 = vpop.f32.mrf.mxu0
        %2456 = vmatprep.mubr.f32.mxu0 0.0
        %2457 = vmatmul.mubr.f32.gmra.mxu0 %v2315
        %v2458 = vpop.f32.mrf.mxu0
        %v2459 = vadd.f32 %v2267, %v2458
        %v2460 = vpop.f32.mrf.mxu0
        %2461 = vdwg.mxu0
        %v2462 = vmax.f32 %v2384, 0.0
        %v2463 = vmax.f32 %v2389, 0.0
        %v2464 = vmax.f32 %v2394, 0.0
        %v2465 = vmax.f32 %v2399, 0.0
        %v2466 = vmax.f32 %v2404, 0.0
        %v2467 = vmax.f32 %v2409, 0.0
        %v2468 = vmax.f32 %v2414, 0.0
        %v2469 = vmax.f32 %v2419, 0.0
        %v2470 = vmax.f32 %v2424, 0.0
        %v2471 = vmax.f32 %v2429, 0.0
        %v2472 = vmax.f32 %v2434, 0.0
        %v2473 = vmax.f32 %v2439, 0.0
        %v2474 = vmax.f32 %v2444, 0.0
        %v2475 = vmax.f32 %v2449, 0.0
        %v2476 = vmax.f32 %v2454, 0.0
        %v2477 = vmax.f32 %v2459, 0.0
        %v2478 = vld [vmem:[%s16] sm:$0xff]
        %v2479 = vld [vmem:[%s16 + $0x8] sm:$0xff]
        %v2480 = vld [vmem:[%s16 + $0x10] sm:$0xff]
        %v2481 = vld [vmem:[%s16 + $0x18] sm:$0xff]
        %v2482 = vld [vmem:[%s16 + $0x20] sm:$0xff]
        %v2483 = vld [vmem:[%s16 + $0x28] sm:$0xff]
        %v2484 = vld [vmem:[%s16 + $0x30] sm:$0xff]
        %v2485 = vld [vmem:[%s16 + $0x38] sm:$0xff]
        %v2486 = vld [vmem:[%s17] sm:$0x1]
        %v2488 = vlaneseq
        %v2489 = vshrl.u32 %v2488, 7
        %v2490 = vsub.s32 0, %v2489
        %v2491 = vrot.slane %v2486, %v2490
        %v2494 = vsel %vm792, %v2462, 0
        %v2497 = vsel %vm792, %v2463, 0
        %v2500 = vsel %vm792, %v2464, 0
        %v2503 = vsel %vm792, %v2465, 0
        %v2506 = vsel %vm792, %v2466, 0
        %v2509 = vsel %vm792, %v2467, 0
        %v2512 = vsel %vm792, %v2468, 0
        %v2515 = vsel %vm792, %v2469, 0
        %v2518 = vsel %vm792, %v2470, 0
        %v2521 = vsel %vm792, %v2471, 0
        %v2524 = vsel %vm792, %v2472, 0
        %v2527 = vsel %vm792, %v2473, 0
        %v2530 = vsel %vm792, %v2474, 0
        %v2533 = vsel %vm792, %v2475, 0
        %v2536 = vsel %vm792, %v2476, 0
        %v2539 = vsel %vm792, %v2477, 0
        %2541 = vmatprep.subr.mxu0 0.0
        %2542 = vmatpush1.msra.mxu0 0.0
        %2543 = vmatprep.subr.mxu0 0.0
        %2544 = vmatpush1.msra.mxu0 0.0
        %2545 = vmatprep.subr.mxu0 0.0
        %2546 = vmatpush1.msra.mxu0 0.0
        %2547 = vmatprep.subr.mxu0 0.0
        %2548 = vmatpush1.msra.mxu0 0.0
        %2549 = vmatprep.subr.mxu0 0.0
        %2550 = vmatpush1.msra.mxu0 0.0
        %2551 = vmatprep.subr.mxu0 0.0
        %2552 = vmatpush1.msra.mxu0 0.0
        %2553 = vmatprep.subr.mxu0 0.0
        %2554 = vmatpush1.msra.mxu0 0.0
        %2555 = vmatprep.subr.mxu0 0.0
        %2556 = vmatpush1.msra.mxu0 0.0
        %2557 = vmatprep.subr.mxu0 0.0
        %2558 = vmatpush1.msra.mxu0 %v2485
        %2559 = vmatprep.subr.mxu0 0.0
        %2560 = vmatpush1.msra.mxu0 %v2484
        %2561 = vmatprep.subr.mxu0 0.0
        %2562 = vmatpush1.msra.mxu0 %v2483
        %2563 = vmatprep.subr.mxu0 0.0
        %2564 = vmatpush1.msra.mxu0 %v2482
        %2565 = vmatprep.subr.mxu0 0.0
        %2566 = vmatpush1.msra.mxu0 %v2481
        %2567 = vmatprep.subr.mxu0 0.0
        %2568 = vmatpush1.msra.mxu0 %v2480
        %2569 = vmatprep.subr.mxu0 0.0
        %2570 = vmatpush1.msra.mxu0 %v2479
        %2571 = vmatprep.subr.mxu0 0.0
        %2572 = vmatpush1.msra.mxu0 %v2478
        %2573 = vmatprep.subr.mxu0 0.0
        %2574 = vmatpush2.msra.mxu0 0.0
        %2575 = vmatprep.subr.mxu0 0.0
        %2576 = vmatpush2.msra.mxu0 0.0
        %2577 = vmatprep.subr.mxu0 0.0
        %2578 = vmatpush2.msra.mxu0 0.0
        %2579 = vmatprep.subr.mxu0 0.0
        %2580 = vmatpush2.msra.mxu0 0.0
        %2581 = vmatprep.subr.mxu0 0.0
        %2582 = vmatpush2.msra.mxu0 0.0
        %2583 = vmatprep.subr.mxu0 0.0
        %2584 = vmatpush2.msra.mxu0 0.0
        %2585 = vmatprep.subr.mxu0 0.0
        %2586 = vmatpush2.msra.mxu0 0.0
        %2587 = vmatprep.subr.mxu0 0.0
        %2588 = vmatpush2.msra.mxu0 0.0
        %2589 = vmatprep.subr.mxu0 0.0
        %2590 = vmatpush2.msra.mxu0 0.0
        %2591 = vmatprep.subr.mxu0 0.0
        %2592 = vmatpush2.msra.mxu0 0.0
        %2593 = vmatprep.subr.mxu0 0.0
        %2594 = vmatpush2.msra.mxu0 0.0
        %2595 = vmatprep.subr.mxu0 0.0
        %2596 = vmatpush2.msra.mxu0 0.0
        %2597 = vmatprep.subr.mxu0 0.0
        %2598 = vmatpush2.msra.mxu0 0.0
        %2599 = vmatprep.subr.mxu0 0.0
        %2600 = vmatpush2.msra.mxu0 0.0
        %2601 = vmatprep.subr.mxu0 0.0
        %2602 = vmatpush2.msra.mxu0 0.0
        %2603 = vmatprep.subr.mxu0 0.0
        %2604 = vmatpush2.msra.mxu0 0.0
        %2605 = vmatprep.mubr.f32.mxu0 0.0
        %2606 = vmatmul.mubr.f32.gmra.mxu0 %v2494
        %v2607 = vpop.f32.mrf.mxu0
        %v2608 = vadd.f32 %v2491, %v2607
        %v2609 = vpop.f32.mrf.mxu0
        %2610 = vmatprep.mubr.f32.mxu0 0.0
        %2611 = vmatmul.mubr.f32.gmra.mxu0 %v2497
        %v2612 = vpop.f32.mrf.mxu0
        %v2613 = vadd.f32 %v2491, %v2612
        %v2614 = vpop.f32.mrf.mxu0
        %2615 = vmatprep.mubr.f32.mxu0 0.0
        %2616 = vmatmul.mubr.f32.gmra.mxu0 %v2500
        %v2617 = vpop.f32.mrf.mxu0
        %v2618 = vadd.f32 %v2491, %v2617
        %v2619 = vpop.f32.mrf.mxu0
        %2620 = vmatprep.mubr.f32.mxu0 0.0
        %2621 = vmatmul.mubr.f32.gmra.mxu0 %v2503
        %v2622 = vpop.f32.mrf.mxu0
        %v2623 = vadd.f32 %v2491, %v2622
        %v2624 = vpop.f32.mrf.mxu0
        %2625 = vmatprep.mubr.f32.mxu0 0.0
        %2626 = vmatmul.mubr.f32.gmra.mxu0 %v2506
        %v2627 = vpop.f32.mrf.mxu0
        %v2628 = vadd.f32 %v2491, %v2627
        %v2629 = vpop.f32.mrf.mxu0
        %2630 = vmatprep.mubr.f32.mxu0 0.0
        %2631 = vmatmul.mubr.f32.gmra.mxu0 %v2509
        %v2632 = vpop.f32.mrf.mxu0
        %v2633 = vadd.f32 %v2491, %v2632
        %v2634 = vpop.f32.mrf.mxu0
        %2635 = vmatprep.mubr.f32.mxu0 0.0
        %2636 = vmatmul.mubr.f32.gmra.mxu0 %v2512
        %v2637 = vpop.f32.mrf.mxu0
        %v2638 = vadd.f32 %v2491, %v2637
        %v2639 = vpop.f32.mrf.mxu0
        %2640 = vmatprep.mubr.f32.mxu0 0.0
        %2641 = vmatmul.mubr.f32.gmra.mxu0 %v2515
        %v2642 = vpop.f32.mrf.mxu0
        %v2643 = vadd.f32 %v2491, %v2642
        %v2644 = vpop.f32.mrf.mxu0
        %2645 = vmatprep.mubr.f32.mxu0 0.0
        %2646 = vmatmul.mubr.f32.gmra.mxu0 %v2518
        %v2647 = vpop.f32.mrf.mxu0
        %v2648 = vadd.f32 %v2491, %v2647
        %v2649 = vpop.f32.mrf.mxu0
        %2650 = vmatprep.mubr.f32.mxu0 0.0
        %2651 = vmatmul.mubr.f32.gmra.mxu0 %v2521
        %v2652 = vpop.f32.mrf.mxu0
        %v2653 = vadd.f32 %v2491, %v2652
        %v2654 = vpop.f32.mrf.mxu0
        %2655 = vmatprep.mubr.f32.mxu0 0.0
        %2656 = vmatmul.mubr.f32.gmra.mxu0 %v2524
        %v2657 = vpop.f32.mrf.mxu0
        %v2658 = vadd.f32 %v2491, %v2657
        %v2659 = vpop.f32.mrf.mxu0
        %2660 = vmatprep.mubr.f32.mxu0 0.0
        %2661 = vmatmul.mubr.f32.gmra.mxu0 %v2527
        %v2662 = vpop.f32.mrf.mxu0
        %v2663 = vadd.f32 %v2491, %v2662
        %v2664 = vpop.f32.mrf.mxu0
        %2665 = vmatprep.mubr.f32.mxu0 0.0
        %2666 = vmatmul.mubr.f32.gmra.mxu0 %v2530
        %v2667 = vpop.f32.mrf.mxu0
        %v2668 = vadd.f32 %v2491, %v2667
        %v2669 = vpop.f32.mrf.mxu0
        %2670 = vmatprep.mubr.f32.mxu0 0.0
        %2671 = vmatmul.mubr.f32.gmra.mxu0 %v2533
        %v2672 = vpop.f32.mrf.mxu0
        %v2673 = vadd.f32 %v2491, %v2672
        %v2674 = vpop.f32.mrf.mxu0
        %2675 = vmatprep.mubr.f32.mxu0 0.0
        %2676 = vmatmul.mubr.f32.gmra.mxu0 %v2536
        %v2677 = vpop.f32.mrf.mxu0
        %v2678 = vadd.f32 %v2491, %v2677
        %v2679 = vpop.f32.mrf.mxu0
        %2680 = vmatprep.mubr.f32.mxu0 0.0
        %2681 = vmatmul.mubr.f32.gmra.mxu0 %v2539
        %v2682 = vpop.f32.mrf.mxu0
        %v2683 = vadd.f32 %v2491, %v2682
        %v2684 = vpop.f32.mrf.mxu0
        %2685 = vdwg.mxu0
        %v2686 = vld [vmem:[%s18] sm:$0xff]
        %v2687 = vld [vmem:[%s19] sm:$0x1]
        %v2689 = vlaneseq
        %v2690 = vshrl.u32 %v2689, 7
        %v2691 = vsub.s32 0, %v2690
        %v2692 = vrot.slane %v2687, %v2691
        %2694 = vrot.lane.b32.xlu0 %v2018, 96
        %v2695 = vpop.permute.xlu0 %2694
        %2696 = vrot.lane.b32.xlu0 %v2019, 96
        %v2697 = vpop.permute.xlu0 %2696
        %2698 = vrot.lane.b32.xlu0 %v2020, 96
        %v2699 = vpop.permute.xlu0 %2698
        %2700 = vrot.lane.b32.xlu0 %v2021, 96
        %v2701 = vpop.permute.xlu0 %2700
        %2702 = vrot.lane.b32.xlu0 %v2022, 96
        %v2703 = vpop.permute.xlu0 %2702
        %2704 = vrot.lane.b32.xlu0 %v2023, 96
        %v2705 = vpop.permute.xlu0 %2704
        %2706 = vrot.lane.b32.xlu0 %v2024, 96
        %v2707 = vpop.permute.xlu0 %2706
        %2708 = vrot.lane.b32.xlu0 %v2025, 96
        %v2709 = vpop.permute.xlu0 %2708
        %2710 = vrot.lane.b32.xlu0 %v2026, 96
        %v2711 = vpop.permute.xlu0 %2710
        %2712 = vrot.lane.b32.xlu0 %v2027, 96
        %v2713 = vpop.permute.xlu0 %2712
        %2714 = vrot.lane.b32.xlu0 %v2028, 96
        %v2715 = vpop.permute.xlu0 %2714
        %2716 = vrot.lane.b32.xlu0 %v2029, 96
        %v2717 = vpop.permute.xlu0 %2716
        %2718 = vrot.lane.b32.xlu0 %v2030, 96
        %v2719 = vpop.permute.xlu0 %2718
        %2720 = vrot.lane.b32.xlu0 %v2031, 96
        %v2721 = vpop.permute.xlu0 %2720
        %2722 = vrot.lane.b32.xlu0 %v2032, 96
        %v2723 = vpop.permute.xlu0 %2722
        %2724 = vrot.lane.b32.xlu0 %v2033, 96
        %v2725 = vpop.permute.xlu0 %2724
        %vm2726 = vcmask 64512
        %v2727 = vsel %vm2726, %v2695, 0
        %v2729 = vsel %vm2726, %v2697, 0
        %v2731 = vsel %vm2726, %v2699, 0
        %v2733 = vsel %vm2726, %v2701, 0
        %v2735 = vsel %vm2726, %v2703, 0
        %v2737 = vsel %vm2726, %v2705, 0
        %v2739 = vsel %vm2726, %v2707, 0
        %v2741 = vsel %vm2726, %v2709, 0
        %v2743 = vsel %vm2726, %v2711, 0
        %v2745 = vsel %vm2726, %v2713, 0
        %v2747 = vsel %vm2726, %v2715, 0
        %v2749 = vsel %vm2726, %v2717, 0
        %v2751 = vsel %vm2726, %v2719, 0
        %v2753 = vsel %vm2726, %v2721, 0
        %v2755 = vsel %vm2726, %v2723, 0
        %v2757 = vsel %vm2726, %v2725, 0
        %2759 = vmatprep.subr.mxu0 0.0
        %2760 = vmatpush1.msra.mxu0 0.0
        %2761 = vmatprep.subr.mxu0 0.0
        %2762 = vmatpush1.msra.mxu0 0.0
        %2763 = vmatprep.subr.mxu0 0.0
        %2764 = vmatpush1.msra.mxu0 0.0
        %2765 = vmatprep.subr.mxu0 0.0
        %2766 = vmatpush1.msra.mxu0 0.0
        %2767 = vmatprep.subr.mxu0 0.0
        %2768 = vmatpush1.msra.mxu0 0.0
        %2769 = vmatprep.subr.mxu0 0.0
        %2770 = vmatpush1.msra.mxu0 0.0
        %2771 = vmatprep.subr.mxu0 0.0
        %2772 = vmatpush1.msra.mxu0 0.0
        %2773 = vmatprep.subr.mxu0 0.0
        %2774 = vmatpush1.msra.mxu0 0.0
        %2775 = vmatprep.subr.mxu0 0.0
        %2776 = vmatpush1.msra.mxu0 0.0
        %2777 = vmatprep.subr.mxu0 0.0
        %2778 = vmatpush1.msra.mxu0 0.0
        %2779 = vmatprep.subr.mxu0 0.0
        %2780 = vmatpush1.msra.mxu0 0.0
        %2781 = vmatprep.subr.mxu0 0.0
        %2782 = vmatpush1.msra.mxu0 0.0
        %2783 = vmatprep.subr.mxu0 0.0
        %2784 = vmatpush1.msra.mxu0 0.0
        %2785 = vmatprep.subr.mxu0 0.0
        %2786 = vmatpush1.msra.mxu0 0.0
        %2787 = vmatprep.subr.mxu0 0.0
        %2788 = vmatpush1.msra.mxu0 0.0
        %2789 = vmatprep.subr.mxu0 0.0
        %2790 = vmatpush1.msra.mxu0 %v2686
        %2791 = vmatprep.subr.mxu0 0.0
        %2792 = vmatpush2.msra.mxu0 0.0
        %2793 = vmatprep.subr.mxu0 0.0
        %2794 = vmatpush2.msra.mxu0 0.0
        %2795 = vmatprep.subr.mxu0 0.0
        %2796 = vmatpush2.msra.mxu0 0.0
        %2797 = vmatprep.subr.mxu0 0.0
        %2798 = vmatpush2.msra.mxu0 0.0
        %2799 = vmatprep.subr.mxu0 0.0
        %2800 = vmatpush2.msra.mxu0 0.0
        %2801 = vmatprep.subr.mxu0 0.0
        %2802 = vmatpush2.msra.mxu0 0.0
        %2803 = vmatprep.subr.mxu0 0.0
        %2804 = vmatpush2.msra.mxu0 0.0
        %2805 = vmatprep.subr.mxu0 0.0
        %2806 = vmatpush2.msra.mxu0 0.0
        %2807 = vmatprep.subr.mxu0 0.0
        %2808 = vmatpush2.msra.mxu0 0.0
        %2809 = vmatprep.subr.mxu0 0.0
        %2810 = vmatpush2.msra.mxu0 0.0
        %2811 = vmatprep.subr.mxu0 0.0
        %2812 = vmatpush2.msra.mxu0 0.0
        %2813 = vmatprep.subr.mxu0 0.0
        %2814 = vmatpush2.msra.mxu0 0.0
        %2815 = vmatprep.subr.mxu0 0.0
        %2816 = vmatpush2.msra.mxu0 0.0
        %2817 = vmatprep.subr.mxu0 0.0
        %2818 = vmatpush2.msra.mxu0 0.0
        %2819 = vmatprep.subr.mxu0 0.0
        %2820 = vmatpush2.msra.mxu0 0.0
        %2821 = vmatprep.subr.mxu0 0.0
        %2822 = vmatpush2.msra.mxu0 0.0
        %2823 = vmatprep.mubr.f32.mxu0 0.0
        %2824 = vmatmul.mubr.f32.gmra.mxu0 %v2727
        %v2825 = vpop.f32.mrf.mxu0
        %v2826 = vadd.f32 %v2692, %v2825
        %v2827 = vpop.f32.mrf.mxu0
        %2828 = vmatprep.mubr.f32.mxu0 0.0
        %2829 = vmatmul.mubr.f32.gmra.mxu0 %v2729
        %v2830 = vpop.f32.mrf.mxu0
        %v2831 = vadd.f32 %v2692, %v2830
        %v2832 = vpop.f32.mrf.mxu0
        %2833 = vmatprep.mubr.f32.mxu0 0.0
        %2834 = vmatmul.mubr.f32.gmra.mxu0 %v2731
        %v2835 = vpop.f32.mrf.mxu0
        %v2836 = vadd.f32 %v2692, %v2835
        %v2837 = vpop.f32.mrf.mxu0
        %2838 = vmatprep.mubr.f32.mxu0 0.0
        %2839 = vmatmul.mubr.f32.gmra.mxu0 %v2733
        %v2840 = vpop.f32.mrf.mxu0
        %v2841 = vadd.f32 %v2692, %v2840
        %v2842 = vpop.f32.mrf.mxu0
        %2843 = vmatprep.mubr.f32.mxu0 0.0
        %2844 = vmatmul.mubr.f32.gmra.mxu0 %v2735
        %v2845 = vpop.f32.mrf.mxu0
        %v2846 = vadd.f32 %v2692, %v2845
        %v2847 = vpop.f32.mrf.mxu0
        %2848 = vmatprep.mubr.f32.mxu0 0.0
        %2849 = vmatmul.mubr.f32.gmra.mxu0 %v2737
        %v2850 = vpop.f32.mrf.mxu0
        %v2851 = vadd.f32 %v2692, %v2850
        %v2852 = vpop.f32.mrf.mxu0
        %2853 = vmatprep.mubr.f32.mxu0 0.0
        %2854 = vmatmul.mubr.f32.gmra.mxu0 %v2739
        %v2855 = vpop.f32.mrf.mxu0
        %v2856 = vadd.f32 %v2692, %v2855
        %v2857 = vpop.f32.mrf.mxu0
        %2858 = vmatprep.mubr.f32.mxu0 0.0
        %2859 = vmatmul.mubr.f32.gmra.mxu0 %v2741
        %v2860 = vpop.f32.mrf.mxu0
        %v2861 = vadd.f32 %v2692, %v2860
        %v2862 = vpop.f32.mrf.mxu0
        %2863 = vmatprep.mubr.f32.mxu0 0.0
        %2864 = vmatmul.mubr.f32.gmra.mxu0 %v2743
        %v2865 = vpop.f32.mrf.mxu0
        %v2866 = vadd.f32 %v2692, %v2865
        %v2867 = vpop.f32.mrf.mxu0
        %2868 = vmatprep.mubr.f32.mxu0 0.0
        %2869 = vmatmul.mubr.f32.gmra.mxu0 %v2745
        %v2870 = vpop.f32.mrf.mxu0
        %v2871 = vadd.f32 %v2692, %v2870
        %v2872 = vpop.f32.mrf.mxu0
        %2873 = vmatprep.mubr.f32.mxu0 0.0
        %2874 = vmatmul.mubr.f32.gmra.mxu0 %v2747
        %v2875 = vpop.f32.mrf.mxu0
        %v2876 = vadd.f32 %v2692, %v2875
        %v2877 = vpop.f32.mrf.mxu0
        %2878 = vmatprep.mubr.f32.mxu0 0.0
        %2879 = vmatmul.mubr.f32.gmra.mxu0 %v2749
        %v2880 = vpop.f32.mrf.mxu0
        %v2881 = vadd.f32 %v2692, %v2880
        %v2882 = vpop.f32.mrf.mxu0
        %2883 = vmatprep.mubr.f32.mxu0 0.0
        %2884 = vmatmul.mubr.f32.gmra.mxu0 %v2751
        %v2885 = vpop.f32.mrf.mxu0
        %v2886 = vadd.f32 %v2692, %v2885
        %v2887 = vpop.f32.mrf.mxu0
        %2888 = vmatprep.mubr.f32.mxu0 0.0
        %2889 = vmatmul.mubr.f32.gmra.mxu0 %v2753
        %v2890 = vpop.f32.mrf.mxu0
        %v2891 = vadd.f32 %v2692, %v2890
        %v2892 = vpop.f32.mrf.mxu0
        %2893 = vmatprep.mubr.f32.mxu0 0.0
        %2894 = vmatmul.mubr.f32.gmra.mxu0 %v2755
        %v2895 = vpop.f32.mrf.mxu0
        %v2896 = vadd.f32 %v2692, %v2895
        %v2897 = vpop.f32.mrf.mxu0
        %2898 = vmatprep.mubr.f32.mxu0 0.0
        %2899 = vmatmul.mubr.f32.gmra.mxu0 %v2757
        %v2900 = vpop.f32.mrf.mxu0
        %v2901 = vadd.f32 %v2692, %v2900
        %v2902 = vpop.f32.mrf.mxu0
        %2903 = vdwg.mxu0
        %v2904 = vsel %vm2726, %v2826, -inf
        %2905 = vmax.xlane.f32.xlu0 %v2904
        %v2906 = vpop.xlane.xlu0 %2905
        %v2907 = vsel %vm2726, %v2831, -inf
        %2908 = vmax.xlane.f32.xlu0 %v2907
        %v2909 = vpop.xlane.xlu0 %2908
        %v2910 = vsel %vm2726, %v2836, -inf
        %2911 = vmax.xlane.f32.xlu0 %v2910
        %v2912 = vpop.xlane.xlu0 %2911
        %v2913 = vsel %vm2726, %v2841, -inf
        %2914 = vmax.xlane.f32.xlu0 %v2913
        %v2915 = vpop.xlane.xlu0 %2914
        %v2916 = vsel %vm2726, %v2846, -inf
        %2917 = vmax.xlane.f32.xlu0 %v2916
        %v2918 = vpop.xlane.xlu0 %2917
        %v2919 = vsel %vm2726, %v2851, -inf
        %2920 = vmax.xlane.f32.xlu0 %v2919
        %v2921 = vpop.xlane.xlu0 %2920
        %v2922 = vsel %vm2726, %v2856, -inf
        %2923 = vmax.xlane.f32.xlu0 %v2922
        %v2924 = vpop.xlane.xlu0 %2923
        %v2925 = vsel %vm2726, %v2861, -inf
        %2926 = vmax.xlane.f32.xlu0 %v2925
        %v2927 = vpop.xlane.xlu0 %2926
        %v2928 = vsel %vm2726, %v2866, -inf
        %2929 = vmax.xlane.f32.xlu0 %v2928
        %v2930 = vpop.xlane.xlu0 %2929
        %v2931 = vsel %vm2726, %v2871, -inf
        %2932 = vmax.xlane.f32.xlu0 %v2931
        %v2933 = vpop.xlane.xlu0 %2932
        %v2934 = vsel %vm2726, %v2876, -inf
        %2935 = vmax.xlane.f32.xlu0 %v2934
        %v2936 = vpop.xlane.xlu0 %2935
        %v2937 = vsel %vm2726, %v2881, -inf
        %2938 = vmax.xlane.f32.xlu0 %v2937
        %v2939 = vpop.xlane.xlu0 %2938
        %v2940 = vsel %vm2726, %v2886, -inf
        %2941 = vmax.xlane.f32.xlu0 %v2940
        %v2942 = vpop.xlane.xlu0 %2941
        %v2943 = vsel %vm2726, %v2891, -inf
        %2944 = vmax.xlane.f32.xlu0 %v2943
        %v2945 = vpop.xlane.xlu0 %2944
        %v2946 = vsel %vm2726, %v2896, -inf
        %2947 = vmax.xlane.f32.xlu0 %v2946
        %v2948 = vpop.xlane.xlu0 %2947
        %v2949 = vsel %vm2726, %v2901, -inf
        %2950 = vmax.xlane.f32.xlu0 %v2949
        %v2951 = vpop.xlane.xlu0 %2950
        %v2952 = vsub.f32 %v2826, %v2906
        %v2953 = vsub.f32 %v2831, %v2909
        %v2954 = vsub.f32 %v2836, %v2912
        %v2955 = vsub.f32 %v2841, %v2915
        %v2956 = vsub.f32 %v2846, %v2918
        %v2957 = vsub.f32 %v2851, %v2921
        %v2958 = vsub.f32 %v2856, %v2924
        %v2959 = vsub.f32 %v2861, %v2927
        %v2960 = vsub.f32 %v2866, %v2930
        %v2961 = vsub.f32 %v2871, %v2933
        %v2962 = vsub.f32 %v2876, %v2936
        %v2963 = vsub.f32 %v2881, %v2939
        %v2964 = vsub.f32 %v2886, %v2942
        %v2965 = vsub.f32 %v2891, %v2945
        %v2966 = vsub.f32 %v2896, %v2948
        %v2967 = vsub.f32 %v2901, %v2951
        %v2968 = vmul.f32 %v2952, 1.442695
        %v2969 = vpow.pop %v2968
        %v2970 = vmul.f32 %v2953, 1.442695
        %v2971 = vpow.pop %v2970
        %v2972 = vmul.f32 %v2954, 1.442695
        %v2973 = vpow.pop %v2972
        %v2974 = vmul.f32 %v2955, 1.442695
        %v2975 = vpow.pop %v2974
        %v2976 = vmul.f32 %v2956, 1.442695
        %v2977 = vpow.pop %v2976
        %v2978 = vmul.f32 %v2957, 1.442695
        %v2979 = vpow.pop %v2978
        %v2980 = vmul.f32 %v2958, 1.442695
        %v2981 = vpow.pop %v2980
        %v2982 = vmul.f32 %v2959, 1.442695
        %v2983 = vpow.pop %v2982
        %v2984 = vmul.f32 %v2960, 1.442695
        %v2985 = vpow.pop %v2984
        %v2986 = vmul.f32 %v2961, 1.442695
        %v2987 = vpow.pop %v2986
        %v2988 = vmul.f32 %v2962, 1.442695
        %v2989 = vpow.pop %v2988
        %v2990 = vmul.f32 %v2963, 1.442695
        %v2991 = vpow.pop %v2990
        %v2992 = vmul.f32 %v2964, 1.442695
        %v2993 = vpow.pop %v2992
        %v2994 = vmul.f32 %v2965, 1.442695
        %v2995 = vpow.pop %v2994
        %v2996 = vmul.f32 %v2966, 1.442695
        %v2997 = vpow.pop %v2996
        %v2998 = vmul.f32 %v2967, 1.442695
        %v2999 = vpow.pop %v2998
        %v3000 = vsel %vm2726, %v2969, 0.0
        %3001 = vadd.xlane.f32.xlu0 %v3000
        %v3002 = vpop.xlane.xlu0 %3001
        %v3003 = vsel %vm2726, %v2971, 0.0
        %3004 = vadd.xlane.f32.xlu0 %v3003
        %v3005 = vpop.xlane.xlu0 %3004
        %v3006 = vsel %vm2726, %v2973, 0.0
        %3007 = vadd.xlane.f32.xlu0 %v3006
        %v3008 = vpop.xlane.xlu0 %3007
        %v3009 = vsel %vm2726, %v2975, 0.0
        %3010 = vadd.xlane.f32.xlu0 %v3009
        %v3011 = vpop.xlane.xlu0 %3010
        %v3012 = vsel %vm2726, %v2977, 0.0
        %3013 = vadd.xlane.f32.xlu0 %v3012
        %v3014 = vpop.xlane.xlu0 %3013
        %v3015 = vsel %vm2726, %v2979, 0.0
        %3016 = vadd.xlane.f32.xlu0 %v3015
        %v3017 = vpop.xlane.xlu0 %3016
        %v3018 = vsel %vm2726, %v2981, 0.0
        %3019 = vadd.xlane.f32.xlu0 %v3018
        %v3020 = vpop.xlane.xlu0 %3019
        %v3021 = vsel %vm2726, %v2983, 0.0
        %3022 = vadd.xlane.f32.xlu0 %v3021
        %v3023 = vpop.xlane.xlu0 %3022
        %v3024 = vsel %vm2726, %v2985, 0.0
        %3025 = vadd.xlane.f32.xlu0 %v3024
        %v3026 = vpop.xlane.xlu0 %3025
        %v3027 = vsel %vm2726, %v2987, 0.0
        %3028 = vadd.xlane.f32.xlu0 %v3027
        %v3029 = vpop.xlane.xlu0 %3028
        %v3030 = vsel %vm2726, %v2989, 0.0
        %3031 = vadd.xlane.f32.xlu0 %v3030
        %v3032 = vpop.xlane.xlu0 %3031
        %v3033 = vsel %vm2726, %v2991, 0.0
        %3034 = vadd.xlane.f32.xlu0 %v3033
        %v3035 = vpop.xlane.xlu0 %3034
        %v3036 = vsel %vm2726, %v2993, 0.0
        %3037 = vadd.xlane.f32.xlu0 %v3036
        %v3038 = vpop.xlane.xlu0 %3037
        %v3039 = vsel %vm2726, %v2995, 0.0
        %3040 = vadd.xlane.f32.xlu0 %v3039
        %v3041 = vpop.xlane.xlu0 %3040
        %v3042 = vsel %vm2726, %v2997, 0.0
        %3043 = vadd.xlane.f32.xlu0 %v3042
        %v3044 = vpop.xlane.xlu0 %3043
        %v3045 = vsel %vm2726, %v2999, 0.0
        %3046 = vadd.xlane.f32.xlu0 %v3045
        %v3047 = vpop.xlane.xlu0 %3046
        %v3048 = vrcp.pop %v3002
        %v3049 = vrcp.pop %v3005
        %v3050 = vrcp.pop %v3008
        %v3051 = vrcp.pop %v3011
        %v3052 = vrcp.pop %v3014
        %v3053 = vrcp.pop %v3017
        %v3054 = vrcp.pop %v3020
        %v3055 = vrcp.pop %v3023
        %v3056 = vrcp.pop %v3026
        %v3057 = vrcp.pop %v3029
        %v3058 = vrcp.pop %v3032
        %v3059 = vrcp.pop %v3035
        %v3060 = vrcp.pop %v3038
        %v3061 = vrcp.pop %v3041
        %v3062 = vrcp.pop %v3044
        %v3063 = vrcp.pop %v3047
        %v3064 = vmul.f32 %v2969, %v3048
        %v3065 = vmul.f32 %v2971, %v3049
        %v3066 = vmul.f32 %v2973, %v3050
        %v3067 = vmul.f32 %v2975, %v3051
        %v3068 = vmul.f32 %v2977, %v3052
        %v3069 = vmul.f32 %v2979, %v3053
        %v3070 = vmul.f32 %v2981, %v3054
        %v3071 = vmul.f32 %v2983, %v3055
        %v3072 = vmul.f32 %v2985, %v3056
        %v3073 = vmul.f32 %v2987, %v3057
        %v3074 = vmul.f32 %v2989, %v3058
        %v3075 = vmul.f32 %v2991, %v3059
        %v3076 = vmul.f32 %v2993, %v3060
        %v3077 = vmul.f32 %v2995, %v3061
        %v3078 = vmul.f32 %v2997, %v3062
        %v3079 = vmul.f32 %v2999, %v3063
        %3080 = vrot.lane.b32.xlu0 %v1799, 16
        %v3081 = vpop.permute.xlu0 %3080
        %3082 = vrot.lane.b32.xlu0 %v1800, 16
        %v3083 = vpop.permute.xlu0 %3082
        %3084 = vrot.lane.b32.xlu0 %v1801, 16
        %v3085 = vpop.permute.xlu0 %3084
        %3086 = vrot.lane.b32.xlu0 %v1802, 16
        %v3087 = vpop.permute.xlu0 %3086
        %3088 = vrot.lane.b32.xlu0 %v1803, 16
        %v3089 = vpop.permute.xlu0 %3088
        %3090 = vrot.lane.b32.xlu0 %v1804, 16
        %v3091 = vpop.permute.xlu0 %3090
        %3092 = vrot.lane.b32.xlu0 %v1805, 16
        %v3093 = vpop.permute.xlu0 %3092
        %3094 = vrot.lane.b32.xlu0 %v1806, 16
        %v3095 = vpop.permute.xlu0 %3094
        %3096 = vrot.lane.b32.xlu0 %v1807, 16
        %v3097 = vpop.permute.xlu0 %3096
        %3098 = vrot.lane.b32.xlu0 %v1808, 16
        %v3099 = vpop.permute.xlu0 %3098
        %3100 = vrot.lane.b32.xlu0 %v1809, 16
        %v3101 = vpop.permute.xlu0 %3100
        %3102 = vrot.lane.b32.xlu0 %v1810, 16
        %v3103 = vpop.permute.xlu0 %3102
        %3104 = vrot.lane.b32.xlu0 %v1811, 16
        %v3105 = vpop.permute.xlu0 %3104
        %3106 = vrot.lane.b32.xlu0 %v1812, 16
        %v3107 = vpop.permute.xlu0 %3106
        %3108 = vrot.lane.b32.xlu0 %v1813, 16
        %v3109 = vpop.permute.xlu0 %3108
        %3110 = vrot.lane.b32.xlu0 %v1814, 16
        %v3111 = vpop.permute.xlu0 %3110
        %3128 = vrot.lane.b32.xlu0 %v1799, 32
        %v3129 = vpop.permute.xlu0 %3128
        %3130 = vrot.lane.b32.xlu0 %v1800, 32
        %v3131 = vpop.permute.xlu0 %3130
        %3132 = vrot.lane.b32.xlu0 %v1801, 32
        %v3133 = vpop.permute.xlu0 %3132
        %3134 = vrot.lane.b32.xlu0 %v1802, 32
        %v3135 = vpop.permute.xlu0 %3134
        %3136 = vrot.lane.b32.xlu0 %v1803, 32
        %v3137 = vpop.permute.xlu0 %3136
        %3138 = vrot.lane.b32.xlu0 %v1804, 32
        %v3139 = vpop.permute.xlu0 %3138
        %3140 = vrot.lane.b32.xlu0 %v1805, 32
        %v3141 = vpop.permute.xlu0 %3140
        %3142 = vrot.lane.b32.xlu0 %v1806, 32
        %v3143 = vpop.permute.xlu0 %3142
        %3144 = vrot.lane.b32.xlu0 %v1807, 32
        %v3145 = vpop.permute.xlu0 %3144
        %3146 = vrot.lane.b32.xlu0 %v1808, 32
        %v3147 = vpop.permute.xlu0 %3146
        %3148 = vrot.lane.b32.xlu0 %v1809, 32
        %v3149 = vpop.permute.xlu0 %3148
        %3150 = vrot.lane.b32.xlu0 %v1810, 32
        %v3151 = vpop.permute.xlu0 %3150
        %3152 = vrot.lane.b32.xlu0 %v1811, 32
        %v3153 = vpop.permute.xlu0 %3152
        %3154 = vrot.lane.b32.xlu0 %v1812, 32
        %v3155 = vpop.permute.xlu0 %3154
        %3156 = vrot.lane.b32.xlu0 %v1813, 32
        %v3157 = vpop.permute.xlu0 %3156
        %3158 = vrot.lane.b32.xlu0 %v1814, 32
        %v3159 = vpop.permute.xlu0 %3158
        %3176 = vrot.lane.b32.xlu0 %v1799, 48
        %v3177 = vpop.permute.xlu0 %3176
        %3178 = vrot.lane.b32.xlu0 %v1800, 48
        %v3179 = vpop.permute.xlu0 %3178
        %3180 = vrot.lane.b32.xlu0 %v1801, 48
        %v3181 = vpop.permute.xlu0 %3180
        %3182 = vrot.lane.b32.xlu0 %v1802, 48
        %v3183 = vpop.permute.xlu0 %3182
        %3184 = vrot.lane.b32.xlu0 %v1803, 48
        %v3185 = vpop.permute.xlu0 %3184
        %3186 = vrot.lane.b32.xlu0 %v1804, 48
        %v3187 = vpop.permute.xlu0 %3186
        %3188 = vrot.lane.b32.xlu0 %v1805, 48
        %v3189 = vpop.permute.xlu0 %3188
        %3190 = vrot.lane.b32.xlu0 %v1806, 48
        %v3191 = vpop.permute.xlu0 %3190
        %3192 = vrot.lane.b32.xlu0 %v1807, 48
        %v3193 = vpop.permute.xlu0 %3192
        %3194 = vrot.lane.b32.xlu0 %v1808, 48
        %v3195 = vpop.permute.xlu0 %3194
        %3196 = vrot.lane.b32.xlu0 %v1809, 48
        %v3197 = vpop.permute.xlu0 %3196
        %3198 = vrot.lane.b32.xlu0 %v1810, 48
        %v3199 = vpop.permute.xlu0 %3198
        %3200 = vrot.lane.b32.xlu0 %v1811, 48
        %v3201 = vpop.permute.xlu0 %3200
        %3202 = vrot.lane.b32.xlu0 %v1812, 48
        %v3203 = vpop.permute.xlu0 %3202
        %3204 = vrot.lane.b32.xlu0 %v1813, 48
        %v3205 = vpop.permute.xlu0 %3204
        %3206 = vrot.lane.b32.xlu0 %v1814, 48
        %v3207 = vpop.permute.xlu0 %3206
        %3224 = vrot.lane.b32.xlu0 %v1799, 64
        %v3225 = vpop.permute.xlu0 %3224
        %3226 = vrot.lane.b32.xlu0 %v1800, 64
        %v3227 = vpop.permute.xlu0 %3226
        %3228 = vrot.lane.b32.xlu0 %v1801, 64
        %v3229 = vpop.permute.xlu0 %3228
        %3230 = vrot.lane.b32.xlu0 %v1802, 64
        %v3231 = vpop.permute.xlu0 %3230
        %3232 = vrot.lane.b32.xlu0 %v1803, 64
        %v3233 = vpop.permute.xlu0 %3232
        %3234 = vrot.lane.b32.xlu0 %v1804, 64
        %v3235 = vpop.permute.xlu0 %3234
        %3236 = vrot.lane.b32.xlu0 %v1805, 64
        %v3237 = vpop.permute.xlu0 %3236
        %3238 = vrot.lane.b32.xlu0 %v1806, 64
        %v3239 = vpop.permute.xlu0 %3238
        %3240 = vrot.lane.b32.xlu0 %v1807, 64
        %v3241 = vpop.permute.xlu0 %3240
        %3242 = vrot.lane.b32.xlu0 %v1808, 64
        %v3243 = vpop.permute.xlu0 %3242
        %3244 = vrot.lane.b32.xlu0 %v1809, 64
        %v3245 = vpop.permute.xlu0 %3244
        %3246 = vrot.lane.b32.xlu0 %v1810, 64
        %v3247 = vpop.permute.xlu0 %3246
        %3248 = vrot.lane.b32.xlu0 %v1811, 64
        %v3249 = vpop.permute.xlu0 %3248
        %3250 = vrot.lane.b32.xlu0 %v1812, 64
        %v3251 = vpop.permute.xlu0 %3250
        %3252 = vrot.lane.b32.xlu0 %v1813, 64
        %v3253 = vpop.permute.xlu0 %3252
        %3254 = vrot.lane.b32.xlu0 %v1814, 64
        %v3255 = vpop.permute.xlu0 %3254
        %3272 = vrot.lane.b32.xlu0 %v1799, 80
        %v3273 = vpop.permute.xlu0 %3272
        %3274 = vrot.lane.b32.xlu0 %v1800, 80
        %v3275 = vpop.permute.xlu0 %3274
        %3276 = vrot.lane.b32.xlu0 %v1801, 80
        %v3277 = vpop.permute.xlu0 %3276
        %3278 = vrot.lane.b32.xlu0 %v1802, 80
        %v3279 = vpop.permute.xlu0 %3278
        %3280 = vrot.lane.b32.xlu0 %v1803, 80
        %v3281 = vpop.permute.xlu0 %3280
        %3282 = vrot.lane.b32.xlu0 %v1804, 80
        %v3283 = vpop.permute.xlu0 %3282
        %3284 = vrot.lane.b32.xlu0 %v1805, 80
        %v3285 = vpop.permute.xlu0 %3284
        %3286 = vrot.lane.b32.xlu0 %v1806, 80
        %v3287 = vpop.permute.xlu0 %3286
        %3288 = vrot.lane.b32.xlu0 %v1807, 80
        %v3289 = vpop.permute.xlu0 %3288
        %3290 = vrot.lane.b32.xlu0 %v1808, 80
        %v3291 = vpop.permute.xlu0 %3290
        %3292 = vrot.lane.b32.xlu0 %v1809, 80
        %v3293 = vpop.permute.xlu0 %3292
        %3294 = vrot.lane.b32.xlu0 %v1810, 80
        %v3295 = vpop.permute.xlu0 %3294
        %3296 = vrot.lane.b32.xlu0 %v1811, 80
        %v3297 = vpop.permute.xlu0 %3296
        %3298 = vrot.lane.b32.xlu0 %v1812, 80
        %v3299 = vpop.permute.xlu0 %3298
        %3300 = vrot.lane.b32.xlu0 %v1813, 80
        %v3301 = vpop.permute.xlu0 %3300
        %3302 = vrot.lane.b32.xlu0 %v1814, 80
        %v3303 = vpop.permute.xlu0 %3302
        %3320 = vrot.lane.b32.xlu0 %v1799, 96
        %v3321 = vpop.permute.xlu0 %3320
        %3322 = vrot.lane.b32.xlu0 %v1800, 96
        %v3323 = vpop.permute.xlu0 %3322
        %3324 = vrot.lane.b32.xlu0 %v1801, 96
        %v3325 = vpop.permute.xlu0 %3324
        %3326 = vrot.lane.b32.xlu0 %v1802, 96
        %v3327 = vpop.permute.xlu0 %3326
        %3328 = vrot.lane.b32.xlu0 %v1803, 96
        %v3329 = vpop.permute.xlu0 %3328
        %3330 = vrot.lane.b32.xlu0 %v1804, 96
        %v3331 = vpop.permute.xlu0 %3330
        %3332 = vrot.lane.b32.xlu0 %v1805, 96
        %v3333 = vpop.permute.xlu0 %3332
        %3334 = vrot.lane.b32.xlu0 %v1806, 96
        %v3335 = vpop.permute.xlu0 %3334
        %3336 = vrot.lane.b32.xlu0 %v1807, 96
        %v3337 = vpop.permute.xlu0 %3336
        %3338 = vrot.lane.b32.xlu0 %v1808, 96
        %v3339 = vpop.permute.xlu0 %3338
        %3340 = vrot.lane.b32.xlu0 %v1809, 96
        %v3341 = vpop.permute.xlu0 %3340
        %3342 = vrot.lane.b32.xlu0 %v1810, 96
        %v3343 = vpop.permute.xlu0 %3342
        %3344 = vrot.lane.b32.xlu0 %v1811, 96
        %v3345 = vpop.permute.xlu0 %3344
        %3346 = vrot.lane.b32.xlu0 %v1812, 96
        %v3347 = vpop.permute.xlu0 %3346
        %3348 = vrot.lane.b32.xlu0 %v1813, 96
        %v3349 = vpop.permute.xlu0 %3348
        %3350 = vrot.lane.b32.xlu0 %v1814, 96
        %v3351 = vpop.permute.xlu0 %3350
        %3368 = vrot.lane.b32.xlu0 %v1799, 112
        %v3369 = vpop.permute.xlu0 %3368
        %3370 = vrot.lane.b32.xlu0 %v1800, 112
        %v3371 = vpop.permute.xlu0 %3370
        %3372 = vrot.lane.b32.xlu0 %v1801, 112
        %v3373 = vpop.permute.xlu0 %3372
        %3374 = vrot.lane.b32.xlu0 %v1802, 112
        %v3375 = vpop.permute.xlu0 %3374
        %3376 = vrot.lane.b32.xlu0 %v1803, 112
        %v3377 = vpop.permute.xlu0 %3376
        %3378 = vrot.lane.b32.xlu0 %v1804, 112
        %v3379 = vpop.permute.xlu0 %3378
        %3380 = vrot.lane.b32.xlu0 %v1805, 112
        %v3381 = vpop.permute.xlu0 %3380
        %3382 = vrot.lane.b32.xlu0 %v1806, 112
        %v3383 = vpop.permute.xlu0 %3382
        %3384 = vrot.lane.b32.xlu0 %v1807, 112
        %v3385 = vpop.permute.xlu0 %3384
        %3386 = vrot.lane.b32.xlu0 %v1808, 112
        %v3387 = vpop.permute.xlu0 %3386
        %3388 = vrot.lane.b32.xlu0 %v1809, 112
        %v3389 = vpop.permute.xlu0 %3388
        %3390 = vrot.lane.b32.xlu0 %v1810, 112
        %v3391 = vpop.permute.xlu0 %3390
        %3392 = vrot.lane.b32.xlu0 %v1811, 112
        %v3393 = vpop.permute.xlu0 %3392
        %3394 = vrot.lane.b32.xlu0 %v1812, 112
        %v3395 = vpop.permute.xlu0 %3394
        %3396 = vrot.lane.b32.xlu0 %v1813, 112
        %v3397 = vpop.permute.xlu0 %3396
        %3398 = vrot.lane.b32.xlu0 %v1814, 112
        %v3399 = vpop.permute.xlu0 %3398
        %v3416 = vsel %vm1824, %v1799, %v3081
        %v3417 = vsel %vm1824, %v1800, %v3083
        %v3418 = vsel %vm1824, %v1801, %v3085
        %v3419 = vsel %vm1824, %v1802, %v3087
        %v3420 = vsel %vm1824, %v1803, %v3089
        %v3421 = vsel %vm1824, %v1804, %v3091
        %v3422 = vsel %vm1824, %v1805, %v3093
        %v3423 = vsel %vm1824, %v1806, %v3095
        %v3424 = vsel %vm1824, %v1807, %v3097
        %v3425 = vsel %vm1824, %v1808, %v3099
        %v3426 = vsel %vm1824, %v1809, %v3101
        %v3427 = vsel %vm1824, %v1810, %v3103
        %v3428 = vsel %vm1824, %v1811, %v3105
        %v3429 = vsel %vm1824, %v1812, %v3107
        %v3430 = vsel %vm1824, %v1813, %v3109
        %v3431 = vsel %vm1824, %v1814, %v3111
        %v3432 = vsel %vm1461, %v3416, %v3129
        %v3433 = vsel %vm1461, %v3417, %v3131
        %v3434 = vsel %vm1461, %v3418, %v3133
        %v3435 = vsel %vm1461, %v3419, %v3135
        %v3436 = vsel %vm1461, %v3420, %v3137
        %v3437 = vsel %vm1461, %v3421, %v3139
        %v3438 = vsel %vm1461, %v3422, %v3141
        %v3439 = vsel %vm1461, %v3423, %v3143
        %v3440 = vsel %vm1461, %v3424, %v3145
        %v3441 = vsel %vm1461, %v3425, %v3147
        %v3442 = vsel %vm1461, %v3426, %v3149
        %v3443 = vsel %vm1461, %v3427, %v3151
        %v3444 = vsel %vm1461, %v3428, %v3153
        %v3445 = vsel %vm1461, %v3429, %v3155
        %v3446 = vsel %vm1461, %v3430, %v3157
        %v3447 = vsel %vm1461, %v3431, %v3159
        %vm3448 = vcmask 392192
        %v3449 = vsel %vm3448, %v3432, %v3177
        %v3450 = vsel %vm3448, %v3433, %v3179
        %v3451 = vsel %vm3448, %v3434, %v3181
        %v3452 = vsel %vm3448, %v3435, %v3183
        %v3453 = vsel %vm3448, %v3436, %v3185
        %v3454 = vsel %vm3448, %v3437, %v3187
        %v3455 = vsel %vm3448, %v3438, %v3189
        %v3456 = vsel %vm3448, %v3439, %v3191
        %v3457 = vsel %vm3448, %v3440, %v3193
        %v3458 = vsel %vm3448, %v3441, %v3195
        %v3459 = vsel %vm3448, %v3442, %v3197
        %v3460 = vsel %vm3448, %v3443, %v3199
        %v3461 = vsel %vm3448, %v3444, %v3201
        %v3462 = vsel %vm3448, %v3445, %v3203
        %v3463 = vsel %vm3448, %v3446, %v3205
        %v3464 = vsel %vm3448, %v3447, %v3207
        %v3465 = vsel %vm792, %v3449, %v3225
        %v3466 = vsel %vm792, %v3450, %v3227
        %v3467 = vsel %vm792, %v3451, %v3229
        %v3468 = vsel %vm792, %v3452, %v3231
        %v3469 = vsel %vm792, %v3453, %v3233
        %v3470 = vsel %vm792, %v3454, %v3235
        %v3471 = vsel %vm792, %v3455, %v3237
        %v3472 = vsel %vm792, %v3456, %v3239
        %v3473 = vsel %vm792, %v3457, %v3241
        %v3474 = vsel %vm792, %v3458, %v3243
        %v3475 = vsel %vm792, %v3459, %v3245
        %v3476 = vsel %vm792, %v3460, %v3247
        %v3477 = vsel %vm792, %v3461, %v3249
        %v3478 = vsel %vm792, %v3462, %v3251
        %v3479 = vsel %vm792, %v3463, %v3253
        %v3480 = vsel %vm792, %v3464, %v3255
        %vm3481 = vcmask 654336
        %v3482 = vsel %vm3481, %v3465, %v3273
        %v3483 = vsel %vm3481, %v3466, %v3275
        %v3484 = vsel %vm3481, %v3467, %v3277
        %v3485 = vsel %vm3481, %v3468, %v3279
        %v3486 = vsel %vm3481, %v3469, %v3281
        %v3487 = vsel %vm3481, %v3470, %v3283
        %v3488 = vsel %vm3481, %v3471, %v3285
        %v3489 = vsel %vm3481, %v3472, %v3287
        %v3490 = vsel %vm3481, %v3473, %v3289
        %v3491 = vsel %vm3481, %v3474, %v3291
        %v3492 = vsel %vm3481, %v3475, %v3293
        %v3493 = vsel %vm3481, %v3476, %v3295
        %v3494 = vsel %vm3481, %v3477, %v3297
        %v3495 = vsel %vm3481, %v3478, %v3299
        %v3496 = vsel %vm3481, %v3479, %v3301
        %v3497 = vsel %vm3481, %v3480, %v3303
        %vm3498 = vcmask 785408
        %v3499 = vsel %vm3498, %v3482, %v3321
        %v3500 = vsel %vm3498, %v3483, %v3323
        %v3501 = vsel %vm3498, %v3484, %v3325
        %v3502 = vsel %vm3498, %v3485, %v3327
        %v3503 = vsel %vm3498, %v3486, %v3329
        %v3504 = vsel %vm3498, %v3487, %v3331
        %v3505 = vsel %vm3498, %v3488, %v3333
        %v3506 = vsel %vm3498, %v3489, %v3335
        %v3507 = vsel %vm3498, %v3490, %v3337
        %v3508 = vsel %vm3498, %v3491, %v3339
        %v3509 = vsel %vm3498, %v3492, %v3341
        %v3510 = vsel %vm3498, %v3493, %v3343
        %v3511 = vsel %vm3498, %v3494, %v3345
        %v3512 = vsel %vm3498, %v3495, %v3347
        %v3513 = vsel %vm3498, %v3496, %v3349
        %v3514 = vsel %vm3498, %v3497, %v3351
        %vm3515 = vcmask 916480
        %v3516 = vsel %vm3515, %v3499, %v3369
        %v3517 = vsel %vm3515, %v3500, %v3371
        %v3518 = vsel %vm3515, %v3501, %v3373
        %v3519 = vsel %vm3515, %v3502, %v3375
        %v3520 = vsel %vm3515, %v3503, %v3377
        %v3521 = vsel %vm3515, %v3504, %v3379
        %v3522 = vsel %vm3515, %v3505, %v3381
        %v3523 = vsel %vm3515, %v3506, %v3383
        %v3524 = vsel %vm3515, %v3507, %v3385
        %v3525 = vsel %vm3515, %v3508, %v3387
        %v3526 = vsel %vm3515, %v3509, %v3389
        %v3527 = vsel %vm3515, %v3510, %v3391
        %v3528 = vsel %vm3515, %v3511, %v3393
        %v3529 = vsel %vm3515, %v3512, %v3395
        %v3530 = vsel %vm3515, %v3513, %v3397
        %v3531 = vsel %vm3515, %v3514, %v3399
        %v3532 = vld [vmem:[%s20] sm:$0x1]
        %v3534 = vlaneseq
        %v3535 = vshrl.u32 %v3534, 7
        %v3536 = vsub.s32 0, %v3535
        %v3537 = vrot.slane %v3532, %v3536
        %v3539 = vsub.f32 %v3516, %v3537
        %v3540 = vsub.f32 %v3517, %v3537
        %v3541 = vsub.f32 %v3518, %v3537
        %v3542 = vsub.f32 %v3519, %v3537
        %v3543 = vsub.f32 %v3520, %v3537
        %v3544 = vsub.f32 %v3521, %v3537
        %v3545 = vsub.f32 %v3522, %v3537
        %v3546 = vsub.f32 %v3523, %v3537
        %v3547 = vsub.f32 %v3524, %v3537
        %v3548 = vsub.f32 %v3525, %v3537
        %v3549 = vsub.f32 %v3526, %v3537
        %v3550 = vsub.f32 %v3527, %v3537
        %v3551 = vsub.f32 %v3528, %v3537
        %v3552 = vsub.f32 %v3529, %v3537
        %v3553 = vsub.f32 %v3530, %v3537
        %v3554 = vsub.f32 %v3531, %v3537
        %3555 = vst.msk [vmem:[%s752] sm:$0xff] %vm792, %v2608
        %3556 = vst.msk [vmem:[%s752 + $0x8] sm:$0xff] %vm792, %v2613
        %3557 = vst.msk [vmem:[%s752 + $0x10] sm:$0xff] %vm792, %v2618
        %3558 = vst.msk [vmem:[%s752 + $0x18] sm:$0xff] %vm792, %v2623
        %3559 = vst.msk [vmem:[%s752 + $0x20] sm:$0xff] %vm792, %v2628
        %3560 = vst.msk [vmem:[%s752 + $0x28] sm:$0xff] %vm792, %v2633
        %3561 = vst.msk [vmem:[%s752 + $0x30] sm:$0xff] %vm792, %v2638
        %3562 = vst.msk [vmem:[%s752 + $0x38] sm:$0xff] %vm792, %v2643
        %3563 = vst.msk [vmem:[%s752 + $0x40] sm:$0xff] %vm792, %v2648
        %3564 = vst.msk [vmem:[%s752 + $0x48] sm:$0xff] %vm792, %v2653
        %3565 = vst.msk [vmem:[%s752 + $0x50] sm:$0xff] %vm792, %v2658
        %3566 = vst.msk [vmem:[%s752 + $0x58] sm:$0xff] %vm792, %v2663
        %3567 = vst.msk [vmem:[%s752 + $0x60] sm:$0xff] %vm792, %v2668
        %3568 = vst.msk [vmem:[%s752 + $0x68] sm:$0xff] %vm792, %v2673
        %3569 = vst.msk [vmem:[%s752 + $0x70] sm:$0xff] %vm792, %v2678
        %3570 = vst.msk [vmem:[%s752 + $0x78] sm:$0xff] %vm792, %v2683
        %3587 = vrot.lane.b32.xlu0 %v3064, 48
        %v3588 = vpop.permute.xlu0 %3587
        %3589 = vrot.lane.b32.xlu0 %v3065, 48
        %v3590 = vpop.permute.xlu0 %3589
        %3591 = vrot.lane.b32.xlu0 %v3066, 48
        %v3592 = vpop.permute.xlu0 %3591
        %3593 = vrot.lane.b32.xlu0 %v3067, 48
        %v3594 = vpop.permute.xlu0 %3593
        %3595 = vrot.lane.b32.xlu0 %v3068, 48
        %v3596 = vpop.permute.xlu0 %3595
        %3597 = vrot.lane.b32.xlu0 %v3069, 48
        %v3598 = vpop.permute.xlu0 %3597
        %3599 = vrot.lane.b32.xlu0 %v3070, 48
        %v3600 = vpop.permute.xlu0 %3599
        %3601 = vrot.lane.b32.xlu0 %v3071, 48
        %v3602 = vpop.permute.xlu0 %3601
        %3603 = vrot.lane.b32.xlu0 %v3072, 48
        %v3604 = vpop.permute.xlu0 %3603
        %3605 = vrot.lane.b32.xlu0 %v3073, 48
        %v3606 = vpop.permute.xlu0 %3605
        %3607 = vrot.lane.b32.xlu0 %v3074, 48
        %v3608 = vpop.permute.xlu0 %3607
        %3609 = vrot.lane.b32.xlu0 %v3075, 48
        %v3610 = vpop.permute.xlu0 %3609
        %3611 = vrot.lane.b32.xlu0 %v3076, 48
        %v3612 = vpop.permute.xlu0 %3611
        %3613 = vrot.lane.b32.xlu0 %v3077, 48
        %v3614 = vpop.permute.xlu0 %3613
        %3615 = vrot.lane.b32.xlu0 %v3078, 48
        %v3616 = vpop.permute.xlu0 %3615
        %3617 = vrot.lane.b32.xlu0 %v3079, 48
        %v3618 = vpop.permute.xlu0 %3617
        %v3635 = vsel %vm1461, %v1577, %v3129
        %v3636 = vsel %vm1461, %v1582, %v3131
        %v3637 = vsel %vm1461, %v1587, %v3133
        %v3638 = vsel %vm1461, %v1592, %v3135
        %v3639 = vsel %vm1461, %v1597, %v3137
        %v3640 = vsel %vm1461, %v1602, %v3139
        %v3641 = vsel %vm1461, %v1607, %v3141
        %v3642 = vsel %vm1461, %v1612, %v3143
        %v3643 = vsel %vm1461, %v1617, %v3145
        %v3644 = vsel %vm1461, %v1622, %v3147
        %v3645 = vsel %vm1461, %v1627, %v3149
        %v3646 = vsel %vm1461, %v1632, %v3151
        %v3647 = vsel %vm1461, %v1637, %v3153
        %v3648 = vsel %vm1461, %v1642, %v3155
        %v3649 = vsel %vm1461, %v1647, %v3157
        %v3650 = vsel %vm1461, %v1652, %v3159
        %v3651 = vsel %vm3448, %v3635, %v3588
        %v3652 = vsel %vm3448, %v3636, %v3590
        %v3653 = vsel %vm3448, %v3637, %v3592
        %v3654 = vsel %vm3448, %v3638, %v3594
        %v3655 = vsel %vm3448, %v3639, %v3596
        %v3656 = vsel %vm3448, %v3640, %v3598
        %v3657 = vsel %vm3448, %v3641, %v3600
        %v3658 = vsel %vm3448, %v3642, %v3602
        %v3659 = vsel %vm3448, %v3643, %v3604
        %v3660 = vsel %vm3448, %v3644, %v3606
        %v3661 = vsel %vm3448, %v3645, %v3608
        %v3662 = vsel %vm3448, %v3646, %v3610
        %v3663 = vsel %vm3448, %v3647, %v3612
        %v3664 = vsel %vm3448, %v3648, %v3614
        %v3665 = vsel %vm3448, %v3649, %v3616
        %v3666 = vsel %vm3448, %v3650, %v3618
        %vm3667 = vcmask 457728
        %3668 = vst.msk [vmem:[%s758] sm:$0xff] %vm3667, %v3651
        %3669 = vst.msk [vmem:[%s758 + $0x8] sm:$0xff] %vm3667, %v3652
        %3670 = vst.msk [vmem:[%s758 + $0x10] sm:$0xff] %vm3667, %v3653
        %3671 = vst.msk [vmem:[%s758 + $0x18] sm:$0xff] %vm3667, %v3654
        %3672 = vst.msk [vmem:[%s758 + $0x20] sm:$0xff] %vm3667, %v3655
        %3673 = vst.msk [vmem:[%s758 + $0x28] sm:$0xff] %vm3667, %v3656
        %3674 = vst.msk [vmem:[%s758 + $0x30] sm:$0xff] %vm3667, %v3657
        %3675 = vst.msk [vmem:[%s758 + $0x38] sm:$0xff] %vm3667, %v3658
        %3676 = vst.msk [vmem:[%s758 + $0x40] sm:$0xff] %vm3667, %v3659
        %3677 = vst.msk [vmem:[%s758 + $0x48] sm:$0xff] %vm3667, %v3660
        %3678 = vst.msk [vmem:[%s758 + $0x50] sm:$0xff] %vm3667, %v3661
        %3679 = vst.msk [vmem:[%s758 + $0x58] sm:$0xff] %vm3667, %v3662
        %3680 = vst.msk [vmem:[%s758 + $0x60] sm:$0xff] %vm3667, %v3663
        %3681 = vst.msk [vmem:[%s758 + $0x68] sm:$0xff] %vm3667, %v3664
        %3682 = vst.msk [vmem:[%s758 + $0x70] sm:$0xff] %vm3667, %v3665
        %3683 = vst.msk [vmem:[%s758 + $0x78] sm:$0xff] %vm3667, %v3666
        %3684 = vst [vmem:[%s735] sm:$0xff] %v3539
        %3685 = vst [vmem:[%s735 + $0x8] sm:$0xff] %v3540
        %3686 = vst [vmem:[%s735 + $0x10] sm:$0xff] %v3541
        %3687 = vst [vmem:[%s735 + $0x18] sm:$0xff] %v3542
        %3688 = vst [vmem:[%s735 + $0x20] sm:$0xff] %v3543
        %3689 = vst [vmem:[%s735 + $0x28] sm:$0xff] %v3544
        %3690 = vst [vmem:[%s735 + $0x30] sm:$0xff] %v3545
        %3691 = vst [vmem:[%s735 + $0x38] sm:$0xff] %v3546
        %3692 = vst [vmem:[%s735 + $0x40] sm:$0xff] %v3547
        %3693 = vst [vmem:[%s735 + $0x48] sm:$0xff] %v3548
        %3694 = vst [vmem:[%s735 + $0x50] sm:$0xff] %v3549
        %3695 = vst [vmem:[%s735 + $0x58] sm:$0xff] %v3550
        %3696 = vst [vmem:[%s735 + $0x60] sm:$0xff] %v3551
        %3697 = vst [vmem:[%s735 + $0x68] sm:$0xff] %v3552
        %3698 = vst [vmem:[%s735 + $0x70] sm:$0xff] %v3553
        %3699 = vst [vmem:[%s735 + $0x78] sm:$0xff] %v3554
        %s3700 = smul.u32 16, %s38
        %p3701 = scmp.lt.s32.totalorder %s3700, 31
        %s3702 = scalar_select %p3701, %s3700, 31
        %s3703 = smul.addr %s3702, 8
        %s3704 = scalar_lea.vmem %s21, %s3703
        %s3705 = smul.u32 16, %s38
        %p3706 = scmp.lt.s32.totalorder %s3705, 31
        %s3707 = scalar_select %p3706, %s3705, 31
        %s3708 = smul.addr %s3707, 8
        %s3709 = scalar_lea.vmem %s22, %s3708
        %s3710 = sand.u32 %s549, 1
        %s3711 = scalar_lea.sflag [#allocation3], %s3710
        %s3712 = sand.u32 %s549, 1
        %s3713 = smul.addr %s3712, 128
        %s3714 = scalar_lea.vmem [#allocation2], %s3713
        // Predicated region
        $region105: #{tpu_custom_call.1} parent=103 // pred_check
          %p3715 = pneg %p507
        $region106: #{tpu_custom_call.1} parent=103 // pred_check_branch
          %3717 = sbr.rel (%p3715) target = $region108
        $region107: #{tpu_custom_call.1} parent=103 // pred_region
          %s3718 = smul.u32 16, %s38
        $region108: #{tpu_custom_call.1} parent=103 // pred_fallthru
          _
        // Predicated region
        $region109: #{tpu_custom_call.1} parent=103 // pred_check
          %p3719 = pneg %p533
        $region110: #{tpu_custom_call.1} parent=103 // pred_check_branch
          %3721 = sbr.rel (%p3719) target = $region112
        $region111: #{tpu_custom_call.1} parent=103 // pred_region
          %s3722 = smul.u32 16, %s38
        $region112: #{tpu_custom_call.1} parent=103 // pred_fallthru
          _
        // Predicated region
        $region113: #{tpu_custom_call.1} parent=103 // pred_check
          %p3723 = pneg %p559
        $region114: #{tpu_custom_call.1} parent=103 // pred_check_branch
          %3725 = sbr.rel (%p3723) target = $region116
        $region115: #{tpu_custom_call.1} parent=103 // pred_region
          %s3726 = smul.u32 16, %s38
          %s3728 = ssub.s32 2048, 2048
          %3729 = vsyncadd %s3711, %s3728
          %s3730 = smul.addr %s3726, 128
          %s3731 = scalar_lea.hbm %s23, %s3730
          %s3732 = sshll.u32 %s3714, 4
          %s3733 = int_to_ptr.vmem [resolvable:$true] %s3732
          %3738 = dma.vmem_to_hbm [thread:$0]  %s3733, 2048, %s3731, %s3711, 128, 128, 8
        $region116: #{tpu_custom_call.1} parent=103 // pred_fallthru
          _
      $region104: #{tpu_custom_call.1} parent=5 // pred_fallthru
        _
      %p3739 = scmp.le.s32.totalorder 2, %s33
      // Predicated region
      $region117: #{tpu_custom_call.1} parent=5 // pred_check
        %p3740 = pneg %p3739
      $region118: #{tpu_custom_call.1} parent=5 // pred_check_branch
        %3742 = sbr.rel (%p3740) target = $region120
      $region119: #{tpu_custom_call.1} parent=5 // pred_region
        %s3743 = ssub.s32 %s33, 2
        // Predicated region
        $region121: #{tpu_custom_call.1} parent=119 // pred_check
          %p3744 = pneg %p513
        $region122: #{tpu_custom_call.1} parent=119 // pred_check_branch
          %3746 = sbr.rel (%p3744) target = $region124
        $region123: #{tpu_custom_call.1} parent=119 // pred_region
          %s3747 = smul.u32 16, %s39
          %p3748 = scmp.lt.s32.totalorder %s3747, 31
          %s3749 = scalar_select %p3748, %s3747, 31
          %s3750 = smul.addr %s3749, 8
          %s3751 = scalar_lea.vmem %s21, %s3750
        $region124: #{tpu_custom_call.1} parent=119 // pred_fallthru
          _
        // Predicated region
        $region125: #{tpu_custom_call.1} parent=119 // pred_check
          %p3752 = pneg %p539
        $region126: #{tpu_custom_call.1} parent=119 // pred_check_branch
          %3754 = sbr.rel (%p3752) target = $region128
        $region127: #{tpu_custom_call.1} parent=119 // pred_region
          %s3755 = smul.u32 16, %s39
          %p3756 = scmp.lt.s32.totalorder %s3755, 31
          %s3757 = scalar_select %p3756, %s3755, 31
          %s3758 = smul.addr %s3757, 8
          %s3759 = scalar_lea.vmem %s22, %s3758
        $region128: #{tpu_custom_call.1} parent=119 // pred_fallthru
          _
        // Predicated region
        $region129: #{tpu_custom_call.1} parent=119 // pred_check
          %p3760 = pneg %p565
        $region130: #{tpu_custom_call.1} parent=119 // pred_check_branch
          %3762 = sbr.rel (%p3760) target = $region132
        $region131: #{tpu_custom_call.1} parent=119 // pred_region
          %s3763 = sand.u32 %s550, 1
          %s3764 = scalar_lea.sflag [#allocation3], %s3763
          %s3765 = sand.u32 %s550, 1
          %s3766 = smul.addr %s3765, 128
          %s3767 = scalar_lea.vmem [#allocation2], %s3766
          %3768 = dma.done %s3764, 2048
        $region132: #{tpu_custom_call.1} parent=119 // pred_fallthru
          _
      $region120: #{tpu_custom_call.1} parent=5 // pred_fallthru
        _
    $region6: #{tpu_custom_call.1} parent=1 // loop_footer
      %s37 = sadd.s32 1, %s33
    $region7: #{tpu_custom_call.1} parent=1 // loop_footer_branch
      %32 = sbr.rel target = $region3
    $region8: #{tpu_custom_call.1} parent=1 // loop_exit
      _
    %3769 = vsyncpa [#allocation3], 1
    %s3770 = scalar_lea.sflag [#allocation3], 1
    %3771 = vsyncpa %s3770, 1

</llo_original>
